<compile_context>
chip_gen: v5e
topology: v5e:2x2
jax: 0.10.0
libtpu: 0.0.40
codegen_flags: <defaults>
</compile_context>

<pallas_src>
import functools

import jax
import jax.numpy as jnp
from jax import lax
from jax.experimental import pallas as pl
from jax.experimental.pallas import tpu as pltpu


# ----------------------------------------------------------------------------
# Pallas kernels
# ----------------------------------------------------------------------------
def _conv3_kernel(x_ref, w_ref, b_ref, o_ref):
    """Per-batch conv as 3 shifted matmuls (in-kernel tap accumulation).

    x_ref: (1, Lout+2, Cin)  channel-last slab (already padded / "paired"), bf16
    w_ref: (3, Cin, Cout)    per-shift weights, bf16
    b_ref: (1, Cout)         bias, f32
    o_ref: (1, Lout, Cout)
    """
    lout = o_ref.shape[1]
    acc = jnp.dot(x_ref[0, 0:lout, :], w_ref[0],
                  preferred_element_type=jnp.float32)
    acc = acc + jnp.dot(x_ref[0, 1:lout + 1, :], w_ref[1],
                        preferred_element_type=jnp.float32)
    acc = acc + jnp.dot(x_ref[0, 2:lout + 2, :], w_ref[2],
                        preferred_element_type=jnp.float32)
    o_ref[0] = (acc + b_ref[...]).astype(o_ref.dtype)


def _conv3_call(x3d, w_stack, bias, lout, out_dtype):
    b, lin, cin = x3d.shape
    cout = w_stack.shape[2]
    return pl.pallas_call(
        _conv3_kernel,
        out_shape=jax.ShapeDtypeStruct((b, lout, cout), out_dtype),
        grid=(b,),
        in_specs=[
            pl.BlockSpec((1, lin, cin), lambda i: (i, 0, 0)),
            pl.BlockSpec((3, cin, cout), lambda i: (0, 0, 0)),   # resident
            pl.BlockSpec((1, cout), lambda i: (0, 0)),           # resident
        ],
        out_specs=pl.BlockSpec((1, lout, cout), lambda i: (i, 0, 0)),
        compiler_params=pltpu.CompilerParams(
            dimension_semantics=("parallel",)),
    )(x3d, w_stack, bias)


def _lstm_kernel(x_ref, wih_ref, whh_ref, b_ref, o_ref, xp_ref, h_all_ref,
                 *, batch):
    """Single-layer LSTM over time-major-flat input (row index = t*B + b).

    x_ref:     (T*B, H)  bf16
    wih_ref:   (H, 4H)   bf16  (= W_ih.T)
    whh_ref:   (H, 4H)   bf16  (= W_hh.T)
    b_ref:     (1, 4H)   f32   (= b_ih + b_hh)
    o_ref:     (T*B, H)  bf16
    xp_ref:    (T*B, 4H) f32 scratch  -- hoisted input projection
    h_all_ref: (T*B, H)  f32 scratch  -- per-step h, stored densely at the end
    """
    hidden = x_ref.shape[1]
    n_steps = x_ref.shape[0] // batch

    # Hoisted input projection: one MXU-friendly matmul for all timesteps.
    xp_ref[...] = (
        jnp.dot(x_ref[...], wih_ref[...], preferred_element_type=jnp.float32)
        + b_ref[...]
    )
    whh = whh_ref[...]

    def step(t, carry):
        h, c = carry
        row = t * batch
        gates = xp_ref[pl.ds(row, batch), :] + jnp.dot(
            h.astype(jnp.bfloat16), whh, preferred_element_type=jnp.float32)
        # PyTorch gate order: [i, f, g, o]
        i = jax.nn.sigmoid(gates[:, 0 * hidden:1 * hidden])
        f = jax.nn.sigmoid(gates[:, 1 * hidden:2 * hidden])
        g = jnp.tanh(gates[:, 2 * hidden:3 * hidden])
        o = jax.nn.sigmoid(gates[:, 3 * hidden:4 * hidden])
        c = f * c + i * g                      # cell state stays f32
        h = o * jnp.tanh(c)
        h_all_ref[pl.ds(row, batch), :] = h
        return h, c

    h0 = jnp.zeros((batch, hidden), jnp.float32)
    c0 = jnp.zeros((batch, hidden), jnp.float32)
    lax.fori_loop(0, n_steps, step, (h0, c0), unroll=True)

    # Single dense (sublane/lane-full) store of all outputs.
    o_ref[...] = h_all_ref[...].astype(o_ref.dtype)


def lstm_forward(x2d, wih_t, whh_t, bias, *, batch):
    tb, hidden = x2d.shape
    kernel = functools.partial(_lstm_kernel, batch=batch)
    return pl.pallas_call(
        kernel,
        out_shape=jax.ShapeDtypeStruct((tb, hidden), jnp.bfloat16),
        grid=(1,),
        in_specs=[
            pl.BlockSpec((tb, hidden), lambda i: (0, 0)),
            pl.BlockSpec((hidden, 4 * hidden), lambda i: (0, 0)),
            pl.BlockSpec((hidden, 4 * hidden), lambda i: (0, 0)),
            pl.BlockSpec((1, 4 * hidden), lambda i: (0, 0)),
        ],
        out_specs=pl.BlockSpec((tb, hidden), lambda i: (0, 0)),
        scratch_shapes=[
            pltpu.VMEM((tb, 4 * hidden), jnp.float32),
            pltpu.VMEM((tb, hidden), jnp.float32),
        ],
    )(x2d, wih_t, whh_t, bias)


# ----------------------------------------------------------------------------
# Layer wrappers (channel-last).  Only cheap XLA glue here: pads + contiguous
# reshapes (the even/odd pairing and the deconv phase interleave are free
# reshapes of contiguous buffers).
# ----------------------------------------------------------------------------
def conv1d_s2(x, w_pair, bias, out_dtype=jnp.bfloat16):
    """Conv1d(k=5, stride=2, pad=2): (B, L, Cin) -> (B, L//2, Cout)."""
    b, l, cin = x.shape
    xp = jnp.pad(x, ((0, 0), (2, 2), (0, 0)))
    xr = xp.reshape(b, (l + 4) // 2, 2 * cin)     # even/odd pairing (contiguous)
    return _conv3_call(xr, w_pair, bias, l // 2, out_dtype)


def conv_transpose1d_s2(x, v_pair, bias_pair, cout, out_dtype=jnp.bfloat16):
    """ConvTranspose1d(k=5, stride=2, pad=2, output_padding=1):
    (B, L, Cin) -> (B, 2L, cout).  Even/odd output phases are packed into the
    lane dim inside the kernel and interleaved by a free reshape here."""
    b, l, _ = x.shape
    xp = jnp.pad(x, ((0, 0), (1, 1), (0, 0)))
    out_pair = _conv3_call(xp, v_pair, bias_pair, l, out_dtype)
    out_pair = out_pair[:, :, :2 * cout]          # drop lane padding (if any)
    return out_pair.reshape(b, 2 * l, cout)


# ----------------------------------------------------------------------------
# Parameters: PyTorch-layout init + one-time packing into kernel layout (bf16).
# ----------------------------------------------------------------------------
def init_params(key, input_dim=18, hidden=256):
    def uni(k, shape, fan_in):
        s = 1.0 / jnp.sqrt(float(fan_in))
        return jax.random.uniform(k, shape, jnp.float32, -s, s)

    keys = jax.random.split(key, 16)
    kk = 5
    p = {}
    p["enc1_w"] = uni(keys[0], (64, input_dim, kk), input_dim * kk)
    p["enc1_b"] = uni(keys[1], (64,), input_dim * kk)
    p["enc2_w"] = uni(keys[2], (128, 64, kk), 64 * kk)
    p["enc2_b"] = uni(keys[3], (128,), 64 * kk)
    p["enc3_w"] = uni(keys[4], (256, 128, kk), 128 * kk)
    p["enc3_b"] = uni(keys[5], (256,), 128 * kk)
    p["wih_t"] = uni(keys[6], (hidden, 4 * hidden), hidden)     # = W_ih.T
    p["whh_t"] = uni(keys[7], (hidden, 4 * hidden), hidden)     # = W_hh.T
    p["lstm_b"] = (uni(keys[8], (4 * hidden,), hidden)
                   + uni(keys[9], (4 * hidden,), hidden))       # b_ih + b_hh
    p["dec1_w"] = uni(keys[10], (256, 128, kk), 256 * kk)       # (Cin, Cout, K)
    p["dec1_b"] = uni(keys[11], (128,), 256 * kk)
    p["dec2_w"] = uni(keys[12], (128, 64, kk), 128 * kk)
    p["dec2_b"] = uni(keys[13], (64,), 128 * kk)
    p["dec3_w"] = uni(keys[14], (64, input_dim, kk), 64 * kk)
    p["dec3_b"] = uni(keys[15], (input_dim,), 64 * kk)
    return p


def _pack_conv(w, b):
    # w: (Cout, Cin, 5) -> (3, 2*Cin, Cout).  Output t reads paired rows
    # t, t+1, t+2 of the padded/paired input; taps (0,1),(2,3),(4,-) per row.
    wt = jnp.transpose(w, (2, 1, 0))              # (5, Cin, Cout)
    zero = jnp.zeros_like(wt[0])
    w_pair = jnp.stack([
        jnp.concatenate([wt[0], wt[1]], axis=0),
        jnp.concatenate([wt[2], wt[3]], axis=0),
        jnp.concatenate([wt[4], zero], axis=0),
    ], axis=0)
    return w_pair.astype(jnp.bfloat16), b.reshape(1, -1).astype(jnp.float32)


def _pack_deconv(w, b, lane_pad=0):
    # w: (Cin, Cout, 5) PyTorch ConvTranspose1d layout -> (3, Cin, 2*Cout[+pad]).
    # Even output phase in lanes [0:Cout], odd phase in lanes [Cout:2Cout].
    wc = [w[:, :, 4 - j] for j in range(5)]       # (Cin, Cout) each
    zero = jnp.zeros_like(wc[0])
    v_pair = jnp.stack([
        jnp.concatenate([wc[0], zero], axis=1),
        jnp.concatenate([wc[2], wc[1]], axis=1),
        jnp.concatenate([wc[4], wc[3]], axis=1),
    ], axis=0)
    b_pair = jnp.concatenate([b, b]).reshape(1, -1)
    if lane_pad > 0:                              # lane-dense final store
        v_pair = jnp.pad(v_pair, ((0, 0), (0, 0), (0, lane_pad)))
        b_pair = jnp.pad(b_pair, ((0, 0), (0, lane_pad)))
    return v_pair.astype(jnp.bfloat16), b_pair.astype(jnp.float32)


def pack_params(p, input_dim=18):
    pk = {}
    pk["enc1_w"], pk["enc1_b"] = _pack_conv(p["enc1_w"], p["enc1_b"])
    pk["enc2_w"], pk["enc2_b"] = _pack_conv(p["enc2_w"], p["enc2_b"])
    pk["enc3_w"], pk["enc3_b"] = _pack_conv(p["enc3_w"], p["enc3_b"])
    pk["wih"] = p["wih_t"].astype(jnp.bfloat16)
    pk["whh"] = p["whh_t"].astype(jnp.bfloat16)
    pk["lstm_b"] = p["lstm_b"].reshape(1, -1).astype(jnp.float32)
    pk["dec1_w"], pk["dec1_b"] = _pack_deconv(p["dec1_w"], p["dec1_b"])
    pk["dec2_w"], pk["dec2_b"] = _pack_deconv(p["dec2_w"], p["dec2_b"])
    lane_pad = max(0, 128 - 2 * input_dim)
    pk["dec3_w"], pk["dec3_b"] = _pack_deconv(p["dec3_w"], p["dec3_b"], lane_pad)
    return pk


# ----------------------------------------------------------------------------
# Forward pass (matches LSTMConvAutoencoder3.forward)
# ----------------------------------------------------------------------------
@jax.jit
def forward(x, pk):
    # x: (B, 1, C, T) f32, T divisible by 8
    b = x.shape[0]
    c = x.shape[2]
    t = x.shape[3]
    h = jnp.transpose(x[:, 0], (0, 2, 1)).astype(jnp.bfloat16)   # (B, T, C)
    h = conv1d_s2(h, pk["enc1_w"], pk["enc1_b"])                 # (B, T/2, 64)
    h = conv1d_s2(h, pk["enc2_w"], pk["enc2_b"])                 # (B, T/4, 128)
    h = conv1d_s2(h, pk["enc3_w"], pk["enc3_b"])                 # (B, T/8, 256)
    hidden = h.shape[2]
    tq = t // 8
    x2d = jnp.transpose(h, (1, 0, 2)).reshape(tq * b, hidden)    # time-major flat
    y2d = lstm_forward(x2d, pk["wih"], pk["whh"], pk["lstm_b"], batch=b)
    y = jnp.transpose(y2d.reshape(tq, b, hidden), (1, 0, 2))     # (B, T/8, 256)
    d = conv_transpose1d_s2(y, pk["dec1_w"], pk["dec1_b"], 128)  # (B, T/4, 128)
    d = conv_transpose1d_s2(d, pk["dec2_w"], pk["dec2_b"], 64)   # (B, T/2, 64)
    d = conv_transpose1d_s2(d, pk["dec3_w"], pk["dec3_b"], c,
                            out_dtype=jnp.float32)               # (B, T, C)
    return jnp.transpose(d, (0, 2, 1))[:, None, :, :]            # (B, 1, C, T)


# ----------------------------------------------------------------------------
# Pure-JAX f32 reference (for a numerical sanity check of the kernels)
# ----------------------------------------------------------------------------
@jax.jit
def reference_forward(x, p):
    h = x[:, 0]                                                   # (B, C, T)

    def conv(z, w, bb):
        out = lax.conv_general_dilated(
            z, w, window_strides=(2,), padding=[(2, 2)],
            dimension_numbers=("NCH", "OIH", "NCH"))
        return out + bb[None, :, None]

    h = conv(h, p["enc1_w"], p["enc1_b"])
    h = conv(h, p["enc2_w"], p["enc2_b"])
    h = conv(h, p["enc3_w"], p["enc3_b"])

    xs = jnp.transpose(h, (2, 0, 1))                              # (T/8, B, H)
    hidden = xs.shape[-1]
    bsz = xs.shape[1]

    def cell(carry, x_t):
        hh, cc = carry
        gates = x_t @ p["wih_t"] + hh @ p["whh_t"] + p["lstm_b"]
        i = jax.nn.sigmoid(gates[:, :hidden])
        f = jax.nn.sigmoid(gates[:, hidden:2 * hidden])
        g = jnp.tanh(gates[:, 2 * hidden:3 * hidden])
        o = jax.nn.sigmoid(gates[:, 3 * hidden:])
        cc = f * cc + i * g
        hh = o * jnp.tanh(cc)
        return (hh, cc), hh

    init = (jnp.zeros((bsz, hidden), jnp.float32),
            jnp.zeros((bsz, hidden), jnp.float32))
    _, ys = lax.scan(cell, init, xs)                              # (T/8, B, H)
    y = jnp.transpose(ys, (1, 2, 0))                              # (B, H, T/8)

    def deconv(z, w, bb):
        w_t = jnp.transpose(w, (1, 0, 2))[:, :, ::-1]             # (Cout, Cin, K)
        out = lax.conv_general_dilated(
            z, w_t, window_strides=(1,), padding=[(2, 3)], lhs_dilation=(2,),
            dimension_numbers=("NCH", "OIH", "NCH"))
        return out + bb[None, :, None]

    d = deconv(y, p["dec1_w"], p["dec1_b"])
    d = deconv(d, p["dec2_w"], p["dec2_b"])
    d = deconv(d, p["dec3_w"], p["dec3_b"])
    return d[:, None]


if __name__ == "__main__":
    key = jax.random.PRNGKey(0)
    k_param, k_x = jax.random.split(key)

    B, C, T = 2, 18, 32   # T must be divisible by 8 (three stride-2 convs)
    params = init_params(k_param, input_dim=C, hidden=256)
    packed = pack_params(params, input_dim=C)
    x = jax.random.normal(k_x, (B, 1, C, T), dtype=jnp.float32)

    out = jax.block_until_ready(forward(x, packed))

    assert out.shape == (B, 1, C, T), out.shape
    assert out.dtype == jnp.float32
    assert bool(jnp.all(jnp.isfinite(out)))

    # Numerical check against the pure-JAX f32 reference (kernels run in bf16).
    ref = jax.block_until_ready(reference_forward(x, params))
    rel = float(jnp.max(jnp.abs(out - ref)) / (jnp.max(jnp.abs(ref)) + 1e-6))
    assert rel < 5e-2, f"kernel/reference mismatch: rel_err={rel:.4f}"

    print("KERNEL_OK")
</pallas_src>

<mosaic_0001>
module attributes {stable_mosaic.version = 11 : i64} {
  func.func @_conv3_kernel(%arg0: i32, %arg1: memref<1x18x36xbf16, #tpu.memory_space<vmem>>, %arg2: memref<3x36x64xbf16, #tpu.memory_space<vmem>>, %arg3: memref<1x64xf32, #tpu.memory_space<vmem>>, %arg4: memref<1x16x64xbf16, #tpu.memory_space<vmem>>) attributes {dimension_semantics = [#tpu.dimension_semantics<parallel>], iteration_bounds = array<i64: 2>, scalar_prefetch = 0 : i64, scratch_operands = 0 : i64, tpu.core_type = #tpu.core_type<tc>, window_params = [{transform_indices = @transform_0, window_bounds = array<i64: 1, 18, 36>}, {pipeline_mode = #tpu.pipeline_mode<synchronous>, transform_indices = @transform_1, window_bounds = array<i64: 3, 36, 64>}, {pipeline_mode = #tpu.pipeline_mode<synchronous>, transform_indices = @transform_2, window_bounds = array<i64: 1, 64>}, {transform_indices = @transform_3, window_bounds = array<i64: 1, 16, 64>}]} {
    %c0 = arith.constant 0 : index
    %c0_0 = arith.constant 0 : index
    %c0_1 = arith.constant 0 : index
    %0 = vector.load %arg1[%c0, %c0_0, %c0_1] : memref<1x18x36xbf16, #tpu.memory_space<vmem>>, vector<1x16x36xbf16>
    %1 = vector.shape_cast %0 : vector<1x16x36xbf16> to vector<16x36xbf16>
    %c0_2 = arith.constant 0 : index
    %c0_3 = arith.constant 0 : index
    %c0_4 = arith.constant 0 : index
    %2 = vector.load %arg2[%c0_2, %c0_3, %c0_4] : memref<3x36x64xbf16, #tpu.memory_space<vmem>>, vector<1x36x64xbf16>
    %3 = vector.shape_cast %2 : vector<1x36x64xbf16> to vector<36x64xbf16>
    %cst = arith.constant dense<0.000000e+00> : vector<16x64xf32>
    %4 = tpu.matmul %1, %3, %cst {dimension_numbers = #tpu.dot_dimension_numbers<[1], [0], [0], [1], [0, 0, 1, 1], [], []>} : vector<16x36xbf16>, vector<36x64xbf16>, vector<16x64xf32> -> vector<16x64xf32>
    %c0_5 = arith.constant 0 : index
    %c1 = arith.constant 1 : index
    %c0_6 = arith.constant 0 : index
    %5 = vector.load %arg1[%c0_5, %c1, %c0_6] : memref<1x18x36xbf16, #tpu.memory_space<vmem>>, vector<1x16x36xbf16>
    %6 = vector.shape_cast %5 : vector<1x16x36xbf16> to vector<16x36xbf16>
    %c1_7 = arith.constant 1 : index
    %c0_8 = arith.constant 0 : index
    %c0_9 = arith.constant 0 : index
    %7 = vector.load %arg2[%c1_7, %c0_8, %c0_9] : memref<3x36x64xbf16, #tpu.memory_space<vmem>>, vector<1x36x64xbf16>
    %8 = vector.shape_cast %7 : vector<1x36x64xbf16> to vector<36x64xbf16>
    %cst_10 = arith.constant dense<0.000000e+00> : vector<16x64xf32>
    %9 = tpu.matmul %6, %8, %cst_10 {dimension_numbers = #tpu.dot_dimension_numbers<[1], [0], [0], [1], [0, 0, 1, 1], [], []>} : vector<16x36xbf16>, vector<36x64xbf16>, vector<16x64xf32> -> vector<16x64xf32>
    %10 = arith.addf %4, %9 : vector<16x64xf32>
    %c0_11 = arith.constant 0 : index
    %c2 = arith.constant 2 : index
    %c0_12 = arith.constant 0 : index
    %11 = vector.load %arg1[%c0_11, %c2, %c0_12] : memref<1x18x36xbf16, #tpu.memory_space<vmem>>, vector<1x16x36xbf16>
    %12 = vector.shape_cast %11 : vector<1x16x36xbf16> to vector<16x36xbf16>
    %c2_13 = arith.constant 2 : index
    %c0_14 = arith.constant 0 : index
    %c0_15 = arith.constant 0 : index
    %13 = vector.load %arg2[%c2_13, %c0_14, %c0_15] : memref<3x36x64xbf16, #tpu.memory_space<vmem>>, vector<1x36x64xbf16>
    %14 = vector.shape_cast %13 : vector<1x36x64xbf16> to vector<36x64xbf16>
    %cst_16 = arith.constant dense<0.000000e+00> : vector<16x64xf32>
    %15 = tpu.matmul %12, %14, %cst_16 {dimension_numbers = #tpu.dot_dimension_numbers<[1], [0], [0], [1], [0, 0, 1, 1], [], []>} : vector<16x36xbf16>, vector<36x64xbf16>, vector<16x64xf32> -> vector<16x64xf32>
    %16 = arith.addf %10, %15 : vector<16x64xf32>
    %c0_17 = arith.constant 0 : index
    %c0_18 = arith.constant 0 : index
    %17 = vector.load %arg3[%c0_17, %c0_18] : memref<1x64xf32, #tpu.memory_space<vmem>>, vector<1x64xf32>
    %18 = vector.broadcast %17 : vector<1x64xf32> to vector<16x64xf32>
    %19 = arith.addf %16, %18 : vector<16x64xf32>
    %20 = arith.truncf %19 : vector<16x64xf32> to vector<16x64xbf16>
    %c0_19 = arith.constant 0 : index
    %c0_20 = arith.constant 0 : index
    %c0_21 = arith.constant 0 : index
    %21 = vector.load %arg4[%c0_19, %c0_20, %c0_21] : memref<1x16x64xbf16, #tpu.memory_space<vmem>>, vector<1x16x64xbf16>
    %22 = vector.shape_cast %21 : vector<1x16x64xbf16> to vector<16x64xbf16>
    %23 = vector.shape_cast %20 : vector<16x64xbf16> to vector<1x16x64xbf16>
    tpu.vector_store %arg4[%c0_19, %c0_20, %c0_21], %23 {strides = array<i32>} : memref<1x16x64xbf16, #tpu.memory_space<vmem>>, vector<1x16x64xbf16>,
    return
  }
  func.func @transform_0(%arg0: i32) -> (i32, i32, i32) {
    %c0_i32 = arith.constant 0 : i32
    %c0_i32_0 = arith.constant 0 : i32
    %c0_i32_1 = arith.constant 0 : i32
    return %arg0, %c0_i32, %c0_i32_0 : i32, i32, i32
  }
  func.func @transform_1(%arg0: i32) -> (i32, i32, i32) {
    %c0_i32 = arith.constant 0 : i32
    %c0_i32_0 = arith.constant 0 : i32
    %c0_i32_1 = arith.constant 0 : i32
    %c0_i32_2 = arith.constant 0 : i32
    return %c0_i32, %c0_i32_0, %c0_i32_1 : i32, i32, i32
  }
  func.func @transform_2(%arg0: i32) -> (i32, i32) {
    %c0_i32 = arith.constant 0 : i32
    %c0_i32_0 = arith.constant 0 : i32
    %c0_i32_1 = arith.constant 0 : i32
    return %c0_i32, %c0_i32_0 : i32, i32
  }
  func.func @transform_3(%arg0: i32) -> (i32, i32, i32) {
    %c0_i32 = arith.constant 0 : i32
    %c0_i32_0 = arith.constant 0 : i32
    %c0_i32_1 = arith.constant 0 : i32
    return %arg0, %c0_i32, %c0_i32_0 : i32, i32, i32
  }
}

module attributes {stable_mosaic.version = 11 : i64} {
  func.func @_conv3_kernel(%arg0: i32, %arg1: memref<1x10x128xbf16, #tpu.memory_space<vmem>>, %arg2: memref<3x128x128xbf16, #tpu.memory_space<vmem>>, %arg3: memref<1x128xf32, #tpu.memory_space<vmem>>, %arg4: memref<1x8x128xbf16, #tpu.memory_space<vmem>>) attributes {dimension_semantics = [#tpu.dimension_semantics<parallel>], iteration_bounds = array<i64: 2>, scalar_prefetch = 0 : i64, scratch_operands = 0 : i64, tpu.core_type = #tpu.core_type<tc>, window_params = [{transform_indices = @transform_0, window_bounds = array<i64: 1, 10, 128>}, {pipeline_mode = #tpu.pipeline_mode<synchronous>, transform_indices = @transform_1, window_bounds = array<i64: 3, 128, 128>}, {pipeline_mode = #tpu.pipeline_mode<synchronous>, transform_indices = @transform_2, window_bounds = array<i64: 1, 128>}, {transform_indices = @transform_3, window_bounds = array<i64: 1, 8, 128>}]} {
    %c0 = arith.constant 0 : index
    %c0_0 = arith.constant 0 : index
    %c0_1 = arith.constant 0 : index
    %0 = vector.load %arg1[%c0, %c0_0, %c0_1] : memref<1x10x128xbf16, #tpu.memory_space<vmem>>, vector<1x8x128xbf16>
    %1 = vector.shape_cast %0 : vector<1x8x128xbf16> to vector<8x128xbf16>
    %c0_2 = arith.constant 0 : index
    %c0_3 = arith.constant 0 : index
    %c0_4 = arith.constant 0 : index
    %2 = vector.load %arg2[%c0_2, %c0_3, %c0_4] : memref<3x128x128xbf16, #tpu.memory_space<vmem>>, vector<1x128x128xbf16>
    %3 = vector.shape_cast %2 : vector<1x128x128xbf16> to vector<128x128xbf16>
    %cst = arith.constant dense<0.000000e+00> : vector<8x128xf32>
    %4 = tpu.matmul %1, %3, %cst {dimension_numbers = #tpu.dot_dimension_numbers<[1], [0], [0], [1], [0, 0, 1, 1], [], []>} : vector<8x128xbf16>, vector<128x128xbf16>, vector<8x128xf32> -> vector<8x128xf32>
    %c0_5 = arith.constant 0 : index
    %c1 = arith.constant 1 : index
    %c0_6 = arith.constant 0 : index
    %5 = vector.load %arg1[%c0_5, %c1, %c0_6] : memref<1x10x128xbf16, #tpu.memory_space<vmem>>, vector<1x8x128xbf16>
    %6 = vector.shape_cast %5 : vector<1x8x128xbf16> to vector<8x128xbf16>
    %c1_7 = arith.constant 1 : index
    %c0_8 = arith.constant 0 : index
    %c0_9 = arith.constant 0 : index
    %7 = vector.load %arg2[%c1_7, %c0_8, %c0_9] : memref<3x128x128xbf16, #tpu.memory_space<vmem>>, vector<1x128x128xbf16>
    %8 = vector.shape_cast %7 : vector<1x128x128xbf16> to vector<128x128xbf16>
    %cst_10 = arith.constant dense<0.000000e+00> : vector<8x128xf32>
    %9 = tpu.matmul %6, %8, %cst_10 {dimension_numbers = #tpu.dot_dimension_numbers<[1], [0], [0], [1], [0, 0, 1, 1], [], []>} : vector<8x128xbf16>, vector<128x128xbf16>, vector<8x128xf32> -> vector<8x128xf32>
    %10 = arith.addf %4, %9 : vector<8x128xf32>
    %c0_11 = arith.constant 0 : index
    %c2 = arith.constant 2 : index
    %c0_12 = arith.constant 0 : index
    %11 = vector.load %arg1[%c0_11, %c2, %c0_12] : memref<1x10x128xbf16, #tpu.memory_space<vmem>>, vector<1x8x128xbf16>
    %12 = vector.shape_cast %11 : vector<1x8x128xbf16> to vector<8x128xbf16>
    %c2_13 = arith.constant 2 : index
    %c0_14 = arith.constant 0 : index
    %c0_15 = arith.constant 0 : index
    %13 = vector.load %arg2[%c2_13, %c0_14, %c0_15] : memref<3x128x128xbf16, #tpu.memory_space<vmem>>, vector<1x128x128xbf16>
    %14 = vector.shape_cast %13 : vector<1x128x128xbf16> to vector<128x128xbf16>
    %cst_16 = arith.constant dense<0.000000e+00> : vector<8x128xf32>
    %15 = tpu.matmul %12, %14, %cst_16 {dimension_numbers = #tpu.dot_dimension_numbers<[1], [0], [0], [1], [0, 0, 1, 1], [], []>} : vector<8x128xbf16>, vector<128x128xbf16>, vector<8x128xf32> -> vector<8x128xf32>
    %16 = arith.addf %10, %15 : vector<8x128xf32>
    %c0_17 = arith.constant 0 : index
    %c0_18 = arith.constant 0 : index
    %17 = vector.load %arg3[%c0_17, %c0_18] : memref<1x128xf32, #tpu.memory_space<vmem>>, vector<1x128xf32>
    %18 = vector.broadcast %17 : vector<1x128xf32> to vector<8x128xf32>
    %19 = arith.addf %16, %18 : vector<8x128xf32>
    %20 = arith.truncf %19 : vector<8x128xf32> to vector<8x128xbf16>
    %c0_19 = arith.constant 0 : index
    %c0_20 = arith.constant 0 : index
    %c0_21 = arith.constant 0 : index
    %21 = vector.load %arg4[%c0_19, %c0_20, %c0_21] : memref<1x8x128xbf16, #tpu.memory_space<vmem>>, vector<1x8x128xbf16>
    %22 = vector.shape_cast %21 : vector<1x8x128xbf16> to vector<8x128xbf16>
    %23 = vector.shape_cast %20 : vector<8x128xbf16> to vector<1x8x128xbf16>
    tpu.vector_store %arg4[%c0_19, %c0_20, %c0_21], %23 {strides = array<i32>} : memref<1x8x128xbf16, #tpu.memory_space<vmem>>, vector<1x8x128xbf16>,
    return
  }
  func.func @transform_0(%arg0: i32) -> (i32, i32, i32) {
    %c0_i32 = arith.constant 0 : i32
    %c0_i32_0 = arith.constant 0 : i32
    %c0_i32_1 = arith.constant 0 : i32
    return %arg0, %c0_i32, %c0_i32_0 : i32, i32, i32
  }
  func.func @transform_1(%arg0: i32) -> (i32, i32, i32) {
    %c0_i32 = arith.constant 0 : i32
    %c0_i32_0 = arith.constant 0 : i32
    %c0_i32_1 = arith.constant 0 : i32
    %c0_i32_2 = arith.constant 0 : i32
    return %c0_i32, %c0_i32_0, %c0_i32_1 : i32, i32, i32
  }
  func.func @transform_2(%arg0: i32) -> (i32, i32) {
    %c0_i32 = arith.constant 0 : i32
    %c0_i32_0 = arith.constant 0 : i32
    %c0_i32_1 = arith.constant 0 : i32
    return %c0_i32, %c0_i32_0 : i32, i32
  }
  func.func @transform_3(%arg0: i32) -> (i32, i32, i32) {
    %c0_i32 = arith.constant 0 : i32
    %c0_i32_0 = arith.constant 0 : i32
    %c0_i32_1 = arith.constant 0 : i32
    return %arg0, %c0_i32, %c0_i32_0 : i32, i32, i32
  }
}

module attributes {stable_mosaic.version = 11 : i64} {
  func.func @_conv3_kernel(%arg0: i32, %arg1: memref<1x6x256xbf16, #tpu.memory_space<vmem>>, %arg2: memref<3x256x256xbf16, #tpu.memory_space<vmem>>, %arg3: memref<1x256xf32, #tpu.memory_space<vmem>>, %arg4: memref<1x4x256xbf16, #tpu.memory_space<vmem>>) attributes {dimension_semantics = [#tpu.dimension_semantics<parallel>], iteration_bounds = array<i64: 2>, scalar_prefetch = 0 : i64, scratch_operands = 0 : i64, tpu.core_type = #tpu.core_type<tc>, window_params = [{transform_indices = @transform_0, window_bounds = array<i64: 1, 6, 256>}, {pipeline_mode = #tpu.pipeline_mode<synchronous>, transform_indices = @transform_1, window_bounds = array<i64: 3, 256, 256>}, {pipeline_mode = #tpu.pipeline_mode<synchronous>, transform_indices = @transform_2, window_bounds = array<i64: 1, 256>}, {transform_indices = @transform_3, window_bounds = array<i64: 1, 4, 256>}]} {
    %c0 = arith.constant 0 : index
    %c0_0 = arith.constant 0 : index
    %c0_1 = arith.constant 0 : index
    %0 = vector.load %arg1[%c0, %c0_0, %c0_1] : memref<1x6x256xbf16, #tpu.memory_space<vmem>>, vector<1x4x256xbf16>
    %1 = vector.shape_cast %0 : vector<1x4x256xbf16> to vector<4x256xbf16>
    %c0_2 = arith.constant 0 : index
    %c0_3 = arith.constant 0 : index
    %c0_4 = arith.constant 0 : index
    %2 = vector.load %arg2[%c0_2, %c0_3, %c0_4] : memref<3x256x256xbf16, #tpu.memory_space<vmem>>, vector<1x256x256xbf16>
    %3 = vector.shape_cast %2 : vector<1x256x256xbf16> to vector<256x256xbf16>
    %cst = arith.constant dense<0.000000e+00> : vector<4x256xf32>
    %4 = tpu.matmul %1, %3, %cst {dimension_numbers = #tpu.dot_dimension_numbers<[1], [0], [0], [1], [0, 0, 1, 1], [], []>} : vector<4x256xbf16>, vector<256x256xbf16>, vector<4x256xf32> -> vector<4x256xf32>
    %c0_5 = arith.constant 0 : index
    %c1 = arith.constant 1 : index
    %c0_6 = arith.constant 0 : index
    %5 = vector.load %arg1[%c0_5, %c1, %c0_6] : memref<1x6x256xbf16, #tpu.memory_space<vmem>>, vector<1x4x256xbf16>
    %6 = vector.shape_cast %5 : vector<1x4x256xbf16> to vector<4x256xbf16>
    %c1_7 = arith.constant 1 : index
    %c0_8 = arith.constant 0 : index
    %c0_9 = arith.constant 0 : index
    %7 = vector.load %arg2[%c1_7, %c0_8, %c0_9] : memref<3x256x256xbf16, #tpu.memory_space<vmem>>, vector<1x256x256xbf16>
    %8 = vector.shape_cast %7 : vector<1x256x256xbf16> to vector<256x256xbf16>
    %cst_10 = arith.constant dense<0.000000e+00> : vector<4x256xf32>
    %9 = tpu.matmul %6, %8, %cst_10 {dimension_numbers = #tpu.dot_dimension_numbers<[1], [0], [0], [1], [0, 0, 1, 1], [], []>} : vector<4x256xbf16>, vector<256x256xbf16>, vector<4x256xf32> -> vector<4x256xf32>
    %10 = arith.addf %4, %9 : vector<4x256xf32>
    %c0_11 = arith.constant 0 : index
    %c2 = arith.constant 2 : index
    %c0_12 = arith.constant 0 : index
    %11 = vector.load %arg1[%c0_11, %c2, %c0_12] : memref<1x6x256xbf16, #tpu.memory_space<vmem>>, vector<1x4x256xbf16>
    %12 = vector.shape_cast %11 : vector<1x4x256xbf16> to vector<4x256xbf16>
    %c2_13 = arith.constant 2 : index
    %c0_14 = arith.constant 0 : index
    %c0_15 = arith.constant 0 : index
    %13 = vector.load %arg2[%c2_13, %c0_14, %c0_15] : memref<3x256x256xbf16, #tpu.memory_space<vmem>>, vector<1x256x256xbf16>
    %14 = vector.shape_cast %13 : vector<1x256x256xbf16> to vector<256x256xbf16>
    %cst_16 = arith.constant dense<0.000000e+00> : vector<4x256xf32>
    %15 = tpu.matmul %12, %14, %cst_16 {dimension_numbers = #tpu.dot_dimension_numbers<[1], [0], [0], [1], [0, 0, 1, 1], [], []>} : vector<4x256xbf16>, vector<256x256xbf16>, vector<4x256xf32> -> vector<4x256xf32>
    %16 = arith.addf %10, %15 : vector<4x256xf32>
    %c0_17 = arith.constant 0 : index
    %c0_18 = arith.constant 0 : index
    %17 = vector.load %arg3[%c0_17, %c0_18] : memref<1x256xf32, #tpu.memory_space<vmem>>, vector<1x256xf32>
    %18 = vector.broadcast %17 : vector<1x256xf32> to vector<4x256xf32>
    %19 = arith.addf %16, %18 : vector<4x256xf32>
    %20 = arith.truncf %19 : vector<4x256xf32> to vector<4x256xbf16>
    %c0_19 = arith.constant 0 : index
    %c0_20 = arith.constant 0 : index
    %c0_21 = arith.constant 0 : index
    %21 = vector.load %arg4[%c0_19, %c0_20, %c0_21] : memref<1x4x256xbf16, #tpu.memory_space<vmem>>, vector<1x4x256xbf16>
    %22 = vector.shape_cast %21 : vector<1x4x256xbf16> to vector<4x256xbf16>
    %23 = vector.shape_cast %20 : vector<4x256xbf16> to vector<1x4x256xbf16>
    tpu.vector_store %arg4[%c0_19, %c0_20, %c0_21], %23 {strides = array<i32>} : memref<1x4x256xbf16, #tpu.memory_space<vmem>>, vector<1x4x256xbf16>,
    return
  }
  func.func @transform_0(%arg0: i32) -> (i32, i32, i32) {
    %c0_i32 = arith.constant 0 : i32
    %c0_i32_0 = arith.constant 0 : i32
    %c0_i32_1 = arith.constant 0 : i32
    return %arg0, %c0_i32, %c0_i32_0 : i32, i32, i32
  }
  func.func @transform_1(%arg0: i32) -> (i32, i32, i32) {
    %c0_i32 = arith.constant 0 : i32
    %c0_i32_0 = arith.constant 0 : i32
    %c0_i32_1 = arith.constant 0 : i32
    %c0_i32_2 = arith.constant 0 : i32
    return %c0_i32, %c0_i32_0, %c0_i32_1 : i32, i32, i32
  }
  func.func @transform_2(%arg0: i32) -> (i32, i32) {
    %c0_i32 = arith.constant 0 : i32
    %c0_i32_0 = arith.constant 0 : i32
    %c0_i32_1 = arith.constant 0 : i32
    return %c0_i32, %c0_i32_0 : i32, i32
  }
  func.func @transform_3(%arg0: i32) -> (i32, i32, i32) {
    %c0_i32 = arith.constant 0 : i32
    %c0_i32_0 = arith.constant 0 : i32
    %c0_i32_1 = arith.constant 0 : i32
    return %arg0, %c0_i32, %c0_i32_0 : i32, i32, i32
  }
}

module attributes {stable_mosaic.version = 11 : i64} {
  func.func @_lstm_kernel(%arg0: i32, %arg1: memref<8x256xbf16, #tpu.memory_space<vmem>>, %arg2: memref<256x1024xbf16, #tpu.memory_space<vmem>>, %arg3: memref<256x1024xbf16, #tpu.memory_space<vmem>>, %arg4: memref<1x1024xf32, #tpu.memory_space<vmem>>, %arg5: memref<8x256xbf16, #tpu.memory_space<vmem>>, %arg6: memref<8x1024xf32, #tpu.memory_space<vmem>>, %arg7: memref<8x256xf32, #tpu.memory_space<vmem>>) attributes {dimension_semantics = [#tpu.dimension_semantics<arbitrary>], iteration_bounds = array<i64: 1>, scalar_prefetch = 0 : i64, scratch_operands = 2 : i64, tpu.core_type = #tpu.core_type<tc>, window_params = [{pipeline_mode = #tpu.pipeline_mode<synchronous>, transform_indices = @transform_0, window_bounds = array<i64: 8, 256>}, {pipeline_mode = #tpu.pipeline_mode<synchronous>, transform_indices = @transform_1, window_bounds = array<i64: 256, 1024>}, {pipeline_mode = #tpu.pipeline_mode<synchronous>, transform_indices = @transform_2, window_bounds = array<i64: 256, 1024>}, {pipeline_mode = #tpu.pipeline_mode<synchronous>, transform_indices = @transform_3, window_bounds = array<i64: 1, 1024>}, {pipeline_mode = #tpu.pipeline_mode<synchronous>, transform_indices = @transform_4, window_bounds = array<i64: 8, 256>}]} {
    %c0 = arith.constant 0 : index
    %c0_0 = arith.constant 0 : index
    %0 = vector.load %arg1[%c0, %c0_0] : memref<8x256xbf16, #tpu.memory_space<vmem>>, vector<8x256xbf16>
    %c0_1 = arith.constant 0 : index
    %c0_2 = arith.constant 0 : index
    %1 = vector.load %arg2[%c0_1, %c0_2] : memref<256x1024xbf16, #tpu.memory_space<vmem>>, vector<256x1024xbf16>
    %cst = arith.constant dense<0.000000e+00> : vector<8x1024xf32>
    %2 = tpu.matmul %0, %1, %cst {dimension_numbers = #tpu.dot_dimension_numbers<[1], [0], [0], [1], [0, 0, 1, 1], [], []>} : vector<8x256xbf16>, vector<256x1024xbf16>, vector<8x1024xf32> -> vector<8x1024xf32>
    %c0_3 = arith.constant 0 : index
    %c0_4 = arith.constant 0 : index
    %3 = vector.load %arg4[%c0_3, %c0_4] : memref<1x1024xf32, #tpu.memory_space<vmem>>, vector<1x1024xf32>
    %4 = vector.broadcast %3 : vector<1x1024xf32> to vector<8x1024xf32>
    %5 = arith.addf %2, %4 : vector<8x1024xf32>
    %c0_5 = arith.constant 0 : index
    %c0_6 = arith.constant 0 : index
    %6 = vector.load %arg6[%c0_5, %c0_6] : memref<8x1024xf32, #tpu.memory_space<vmem>>, vector<8x1024xf32>
    tpu.vector_store %arg6[%c0_5, %c0_6], %5 {strides = array<i32>} : memref<8x1024xf32, #tpu.memory_space<vmem>>, vector<8x1024xf32>,
    %c0_7 = arith.constant 0 : index
    %c0_8 = arith.constant 0 : index
    %7 = vector.load %arg3[%c0_7, %c0_8] : memref<256x1024xbf16, #tpu.memory_space<vmem>>, vector<256x1024xbf16>
    %cst_9 = arith.constant 0.000000e+00 : f32
    %8 = vector.broadcast %cst_9 : f32 to vector<2x256xf32>
    %cst_10 = arith.constant 0.000000e+00 : f32
    %9 = vector.broadcast %cst_10 : f32 to vector<2x256xf32>
    %c0_i32 = arith.constant 0 : i32
    %c2_i32 = arith.constant 2 : i32
    %10 = arith.muli %c0_i32, %c2_i32 : i32
    %11 = arith.index_cast %10 : i32 to index
    %c0_11 = arith.constant 0 : index
    %12 = vector.load %arg6[%11, %c0_11] : memref<8x1024xf32, #tpu.memory_space<vmem>>, vector<2x1024xf32>
    %13 = arith.truncf %8 : vector<2x256xf32> to vector<2x256xbf16>
    %cst_12 = arith.constant dense<0.000000e+00> : vector<2x1024xf32>
    %14 = tpu.matmul %13, %7, %cst_12 {dimension_numbers = #tpu.dot_dimension_numbers<[1], [0], [0], [1], [0, 0, 1, 1], [], []>} : vector<2x256xbf16>, vector<256x1024xbf16>, vector<2x1024xf32> -> vector<2x1024xf32>
    %15 = arith.addf %12, %14 : vector<2x1024xf32>
    %16 = vector.extract_strided_slice %15 {offsets = [0, 0], sizes = [2, 256], strides = [1, 1]} : vector<2x1024xf32> to vector<2x256xf32>
    %17 = arith.negf %16 : vector<2x256xf32>
    %18 = math.exp %17 : vector<2x256xf32>
    %cst_13 = arith.constant 1.000000e+00 : f32
    %19 = vector.broadcast %cst_13 : f32 to vector<2x256xf32>
    %20 = arith.addf %19, %18 : vector<2x256xf32>
    %21 = arith.divf %19, %20 : vector<2x256xf32>
    %22 = vector.extract_strided_slice %15 {offsets = [0, 256], sizes = [2, 256], strides = [1, 1]} : vector<2x1024xf32> to vector<2x256xf32>
    %23 = arith.negf %22 : vector<2x256xf32>
    %24 = math.exp %23 : vector<2x256xf32>
    %cst_14 = arith.constant 1.000000e+00 : f32
    %25 = vector.broadcast %cst_14 : f32 to vector<2x256xf32>
    %26 = arith.addf %25, %24 : vector<2x256xf32>
    %27 = arith.divf %25, %26 : vector<2x256xf32>
    %28 = vector.extract_strided_slice %15 {offsets = [0, 512], sizes = [2, 256], strides = [1, 1]} : vector<2x1024xf32> to vector<2x256xf32>
    %29 = math.tanh %28 : vector<2x256xf32>
    %30 = vector.extract_strided_slice %15 {offsets = [0, 768], sizes = [2, 256], strides = [1, 1]} : vector<2x1024xf32> to vector<2x256xf32>
    %31 = arith.negf %30 : vector<2x256xf32>
    %32 = math.exp %31 : vector<2x256xf32>
    %cst_15 = arith.constant 1.000000e+00 : f32
    %33 = vector.broadcast %cst_15 : f32 to vector<2x256xf32>
    %34 = arith.addf %33, %32 : vector<2x256xf32>
    %35 = arith.divf %33, %34 : vector<2x256xf32>
    %36 = arith.mulf %27, %9 : vector<2x256xf32>
    %37 = arith.mulf %21, %29 : vector<2x256xf32>
    %38 = arith.addf %36, %37 : vector<2x256xf32>
    %39 = math.tanh %38 : vector<2x256xf32>
    %40 = arith.mulf %35, %39 : vector<2x256xf32>
    %41 = arith.index_cast %10 : i32 to index
    %c0_16 = arith.constant 0 : index
    %42 = vector.load %arg7[%41, %c0_16] : memref<8x256xf32, #tpu.memory_space<vmem>>, vector<2x256xf32>
    tpu.vector_store %arg7[%41, %c0_16], %40 {strides = array<i32>} : memref<8x256xf32, #tpu.memory_space<vmem>>, vector<2x256xf32>,
    %c1_i32 = arith.constant 1 : i32
    %c2_i32_17 = arith.constant 2 : i32
    %43 = arith.muli %c1_i32, %c2_i32_17 : i32
    %44 = arith.index_cast %43 : i32 to index
    %c0_18 = arith.constant 0 : index
    %45 = vector.load %arg6[%44, %c0_18] : memref<8x1024xf32, #tpu.memory_space<vmem>>, vector<2x1024xf32>
    %46 = arith.truncf %40 : vector<2x256xf32> to vector<2x256xbf16>
    %cst_19 = arith.constant dense<0.000000e+00> : vector<2x1024xf32>
    %47 = tpu.matmul %46, %7, %cst_19 {dimension_numbers = #tpu.dot_dimension_numbers<[1], [0], [0], [1], [0, 0, 1, 1], [], []>} : vector<2x256xbf16>, vector<256x1024xbf16>, vector<2x1024xf32> -> vector<2x1024xf32>
    %48 = arith.addf %45, %47 : vector<2x1024xf32>
    %49 = vector.extract_strided_slice %48 {offsets = [0, 0], sizes = [2, 256], strides = [1, 1]} : vector<2x1024xf32> to vector<2x256xf32>
    %50 = arith.negf %49 : vector<2x256xf32>
    %51 = math.exp %50 : vector<2x256xf32>
    %cst_20 = arith.constant 1.000000e+00 : f32
    %52 = vector.broadcast %cst_20 : f32 to vector<2x256xf32>
    %53 = arith.addf %52, %51 : vector<2x256xf32>
    %54 = arith.divf %52, %53 : vector<2x256xf32>
    %55 = vector.extract_strided_slice %48 {offsets = [0, 256], sizes = [2, 256], strides = [1, 1]} : vector<2x1024xf32> to vector<2x256xf32>
    %56 = arith.negf %55 : vector<2x256xf32>
    %57 = math.exp %56 : vector<2x256xf32>
    %cst_21 = arith.constant 1.000000e+00 : f32
    %58 = vector.broadcast %cst_21 : f32 to vector<2x256xf32>
    %59 = arith.addf %58, %57 : vector<2x256xf32>
    %60 = arith.divf %58, %59 : vector<2x256xf32>
    %61 = vector.extract_strided_slice %48 {offsets = [0, 512], sizes = [2, 256], strides = [1, 1]} : vector<2x1024xf32> to vector<2x256xf32>
    %62 = math.tanh %61 : vector<2x256xf32>
    %63 = vector.extract_strided_slice %48 {offsets = [0, 768], sizes = [2, 256], strides = [1, 1]} : vector<2x1024xf32> to vector<2x256xf32>
    %64 = arith.negf %63 : vector<2x256xf32>
    %65 = math.exp %64 : vector<2x256xf32>
    %cst_22 = arith.constant 1.000000e+00 : f32
    %66 = vector.broadcast %cst_22 : f32 to vector<2x256xf32>
    %67 = arith.addf %66, %65 : vector<2x256xf32>
    %68 = arith.divf %66, %67 : vector<2x256xf32>
    %69 = arith.mulf %60, %38 : vector<2x256xf32>
    %70 = arith.mulf %54, %62 : vector<2x256xf32>
    %71 = arith.addf %69, %70 : vector<2x256xf32>
    %72 = math.tanh %71 : vector<2x256xf32>
    %73 = arith.mulf %68, %72 : vector<2x256xf32>
    %74 = arith.index_cast %43 : i32 to index
    %c0_23 = arith.constant 0 : index
    %75 = vector.load %arg7[%74, %c0_23] : memref<8x256xf32, #tpu.memory_space<vmem>>, vector<2x256xf32>
    tpu.vector_store %arg7[%74, %c0_23], %73 {strides = array<i32>} : memref<8x256xf32, #tpu.memory_space<vmem>>, vector<2x256xf32>,
    %c2_i32_24 = arith.constant 2 : i32
    %c2_i32_25 = arith.constant 2 : i32
    %76 = arith.muli %c2_i32_24, %c2_i32_25 : i32
    %77 = arith.index_cast %76 : i32 to index
    %c0_26 = arith.constant 0 : index
    %78 = vector.load %arg6[%77, %c0_26] : memref<8x1024xf32, #tpu.memory_space<vmem>>, vector<2x1024xf32>
    %79 = arith.truncf %73 : vector<2x256xf32> to vector<2x256xbf16>
    %cst_27 = arith.constant dense<0.000000e+00> : vector<2x1024xf32>
    %80 = tpu.matmul %79, %7, %cst_27 {dimension_numbers = #tpu.dot_dimension_numbers<[1], [0], [0], [1], [0, 0, 1, 1], [], []>} : vector<2x256xbf16>, vector<256x1024xbf16>, vector<2x1024xf32> -> vector<2x1024xf32>
    %81 = arith.addf %78, %80 : vector<2x1024xf32>
    %82 = vector.extract_strided_slice %81 {offsets = [0, 0], sizes = [2, 256], strides = [1, 1]} : vector<2x1024xf32> to vector<2x256xf32>
    %83 = arith.negf %82 : vector<2x256xf32>
    %84 = math.exp %83 : vector<2x256xf32>
    %cst_28 = arith.constant 1.000000e+00 : f32
    %85 = vector.broadcast %cst_28 : f32 to vector<2x256xf32>
    %86 = arith.addf %85, %84 : vector<2x256xf32>
    %87 = arith.divf %85, %86 : vector<2x256xf32>
    %88 = vector.extract_strided_slice %81 {offsets = [0, 256], sizes = [2, 256], strides = [1, 1]} : vector<2x1024xf32> to vector<2x256xf32>
    %89 = arith.negf %88 : vector<2x256xf32>
    %90 = math.exp %89 : vector<2x256xf32>
    %cst_29 = arith.constant 1.000000e+00 : f32
    %91 = vector.broadcast %cst_29 : f32 to vector<2x256xf32>
    %92 = arith.addf %91, %90 : vector<2x256xf32>
    %93 = arith.divf %91, %92 : vector<2x256xf32>
    %94 = vector.extract_strided_slice %81 {offsets = [0, 512], sizes = [2, 256], strides = [1, 1]} : vector<2x1024xf32> to vector<2x256xf32>
    %95 = math.tanh %94 : vector<2x256xf32>
    %96 = vector.extract_strided_slice %81 {offsets = [0, 768], sizes = [2, 256], strides = [1, 1]} : vector<2x1024xf32> to vector<2x256xf32>
    %97 = arith.negf %96 : vector<2x256xf32>
    %98 = math.exp %97 : vector<2x256xf32>
    %cst_30 = arith.constant 1.000000e+00 : f32
    %99 = vector.broadcast %cst_30 : f32 to vector<2x256xf32>
    %100 = arith.addf %99, %98 : vector<2x256xf32>
    %101 = arith.divf %99, %100 : vector<2x256xf32>
    %102 = arith.mulf %93, %71 : vector<2x256xf32>
    %103 = arith.mulf %87, %95 : vector<2x256xf32>
    %104 = arith.addf %102, %103 : vector<2x256xf32>
    %105 = math.tanh %104 : vector<2x256xf32>
    %106 = arith.mulf %101, %105 : vector<2x256xf32>
    %107 = arith.index_cast %76 : i32 to index
    %c0_31 = arith.constant 0 : index
    %108 = vector.load %arg7[%107, %c0_31] : memref<8x256xf32, #tpu.memory_space<vmem>>, vector<2x256xf32>
    tpu.vector_store %arg7[%107, %c0_31], %106 {strides = array<i32>} : memref<8x256xf32, #tpu.memory_space<vmem>>, vector<2x256xf32>,
    %c3_i32 = arith.constant 3 : i32
    %c2_i32_32 = arith.constant 2 : i32
    %109 = arith.muli %c3_i32, %c2_i32_32 : i32
    %110 = arith.index_cast %109 : i32 to index
    %c0_33 = arith.constant 0 : index
    %111 = vector.load %arg6[%110, %c0_33] : memref<8x1024xf32, #tpu.memory_space<vmem>>, vector<2x1024xf32>
    %112 = arith.truncf %106 : vector<2x256xf32> to vector<2x256xbf16>
    %cst_34 = arith.constant dense<0.000000e+00> : vector<2x1024xf32>
    %113 = tpu.matmul %112, %7, %cst_34 {dimension_numbers = #tpu.dot_dimension_numbers<[1], [0], [0], [1], [0, 0, 1, 1], [], []>} : vector<2x256xbf16>, vector<256x1024xbf16>, vector<2x1024xf32> -> vector<2x1024xf32>
    %114 = arith.addf %111, %113 : vector<2x1024xf32>
    %115 = vector.extract_strided_slice %114 {offsets = [0, 0], sizes = [2, 256], strides = [1, 1]} : vector<2x1024xf32> to vector<2x256xf32>
    %116 = arith.negf %115 : vector<2x256xf32>
    %117 = math.exp %116 : vector<2x256xf32>
    %cst_35 = arith.constant 1.000000e+00 : f32
    %118 = vector.broadcast %cst_35 : f32 to vector<2x256xf32>
    %119 = arith.addf %118, %117 : vector<2x256xf32>
    %120 = arith.divf %118, %119 : vector<2x256xf32>
    %121 = vector.extract_strided_slice %114 {offsets = [0, 256], sizes = [2, 256], strides = [1, 1]} : vector<2x1024xf32> to vector<2x256xf32>
    %122 = arith.negf %121 : vector<2x256xf32>
    %123 = math.exp %122 : vector<2x256xf32>
    %cst_36 = arith.constant 1.000000e+00 : f32
    %124 = vector.broadcast %cst_36 : f32 to vector<2x256xf32>
    %125 = arith.addf %124, %123 : vector<2x256xf32>
    %126 = arith.divf %124, %125 : vector<2x256xf32>
    %127 = vector.extract_strided_slice %114 {offsets = [0, 512], sizes = [2, 256], strides = [1, 1]} : vector<2x1024xf32> to vector<2x256xf32>
    %128 = math.tanh %127 : vector<2x256xf32>
    %129 = vector.extract_strided_slice %114 {offsets = [0, 768], sizes = [2, 256], strides = [1, 1]} : vector<2x1024xf32> to vector<2x256xf32>
    %130 = arith.negf %129 : vector<2x256xf32>
    %131 = math.exp %130 : vector<2x256xf32>
    %cst_37 = arith.constant 1.000000e+00 : f32
    %132 = vector.broadcast %cst_37 : f32 to vector<2x256xf32>
    %133 = arith.addf %132, %131 : vector<2x256xf32>
    %134 = arith.divf %132, %133 : vector<2x256xf32>
    %135 = arith.mulf %126, %104 : vector<2x256xf32>
    %136 = arith.mulf %120, %128 : vector<2x256xf32>
    %137 = arith.addf %135, %136 : vector<2x256xf32>
    %138 = math.tanh %137 : vector<2x256xf32>
    %139 = arith.mulf %134, %138 : vector<2x256xf32>
    %140 = arith.index_cast %109 : i32 to index
    %c0_38 = arith.constant 0 : index
    %141 = vector.load %arg7[%140, %c0_38] : memref<8x256xf32, #tpu.memory_space<vmem>>, vector<2x256xf32>
    tpu.vector_store %arg7[%140, %c0_38], %139 {strides = array<i32>} : memref<8x256xf32, #tpu.memory_space<vmem>>, vector<2x256xf32>,
    %c4_i32 = arith.constant 4 : i32
    %c0_39 = arith.constant 0 : index
    %c0_40 = arith.constant 0 : index
    %142 = vector.load %arg7[%c0_39, %c0_40] : memref<8x256xf32, #tpu.memory_space<vmem>>, vector<8x256xf32>
    %143 = arith.truncf %142 : vector<8x256xf32> to vector<8x256xbf16>
    %c0_41 = arith.constant 0 : index
    %c0_42 = arith.constant 0 : index
    %144 = vector.load %arg5[%c0_41, %c0_42] : memref<8x256xbf16, #tpu.memory_space<vmem>>, vector<8x256xbf16>
    tpu.vector_store %arg5[%c0_41, %c0_42], %143 {strides = array<i32>} : memref<8x256xbf16, #tpu.memory_space<vmem>>, vector<8x256xbf16>,
    return
  }
  func.func @transform_0(%arg0: i32) -> (i32, i32) {
    %c0_i32 = arith.constant 0 : i32
    %c0_i32_0 = arith.constant 0 : i32
    %c0_i32_1 = arith.constant 0 : i32
    return %c0_i32, %c0_i32_0 : i32, i32
  }
  func.func @transform_1(%arg0: i32) -> (i32, i32) {
    %c0_i32 = arith.constant 0 : i32
    %c0_i32_0 = arith.constant 0 : i32
    %c0_i32_1 = arith.constant 0 : i32
    return %c0_i32, %c0_i32_0 : i32, i32
  }
  func.func @transform_2(%arg0: i32) -> (i32, i32) {
    %c0_i32 = arith.constant 0 : i32
    %c0_i32_0 = arith.constant 0 : i32
    %c0_i32_1 = arith.constant 0 : i32
    return %c0_i32, %c0_i32_0 : i32, i32
  }
  func.func @transform_3(%arg0: i32) -> (i32, i32) {
    %c0_i32 = arith.constant 0 : i32
    %c0_i32_0 = arith.constant 0 : i32
    %c0_i32_1 = arith.constant 0 : i32
    return %c0_i32, %c0_i32_0 : i32, i32
  }
  func.func @transform_4(%arg0: i32) -> (i32, i32) {
    %c0_i32 = arith.constant 0 : i32
    %c0_i32_0 = arith.constant 0 : i32
    %c0_i32_1 = arith.constant 0 : i32
    return %c0_i32, %c0_i32_0 : i32, i32
  }
}

module attributes {stable_mosaic.version = 11 : i64} {
  func.func @_conv3_kernel(%arg0: i32, %arg1: memref<1x18x64xbf16, #tpu.memory_space<vmem>>, %arg2: memref<3x64x128xbf16, #tpu.memory_space<vmem>>, %arg3: memref<1x128xf32, #tpu.memory_space<vmem>>, %arg4: memref<1x16x128xf32, #tpu.memory_space<vmem>>) attributes {dimension_semantics = [#tpu.dimension_semantics<parallel>], iteration_bounds = array<i64: 2>, scalar_prefetch = 0 : i64, scratch_operands = 0 : i64, tpu.core_type = #tpu.core_type<tc>, window_params = [{transform_indices = @transform_0, window_bounds = array<i64: 1, 18, 64>}, {pipeline_mode = #tpu.pipeline_mode<synchronous>, transform_indices = @transform_1, window_bounds = array<i64: 3, 64, 128>}, {pipeline_mode = #tpu.pipeline_mode<synchronous>, transform_indices = @transform_2, window_bounds = array<i64: 1, 128>}, {transform_indices = @transform_3, window_bounds = array<i64: 1, 16, 128>}]} {
    %c0 = arith.constant 0 : index
    %c0_0 = arith.constant 0 : index
    %c0_1 = arith.constant 0 : index
    %0 = vector.load %arg1[%c0, %c0_0, %c0_1] : memref<1x18x64xbf16, #tpu.memory_space<vmem>>, vector<1x16x64xbf16>
    %1 = vector.shape_cast %0 : vector<1x16x64xbf16> to vector<16x64xbf16>
    %c0_2 = arith.constant 0 : index
    %c0_3 = arith.constant 0 : index
    %c0_4 = arith.constant 0 : index
    %2 = vector.load %arg2[%c0_2, %c0_3, %c0_4] : memref<3x64x128xbf16, #tpu.memory_space<vmem>>, vector<1x64x128xbf16>
    %3 = vector.shape_cast %2 : vector<1x64x128xbf16> to vector<64x128xbf16>
    %cst = arith.constant dense<0.000000e+00> : vector<16x128xf32>
    %4 = tpu.matmul %1, %3, %cst {dimension_numbers = #tpu.dot_dimension_numbers<[1], [0], [0], [1], [0, 0, 1, 1], [], []>} : vector<16x64xbf16>, vector<64x128xbf16>, vector<16x128xf32> -> vector<16x128xf32>
    %c0_5 = arith.constant 0 : index
    %c1 = arith.constant 1 : index
    %c0_6 = arith.constant 0 : index
    %5 = vector.load %arg1[%c0_5, %c1, %c0_6] : memref<1x18x64xbf16, #tpu.memory_space<vmem>>, vector<1x16x64xbf16>
    %6 = vector.shape_cast %5 : vector<1x16x64xbf16> to vector<16x64xbf16>
    %c1_7 = arith.constant 1 : index
    %c0_8 = arith.constant 0 : index
    %c0_9 = arith.constant 0 : index
    %7 = vector.load %arg2[%c1_7, %c0_8, %c0_9] : memref<3x64x128xbf16, #tpu.memory_space<vmem>>, vector<1x64x128xbf16>
    %8 = vector.shape_cast %7 : vector<1x64x128xbf16> to vector<64x128xbf16>
    %cst_10 = arith.constant dense<0.000000e+00> : vector<16x128xf32>
    %9 = tpu.matmul %6, %8, %cst_10 {dimension_numbers = #tpu.dot_dimension_numbers<[1], [0], [0], [1], [0, 0, 1, 1], [], []>} : vector<16x64xbf16>, vector<64x128xbf16>, vector<16x128xf32> -> vector<16x128xf32>
    %10 = arith.addf %4, %9 : vector<16x128xf32>
    %c0_11 = arith.constant 0 : index
    %c2 = arith.constant 2 : index
    %c0_12 = arith.constant 0 : index
    %11 = vector.load %arg1[%c0_11, %c2, %c0_12] : memref<1x18x64xbf16, #tpu.memory_space<vmem>>, vector<1x16x64xbf16>
    %12 = vector.shape_cast %11 : vector<1x16x64xbf16> to vector<16x64xbf16>
    %c2_13 = arith.constant 2 : index
    %c0_14 = arith.constant 0 : index
    %c0_15 = arith.constant 0 : index
    %13 = vector.load %arg2[%c2_13, %c0_14, %c0_15] : memref<3x64x128xbf16, #tpu.memory_space<vmem>>, vector<1x64x128xbf16>
    %14 = vector.shape_cast %13 : vector<1x64x128xbf16> to vector<64x128xbf16>
    %cst_16 = arith.constant dense<0.000000e+00> : vector<16x128xf32>
    %15 = tpu.matmul %12, %14, %cst_16 {dimension_numbers = #tpu.dot_dimension_numbers<[1], [0], [0], [1], [0, 0, 1, 1], [], []>} : vector<16x64xbf16>, vector<64x128xbf16>, vector<16x128xf32> -> vector<16x128xf32>
    %16 = arith.addf %10, %15 : vector<16x128xf32>
    %c0_17 = arith.constant 0 : index
    %c0_18 = arith.constant 0 : index
    %17 = vector.load %arg3[%c0_17, %c0_18] : memref<1x128xf32, #tpu.memory_space<vmem>>, vector<1x128xf32>
    %18 = vector.broadcast %17 : vector<1x128xf32> to vector<16x128xf32>
    %19 = arith.addf %16, %18 : vector<16x128xf32>
    %c0_19 = arith.constant 0 : index
    %c0_20 = arith.constant 0 : index
    %c0_21 = arith.constant 0 : index
    %20 = vector.load %arg4[%c0_19, %c0_20, %c0_21] : memref<1x16x128xf32, #tpu.memory_space<vmem>>, vector<1x16x128xf32>
    %21 = vector.shape_cast %20 : vector<1x16x128xf32> to vector<16x128xf32>
    %22 = vector.shape_cast %19 : vector<16x128xf32> to vector<1x16x128xf32>
    tpu.vector_store %arg4[%c0_19, %c0_20, %c0_21], %22 {strides = array<i32>} : memref<1x16x128xf32, #tpu.memory_space<vmem>>, vector<1x16x128xf32>,
    return
  }
  func.func @transform_0(%arg0: i32) -> (i32, i32, i32) {
    %c0_i32 = arith.constant 0 : i32
    %c0_i32_0 = arith.constant 0 : i32
    %c0_i32_1 = arith.constant 0 : i32
    return %arg0, %c0_i32, %c0_i32_0 : i32, i32, i32
  }
  func.func @transform_1(%arg0: i32) -> (i32, i32, i32) {
    %c0_i32 = arith.constant 0 : i32
    %c0_i32_0 = arith.constant 0 : i32
    %c0_i32_1 = arith.constant 0 : i32
    %c0_i32_2 = arith.constant 0 : i32
    return %c0_i32, %c0_i32_0, %c0_i32_1 : i32, i32, i32
  }
  func.func @transform_2(%arg0: i32) -> (i32, i32) {
    %c0_i32 = arith.constant 0 : i32
    %c0_i32_0 = arith.constant 0 : i32
    %c0_i32_1 = arith.constant 0 : i32
    return %c0_i32, %c0_i32_0 : i32, i32
  }
  func.func @transform_3(%arg0: i32) -> (i32, i32, i32) {
    %c0_i32 = arith.constant 0 : i32
    %c0_i32_0 = arith.constant 0 : i32
    %c0_i32_1 = arith.constant 0 : i32
    return %arg0, %c0_i32, %c0_i32_0 : i32, i32, i32
  }
}

</mosaic_0001>

<llo_original>
// kernel: forward.7
$region0: #{forward.7}
  #allocation0 [shape = 'u32[]', space=smem, size = 0x4, offset = 0x4, fixed_abs, tag = 'smem constant byte address 0x4 - core index']
  #allocation1 [shape = 'u32[72,128]{1,0:T(1,128)}', space=vmem, size = 0x9000, scoped, tag = 'internal scratch']
  %s0 = inlined_call_operand.vmem [shape: bf16[2,18,36], index: 0, kind: input, shape index: {}]
  %s1 = inlined_call_operand.vmem [shape: bf16[3,36,64], index: 1, kind: input, shape index: {}]
  %s2 = inlined_call_operand.vmem [shape: f32[1,64], index: 2, kind: input, shape index: {}]
  %s3 = inlined_call_operand.vmem [shape: bf16[2,16,64], index: 3, kind: output, shape index: {}]
  %s4 = sld [smem:[#allocation0]]
  $region45: #{forward.7} parent=0
    _
  %s6 = ssub.s32 1, %s4
  %s7 = scalar_select 0, %s6, %s4
  loop: start=0, step=1, limit=4
  $region2: #{forward.7} parent=0 // loop_pre_header
    _
  $region3: #{forward.7} parent=0 // loop_header
    %s9 = sphi 0, %s13
    %p10 = scmp.ge.s32.totalorder %s9, 4
    %s19 = sphi 0, %s21
    %s22 = sphi 0, %s19
    %s23 = sphi 0, %s22
    %s39 = sphi 0, %s23
    %s43 = sphi 0, %s43
    %s45 = sphi 0, %s43
    %s46 = sphi 0, %s45
    %s60 = sphi 0, %s46
    %s64 = sphi 0, %s64
    %s66 = sphi 0, %s64
    %s67 = sphi 0, %s66
    %s81 = sphi 0, %s67
    %s87 = sphi 0, %s89
    %s90 = sphi 0, %s87
    %s91 = sphi 0, %s90
    %s107 = sphi 0, %s91
  $region4: #{forward.7} parent=0 // loop_header_branch
    %12 = sbr.rel (%p10) target = $region8
  $region5: #{forward.7} parent=0 // loop_body
    %s14 = ssub.s32 %s9, 1
    %s15 = ssub.s32 %s9, 2
    %s16 = sadd.s32 %s9, 1
    %s17 = ssub.s32 %s9, %s16
    %p18 = scmp.eq.s32.totalorder %s17, 0
    %s20 = sadd.s32 %s19, 1
    %s21 = scalar_select %p18, %s19, %s20
    %p24 = pneg %p18
    %p25 = scmp.eq.s32.totalorder %s9, 1
    %p26 = por %p24, %p25
    %p27 = scmp.ne.s32.totalorder %s19, %s22
    %p28 = scmp.eq.s32.totalorder %s9, 0
    %p29 = por %p27, %p28
    %p30 = scmp.ne.s32.totalorder %s19, %s22
    %p31 = scmp.eq.s32.totalorder %s14, 1
    %p32 = por %p30, %p31
    %p33 = scmp.ne.s32.totalorder %s22, %s23
    %p34 = scmp.eq.s32.totalorder %s14, 0
    %p35 = por %p33, %p34
    %p36 = scmp.ne.s32.totalorder %s22, %s23
    %p37 = scmp.eq.s32.totalorder %s15, 1
    %p38 = por %p36, %p37
    %p40 = scmp.ne.s32.totalorder %s23, %s39
    %p41 = scmp.eq.s32.totalorder %s15, 0
    %p42 = por %p40, %p41
    %s44 = sadd.s32 %s43, 1
    %p47 = scmp.eq.s32.totalorder %s9, 1
    %p48 = scmp.ne.s32.totalorder %s43, %s45
    %p49 = scmp.eq.s32.totalorder %s9, 0
    %p50 = por %p48, %p49
    %p51 = scmp.ne.s32.totalorder %s43, %s45
    %p52 = scmp.eq.s32.totalorder %s14, 1
    %p53 = por %p51, %p52
    %p54 = scmp.ne.s32.totalorder %s45, %s46
    %p55 = scmp.eq.s32.totalorder %s14, 0
    %p56 = por %p54, %p55
    %p57 = scmp.ne.s32.totalorder %s45, %s46
    %p58 = scmp.eq.s32.totalorder %s15, 1
    %p59 = por %p57, %p58
    %p61 = scmp.ne.s32.totalorder %s46, %s60
    %p62 = scmp.eq.s32.totalorder %s15, 0
    %p63 = por %p61, %p62
    %s65 = sadd.s32 %s64, 1
    %p68 = scmp.eq.s32.totalorder %s9, 1
    %p69 = scmp.ne.s32.totalorder %s64, %s66
    %p70 = scmp.eq.s32.totalorder %s9, 0
    %p71 = por %p69, %p70
    %p72 = scmp.ne.s32.totalorder %s64, %s66
    %p73 = scmp.eq.s32.totalorder %s14, 1
    %p74 = por %p72, %p73
    %p75 = scmp.ne.s32.totalorder %s66, %s67
    %p76 = scmp.eq.s32.totalorder %s14, 0
    %p77 = por %p75, %p76
    %p78 = scmp.ne.s32.totalorder %s66, %s67
    %p79 = scmp.eq.s32.totalorder %s15, 1
    %p80 = por %p78, %p79
    %p82 = scmp.ne.s32.totalorder %s67, %s81
    %p83 = scmp.eq.s32.totalorder %s15, 0
    %p84 = por %p82, %p83
    %s85 = ssub.s32 %s9, %s16
    %p86 = scmp.eq.s32.totalorder %s85, 0
    %s88 = sadd.s32 %s87, 1
    %s89 = scalar_select %p86, %s87, %s88
    %p92 = pneg %p86
    %p93 = scmp.eq.s32.totalorder %s9, 1
    %p94 = por %p92, %p93
    %p95 = scmp.ne.s32.totalorder %s87, %s90
    %p96 = scmp.eq.s32.totalorder %s9, 0
    %p97 = por %p95, %p96
    %p98 = scmp.ne.s32.totalorder %s87, %s90
    %p99 = scmp.eq.s32.totalorder %s14, 1
    %p100 = por %p98, %p99
    %p101 = scmp.ne.s32.totalorder %s90, %s91
    %p102 = scmp.eq.s32.totalorder %s14, 0
    %p103 = por %p101, %p102
    %p104 = scmp.ne.s32.totalorder %s90, %s91
    %p105 = scmp.eq.s32.totalorder %s15, 1
    %p106 = por %p104, %p105
    %p108 = scmp.ne.s32.totalorder %s91, %s107
    %p109 = scmp.eq.s32.totalorder %s15, 0
    %p110 = por %p108, %p109
    %p111 = scmp.le.s32.totalorder 1, %s9
    %p112 = scmp.lt.s32.totalorder %s9, 3
    %p113 = pnand %p111, %p112
    %p114 = pneg %p113
    // Predicated region
    $region9: #{forward.7} parent=5 // pred_check
      _
    $region10: #{forward.7} parent=5 // pred_check_branch
      %116 = sbr.rel (%p113) target = $region12
    $region11: #{forward.7} parent=5 // pred_region
      %s117 = ssub.s32 %s9, 1
      // Predicated region
      $region13: #{forward.7} parent=11 // pred_check
        %p118 = pneg %p56
      $region14: #{forward.7} parent=11 // pred_check_branch
        %120 = sbr.rel (%p118) target = $region16
      $region15: #{forward.7} parent=11 // pred_region
        _
      $region16: #{forward.7} parent=11 // pred_fallthru
        _
      // Predicated region
      $region17: #{forward.7} parent=11 // pred_check
        %p121 = pneg %p77
      $region18: #{forward.7} parent=11 // pred_check_branch
        %123 = sbr.rel (%p121) target = $region20
      $region19: #{forward.7} parent=11 // pred_region
        _
      $region20: #{forward.7} parent=11 // pred_fallthru
        _
    $region12: #{forward.7} parent=5 // pred_fallthru
      _
    %p124 = scmp.lt.s32.totalorder %s9, 2
    // Predicated region
    $region21: #{forward.7} parent=5 // pred_check
      %p125 = pneg %p124
    $region22: #{forward.7} parent=5 // pred_check_branch
      %127 = sbr.rel (%p125) target = $region24
    $region23: #{forward.7} parent=5 // pred_region
      // Predicated region
      $region25: #{forward.7} parent=23 // pred_check
        %p128 = pneg %p29
      $region26: #{forward.7} parent=23 // pred_check_branch
        %130 = sbr.rel (%p128) target = $region28
      $region27: #{forward.7} parent=23 // pred_region
        %p131 = scmp.lt.s32.totalorder %s9, 1
        %s132 = scalar_select %p131, %s9, 1
        %s133 = smul.addr %s132, 3
        %s134 = smul.addr %s133, 4
        %s135 = scalar_lea.vmem %s0, %s134
      $region28: #{forward.7} parent=23 // pred_fallthru
        _
    $region24: #{forward.7} parent=5 // pred_fallthru
      _
    %p136 = scmp.le.s32.totalorder 1, %s9
    %p137 = scmp.lt.s32.totalorder %s9, 3
    %p138 = pnand %p136, %p137
    %p139 = pneg %p138
    // Predicated region
    $region29: #{forward.7} parent=5 // pred_check
      _
    $region30: #{forward.7} parent=5 // pred_check_branch
      %141 = sbr.rel (%p138) target = $region32
    $region31: #{forward.7} parent=5 // pred_region
      %s142 = ssub.s32 %s9, 1
      %p143 = scmp.lt.s32.totalorder %s14, 1
      %s144 = scalar_select %p143, %s14, 1
      %s145 = smul.addr %s144, 3
      %s146 = smul.addr %s145, 4
      %s147 = scalar_lea.vmem %s0, %s146
      %p148 = pneg %p35
      %p149 = pneg %p32
      %p150 = pneg %p56
      %p151 = pneg %p53
      %p152 = pneg %p77
      %p153 = pneg %p74
      %p154 = pneg %p103
      %p155 = pneg %p100
      %p156 = scmp.lt.s32.totalorder %s14, 1
      %s157 = scalar_select %p156, %s14, 1
      %s158 = smul.addr %s157, 2
      %s159 = smul.addr %s158, 4
      %s160 = scalar_lea.vmem %s3, %s159
      %p161 = scmp.lt.s32.totalorder %s14, 1
      %s162 = scalar_select %p161, %s14, 1
      %s163 = smul.addr %s162, 3
      %s164 = smul.addr %s163, 4
      %s165 = scalar_lea.vmem %s0, %s164
      %p166 = scmp.lt.s32.totalorder %s14, 1
      %s167 = scalar_select %p166, %s14, 1
      %s168 = smul.addr %s167, 2
      %s169 = smul.addr %s168, 4
      %s170 = scalar_lea.vmem %s3, %s169
      %v172 = vld [vmem:[%s165] sm:$0xf]
      %v173 = vld [vmem:[%s165 + $0x4] sm:$0xf]
      %v174 = vld [vmem:[%s1] sm:$0xf]
      %v175 = vld [vmem:[%s1 + $0x4] sm:$0xf]
      %v176 = vld [vmem:[%s1 + $0x8] sm:$0xf]
      %v177 = vld [vmem:[%s1 + $0xc] sm:$0xf]
      %v178 = vld [vmem:[%s1 + $0x10] sm:$0x3]
      %v179 = vld [vmem:[%s165 + $0x8] sm:$0x1]
      %s180 = scalar_lea.vmem %s1, 20
      %v181 = vld [vmem:[%s180] sm:$0xf]
      %v182 = vld [vmem:[%s180 + $0x4] sm:$0xf]
      %v183 = vld [vmem:[%s180 + $0x8] sm:$0xf]
      %v184 = vld [vmem:[%s180 + $0xc] sm:$0xf]
      %v185 = vld [vmem:[%s180 + $0x10] sm:$0x3]
      %v189 = vunpack.c.l.b16 %v172
      %v190 = vunpack.c.l.b16 %v173
      %v191 = vunpack.c.l.b16 %v179
      %v192 = vpack.c.b16 %v190, %v189
      %v193 = vpack.c.b16 %v191, %v191
      %vm194 = vsmask.f32 7424
      %v196 = vshrl.u32 %v192, 16
      %v198 = vshll.u32 %v192, 16
      %v200 = vrot.slane %v198, 1
      %v201 = vor.u32 %v196, %v200
      %v203 = vshll.u32 %v193, 16
      %v205 = vrot.slane %v203, 1
      %v206 = vsel %vm194, %v201, %v205
      %v212 = vunpack.c.l.b16 %v181
      %v213 = vunpack.c.l.b16 %v182
      %v214 = vunpack.c.l.b16 %v183
      %v215 = vunpack.c.l.b16 %v184
      %v216 = vunpack.c.l.b16 %v185
      %v217 = vpack.c.b16 %v213, %v212
      %v218 = vpack.c.b16 %v215, %v214
      %v219 = vpack.c.b16 %v216, %v216
      %vm222 = vcmask 293888
      %v224 = vsel %vm222, %v206, 0
      %vm226 = vcmask 1041408
      %v228 = vsel %vm226, %v219, 0
      %230 = vmatpush.bf16.msra.mxu0 0
      %231 = vmatpush.bf16.msra.mxu0 0
      %232 = vmatpush.bf16.msra.mxu0 0
      %233 = vmatpush.bf16.msra.mxu0 0
      %234 = vmatpush.bf16.msra.mxu0 0
      %235 = vmatpush.bf16.msra.mxu0 %v228
      %236 = vmatpush.bf16.msra.mxu0 %v218
      %237 = vmatpush.bf16.msra.mxu0 %v217
      %238 = vmatmul.bf16.gmra.mxu0 %v224
      %v239 = vpop.f32.mrf.mxu0
      %v240 = vadd.f32 0.0, %v239
      %v241 = vpop.f32.mrf.mxu0
      %v242 = vadd.f32 0.0, %v241
      %243 = vdwg.mxu0
      %v249 = vunpack.c.l.b16 %v174
      %v250 = vunpack.c.l.b16 %v175
      %v251 = vunpack.c.l.b16 %v176
      %v252 = vunpack.c.l.b16 %v177
      %v253 = vunpack.c.l.b16 %v178
      %v254 = vpack.c.b16 %v250, %v249
      %v255 = vpack.c.b16 %v252, %v251
      %v256 = vpack.c.b16 %v253, %v253
      %v259 = vsel %vm222, %v192, 0
      %v262 = vsel %vm226, %v256, 0
      %264 = vmatpush.bf16.msra.mxu0 0
      %265 = vmatpush.bf16.msra.mxu0 0
      %266 = vmatpush.bf16.msra.mxu0 0
      %267 = vmatpush.bf16.msra.mxu0 0
      %268 = vmatpush.bf16.msra.mxu0 0
      %269 = vmatpush.bf16.msra.mxu0 %v262
      %270 = vmatpush.bf16.msra.mxu0 %v255
      %271 = vmatpush.bf16.msra.mxu0 %v254
      %272 = vmatmul.bf16.gmra.mxu0 %v259
      %v273 = vpop.f32.mrf.mxu0
      %v274 = vadd.f32 %v240, %v273
      %v275 = vpop.f32.mrf.mxu0
      %v276 = vadd.f32 %v242, %v275
      %277 = vdwg.mxu0
      %v278 = vld [vmem:[%s165] sm:$0xe]
      %s279 = scalar_lea.vmem %s1, 40
      %v280 = vld [vmem:[%s279] sm:$0xf]
      %v281 = vld [vmem:[%s279 + $0x4] sm:$0xf]
      %v282 = vld [vmem:[%s279 + $0x8] sm:$0xf]
      %v283 = vld [vmem:[%s279 + $0xc] sm:$0xf]
      %v284 = vld [vmem:[%s279 + $0x10] sm:$0x3]
      %v286 = vunpack.c.l.b16 %v278
      %v287 = vpack.c.b16 %v190, %v286
      %vm288 = vcmask 1046528
      %v289 = vrot.slane %v287, 1
      %v290 = vrot.slane %v193, 1
      %v291 = vsel %vm288, %v289, %v290
      %v297 = vunpack.c.l.b16 %v280
      %v298 = vunpack.c.l.b16 %v281
      %v299 = vunpack.c.l.b16 %v282
      %v300 = vunpack.c.l.b16 %v283
      %v301 = vunpack.c.l.b16 %v284
      %v302 = vpack.c.b16 %v298, %v297
      %v303 = vpack.c.b16 %v300, %v299
      %v304 = vpack.c.b16 %v301, %v301
      %v308 = vsel %vm222, %v291, 0
      %v311 = vsel %vm226, %v304, 0
      %313 = vmatpush.bf16.msra.mxu0 0
      %314 = vmatpush.bf16.msra.mxu0 0
      %315 = vmatpush.bf16.msra.mxu0 0
      %316 = vmatpush.bf16.msra.mxu0 0
      %317 = vmatpush.bf16.msra.mxu0 0
      %318 = vmatpush.bf16.msra.mxu0 %v311
      %319 = vmatpush.bf16.msra.mxu0 %v303
      %320 = vmatpush.bf16.msra.mxu0 %v302
      %321 = vmatmul.bf16.gmra.mxu0 %v308
      %v322 = vpop.f32.mrf.mxu0
      %v323 = vadd.f32 0.0, %v322
      %v324 = vpop.f32.mrf.mxu0
      %v325 = vadd.f32 0.0, %v324
      %326 = vdwg.mxu0
      %v327 = vadd.f32 %v274, %v323
      %v328 = vadd.f32 %v276, %v325
      %v329 = vld [vmem:[%s2] sm:$0x1]
      %v331 = vperm.slane %v329, 0
      %v333 = vadd.f32 %v327, %v331
      %v334 = vadd.f32 %v328, %v331
      %v335 = vpack.c.bf16 %v333, %v333
      %v336 = vpack.c.bf16 %v334, %v334
      %vm337 = vcmask 519168
      %338 = vst.msk [vmem:[%s170] sm:$0xf] %vm337, %v335
      %339 = vst.msk [vmem:[%s170 + $0x4] sm:$0xf] %vm337, %v336
      %p340 = scmp.lt.s32.totalorder %s14, 1
      %s341 = scalar_select %p340, %s14, 1
      %s342 = smul.addr %s341, 2
      %s343 = smul.addr %s342, 4
      %s344 = scalar_lea.vmem %s3, %s343
      // Predicated region
      $region33: #{forward.7} parent=31 // pred_check
        %p345 = pneg %p100
      $region34: #{forward.7} parent=31 // pred_check_branch
        %347 = sbr.rel (%p345) target = $region36
      $region35: #{forward.7} parent=31 // pred_region
        _
      $region36: #{forward.7} parent=31 // pred_fallthru
        _
    $region32: #{forward.7} parent=5 // pred_fallthru
      _
    %p348 = scmp.le.s32.totalorder 2, %s9
    // Predicated region
    $region37: #{forward.7} parent=5 // pred_check
      %p349 = pneg %p348
    $region38: #{forward.7} parent=5 // pred_check_branch
      %351 = sbr.rel (%p349) target = $region40
    $region39: #{forward.7} parent=5 // pred_region
      %s352 = ssub.s32 %s9, 2
      // Predicated region
      $region41: #{forward.7} parent=39 // pred_check
        %p353 = pneg %p106
      $region42: #{forward.7} parent=39 // pred_check_branch
        %355 = sbr.rel (%p353) target = $region44
      $region43: #{forward.7} parent=39 // pred_region
        %p356 = scmp.lt.s32.totalorder %s15, 1
        %s357 = scalar_select %p356, %s15, 1
        %s358 = smul.addr %s357, 2
        %s359 = smul.addr %s358, 4
        %s360 = scalar_lea.vmem %s3, %s359
      $region44: #{forward.7} parent=39 // pred_fallthru
        _
    $region40: #{forward.7} parent=5 // pred_fallthru
      _
  $region6: #{forward.7} parent=0 // loop_footer
    %s13 = sadd.s32 1, %s9
  $region7: #{forward.7} parent=0 // loop_footer_branch
    %8 = sbr.rel target = $region3
  $region8: #{forward.7} parent=0 // loop_exit
    _

// kernel: forward.8
$region0: #{forward.8}
  #allocation0 [shape = 'u32[]', space=smem, size = 0x4, offset = 0x4, fixed_abs, tag = 'smem constant byte address 0x4 - core index']
  #allocation1 [shape = 'u32[72,128]{1,0:T(1,128)}', space=vmem, size = 0x9000, scoped, tag = 'internal scratch']
  %s0 = inlined_call_operand.vmem [shape: bf16[2,10,128], index: 0, kind: input, shape index: {}]
  %s1 = inlined_call_operand.vmem [shape: bf16[3,128,128], index: 1, kind: input, shape index: {}]
  %s2 = inlined_call_operand.vmem [shape: f32[1,128], index: 2, kind: input, shape index: {}]
  %s3 = inlined_call_operand.vmem [shape: bf16[2,8,128], index: 3, kind: output, shape index: {}]
  %s4 = sld [smem:[#allocation0]]
  $region45: #{forward.8} parent=0
    _
  %s6 = ssub.s32 1, %s4
  %s7 = scalar_select 0, %s6, %s4
  loop: start=0, step=1, limit=4
  $region2: #{forward.8} parent=0 // loop_pre_header
    _
  $region3: #{forward.8} parent=0 // loop_header
    %s9 = sphi 0, %s13
    %p10 = scmp.ge.s32.totalorder %s9, 4
    %s19 = sphi 0, %s21
    %s22 = sphi 0, %s19
    %s23 = sphi 0, %s22
    %s39 = sphi 0, %s23
    %s43 = sphi 0, %s43
    %s45 = sphi 0, %s43
    %s46 = sphi 0, %s45
    %s60 = sphi 0, %s46
    %s64 = sphi 0, %s64
    %s66 = sphi 0, %s64
    %s67 = sphi 0, %s66
    %s81 = sphi 0, %s67
    %s87 = sphi 0, %s89
    %s90 = sphi 0, %s87
    %s91 = sphi 0, %s90
    %s107 = sphi 0, %s91
  $region4: #{forward.8} parent=0 // loop_header_branch
    %12 = sbr.rel (%p10) target = $region8
  $region5: #{forward.8} parent=0 // loop_body
    %s14 = ssub.s32 %s9, 1
    %s15 = ssub.s32 %s9, 2
    %s16 = sadd.s32 %s9, 1
    %s17 = ssub.s32 %s9, %s16
    %p18 = scmp.eq.s32.totalorder %s17, 0
    %s20 = sadd.s32 %s19, 1
    %s21 = scalar_select %p18, %s19, %s20
    %p24 = pneg %p18
    %p25 = scmp.eq.s32.totalorder %s9, 1
    %p26 = por %p24, %p25
    %p27 = scmp.ne.s32.totalorder %s19, %s22
    %p28 = scmp.eq.s32.totalorder %s9, 0
    %p29 = por %p27, %p28
    %p30 = scmp.ne.s32.totalorder %s19, %s22
    %p31 = scmp.eq.s32.totalorder %s14, 1
    %p32 = por %p30, %p31
    %p33 = scmp.ne.s32.totalorder %s22, %s23
    %p34 = scmp.eq.s32.totalorder %s14, 0
    %p35 = por %p33, %p34
    %p36 = scmp.ne.s32.totalorder %s22, %s23
    %p37 = scmp.eq.s32.totalorder %s15, 1
    %p38 = por %p36, %p37
    %p40 = scmp.ne.s32.totalorder %s23, %s39
    %p41 = scmp.eq.s32.totalorder %s15, 0
    %p42 = por %p40, %p41
    %s44 = sadd.s32 %s43, 1
    %p47 = scmp.eq.s32.totalorder %s9, 1
    %p48 = scmp.ne.s32.totalorder %s43, %s45
    %p49 = scmp.eq.s32.totalorder %s9, 0
    %p50 = por %p48, %p49
    %p51 = scmp.ne.s32.totalorder %s43, %s45
    %p52 = scmp.eq.s32.totalorder %s14, 1
    %p53 = por %p51, %p52
    %p54 = scmp.ne.s32.totalorder %s45, %s46
    %p55 = scmp.eq.s32.totalorder %s14, 0
    %p56 = por %p54, %p55
    %p57 = scmp.ne.s32.totalorder %s45, %s46
    %p58 = scmp.eq.s32.totalorder %s15, 1
    %p59 = por %p57, %p58
    %p61 = scmp.ne.s32.totalorder %s46, %s60
    %p62 = scmp.eq.s32.totalorder %s15, 0
    %p63 = por %p61, %p62
    %s65 = sadd.s32 %s64, 1
    %p68 = scmp.eq.s32.totalorder %s9, 1
    %p69 = scmp.ne.s32.totalorder %s64, %s66
    %p70 = scmp.eq.s32.totalorder %s9, 0
    %p71 = por %p69, %p70
    %p72 = scmp.ne.s32.totalorder %s64, %s66
    %p73 = scmp.eq.s32.totalorder %s14, 1
    %p74 = por %p72, %p73
    %p75 = scmp.ne.s32.totalorder %s66, %s67
    %p76 = scmp.eq.s32.totalorder %s14, 0
    %p77 = por %p75, %p76
    %p78 = scmp.ne.s32.totalorder %s66, %s67
    %p79 = scmp.eq.s32.totalorder %s15, 1
    %p80 = por %p78, %p79
    %p82 = scmp.ne.s32.totalorder %s67, %s81
    %p83 = scmp.eq.s32.totalorder %s15, 0
    %p84 = por %p82, %p83
    %s85 = ssub.s32 %s9, %s16
    %p86 = scmp.eq.s32.totalorder %s85, 0
    %s88 = sadd.s32 %s87, 1
    %s89 = scalar_select %p86, %s87, %s88
    %p92 = pneg %p86
    %p93 = scmp.eq.s32.totalorder %s9, 1
    %p94 = por %p92, %p93
    %p95 = scmp.ne.s32.totalorder %s87, %s90
    %p96 = scmp.eq.s32.totalorder %s9, 0
    %p97 = por %p95, %p96
    %p98 = scmp.ne.s32.totalorder %s87, %s90
    %p99 = scmp.eq.s32.totalorder %s14, 1
    %p100 = por %p98, %p99
    %p101 = scmp.ne.s32.totalorder %s90, %s91
    %p102 = scmp.eq.s32.totalorder %s14, 0
    %p103 = por %p101, %p102
    %p104 = scmp.ne.s32.totalorder %s90, %s91
    %p105 = scmp.eq.s32.totalorder %s15, 1
    %p106 = por %p104, %p105
    %p108 = scmp.ne.s32.totalorder %s91, %s107
    %p109 = scmp.eq.s32.totalorder %s15, 0
    %p110 = por %p108, %p109
    %p111 = scmp.le.s32.totalorder 1, %s9
    %p112 = scmp.lt.s32.totalorder %s9, 3
    %p113 = pnand %p111, %p112
    %p114 = pneg %p113
    // Predicated region
    $region9: #{forward.8} parent=5 // pred_check
      _
    $region10: #{forward.8} parent=5 // pred_check_branch
      %116 = sbr.rel (%p113) target = $region12
    $region11: #{forward.8} parent=5 // pred_region
      %s117 = ssub.s32 %s9, 1
      // Predicated region
      $region13: #{forward.8} parent=11 // pred_check
        %p118 = pneg %p56
      $region14: #{forward.8} parent=11 // pred_check_branch
        %120 = sbr.rel (%p118) target = $region16
      $region15: #{forward.8} parent=11 // pred_region
        _
      $region16: #{forward.8} parent=11 // pred_fallthru
        _
      // Predicated region
      $region17: #{forward.8} parent=11 // pred_check
        %p121 = pneg %p77
      $region18: #{forward.8} parent=11 // pred_check_branch
        %123 = sbr.rel (%p121) target = $region20
      $region19: #{forward.8} parent=11 // pred_region
        _
      $region20: #{forward.8} parent=11 // pred_fallthru
        _
    $region12: #{forward.8} parent=5 // pred_fallthru
      _
    %p124 = scmp.lt.s32.totalorder %s9, 2
    // Predicated region
    $region21: #{forward.8} parent=5 // pred_check
      %p125 = pneg %p124
    $region22: #{forward.8} parent=5 // pred_check_branch
      %127 = sbr.rel (%p125) target = $region24
    $region23: #{forward.8} parent=5 // pred_region
      // Predicated region
      $region25: #{forward.8} parent=23 // pred_check
        %p128 = pneg %p29
      $region26: #{forward.8} parent=23 // pred_check_branch
        %130 = sbr.rel (%p128) target = $region28
      $region27: #{forward.8} parent=23 // pred_region
        %p131 = scmp.lt.s32.totalorder %s9, 1
        %s132 = scalar_select %p131, %s9, 1
        %s133 = smul.addr %s132, 2
        %s134 = smul.addr %s133, 4
        %s135 = scalar_lea.vmem %s0, %s134
      $region28: #{forward.8} parent=23 // pred_fallthru
        _
    $region24: #{forward.8} parent=5 // pred_fallthru
      _
    %p136 = scmp.le.s32.totalorder 1, %s9
    %p137 = scmp.lt.s32.totalorder %s9, 3
    %p138 = pnand %p136, %p137
    %p139 = pneg %p138
    // Predicated region
    $region29: #{forward.8} parent=5 // pred_check
      _
    $region30: #{forward.8} parent=5 // pred_check_branch
      %141 = sbr.rel (%p138) target = $region32
    $region31: #{forward.8} parent=5 // pred_region
      %s142 = ssub.s32 %s9, 1
      %p143 = scmp.lt.s32.totalorder %s14, 1
      %s144 = scalar_select %p143, %s14, 1
      %s145 = smul.addr %s144, 2
      %s146 = smul.addr %s145, 4
      %s147 = scalar_lea.vmem %s0, %s146
      %p148 = pneg %p35
      %p149 = pneg %p32
      %p150 = pneg %p56
      %p151 = pneg %p53
      %p152 = pneg %p77
      %p153 = pneg %p74
      %p154 = pneg %p103
      %p155 = pneg %p100
      %p156 = scmp.lt.s32.totalorder %s14, 1
      %s157 = scalar_select %p156, %s14, 1
      %s158 = smul.addr %s157, 4
      %s159 = scalar_lea.vmem %s3, %s158
      %p160 = scmp.lt.s32.totalorder %s14, 1
      %s161 = scalar_select %p160, %s14, 1
      %s162 = smul.addr %s161, 2
      %s163 = smul.addr %s162, 4
      %s164 = scalar_lea.vmem %s0, %s163
      %p165 = scmp.lt.s32.totalorder %s14, 1
      %s166 = scalar_select %p165, %s14, 1
      %s167 = smul.addr %s166, 4
      %s168 = scalar_lea.vmem %s3, %s167
      %v169 = vld [vmem:[%s164] sm:$0xf]
      %v170 = vld [vmem:[%s1] sm:$0xf]
      %v171 = vld [vmem:[%s1 + $0x4] sm:$0xf]
      %v172 = vld [vmem:[%s1 + $0x8] sm:$0xf]
      %v173 = vld [vmem:[%s1 + $0xc] sm:$0xf]
      %v174 = vld [vmem:[%s1 + $0x10] sm:$0xf]
      %v175 = vld [vmem:[%s1 + $0x14] sm:$0xf]
      %v176 = vld [vmem:[%s1 + $0x18] sm:$0xf]
      %v177 = vld [vmem:[%s1 + $0x1c] sm:$0xf]
      %v178 = vld [vmem:[%s1 + $0x20] sm:$0xf]
      %v179 = vld [vmem:[%s1 + $0x24] sm:$0xf]
      %v180 = vld [vmem:[%s1 + $0x28] sm:$0xf]
      %v181 = vld [vmem:[%s1 + $0x2c] sm:$0xf]
      %v182 = vld [vmem:[%s1 + $0x30] sm:$0xf]
      %v183 = vld [vmem:[%s1 + $0x34] sm:$0xf]
      %v184 = vld [vmem:[%s1 + $0x38] sm:$0xf]
      %v185 = vld [vmem:[%s1 + $0x3c] sm:$0xf]
      %v186 = vld [vmem:[%s164 + $0x4] sm:$0x1]
      %s187 = scalar_lea.vmem %s1, 64
      %v188 = vld [vmem:[%s187] sm:$0xf]
      %v189 = vld [vmem:[%s187 + $0x4] sm:$0xf]
      %v190 = vld [vmem:[%s187 + $0x8] sm:$0xf]
      %v191 = vld [vmem:[%s187 + $0xc] sm:$0xf]
      %v192 = vld [vmem:[%s187 + $0x10] sm:$0xf]
      %v193 = vld [vmem:[%s187 + $0x14] sm:$0xf]
      %v194 = vld [vmem:[%s187 + $0x18] sm:$0xf]
      %v195 = vld [vmem:[%s187 + $0x1c] sm:$0xf]
      %v196 = vld [vmem:[%s187 + $0x20] sm:$0xf]
      %v197 = vld [vmem:[%s187 + $0x24] sm:$0xf]
      %v198 = vld [vmem:[%s187 + $0x28] sm:$0xf]
      %v199 = vld [vmem:[%s187 + $0x2c] sm:$0xf]
      %v200 = vld [vmem:[%s187 + $0x30] sm:$0xf]
      %v201 = vld [vmem:[%s187 + $0x34] sm:$0xf]
      %v202 = vld [vmem:[%s187 + $0x38] sm:$0xf]
      %v203 = vld [vmem:[%s187 + $0x3c] sm:$0xf]
      %v206 = vunpack.c.l.b16 %v169
      %v207 = vunpack.c.l.b16 %v186
      %v208 = vpack.c.b16 %v207, %v206
      %v210 = vshrl.u32 %v208, 16
      %v212 = vshll.u32 %v208, 16
      %v214 = vrot.slane %v212, 1
      %v215 = vor.u32 %v210, %v214
      %v233 = vunpack.c.l.b16 %v188
      %v234 = vunpack.c.l.b16 %v189
      %v235 = vunpack.c.l.b16 %v190
      %v236 = vunpack.c.l.b16 %v191
      %v237 = vunpack.c.l.b16 %v192
      %v238 = vunpack.c.l.b16 %v193
      %v239 = vunpack.c.l.b16 %v194
      %v240 = vunpack.c.l.b16 %v195
      %v241 = vunpack.c.l.b16 %v196
      %v242 = vunpack.c.l.b16 %v197
      %v243 = vunpack.c.l.b16 %v198
      %v244 = vunpack.c.l.b16 %v199
      %v245 = vunpack.c.l.b16 %v200
      %v246 = vunpack.c.l.b16 %v201
      %v247 = vunpack.c.l.b16 %v202
      %v248 = vunpack.c.l.b16 %v203
      %v249 = vpack.c.b16 %v234, %v233
      %v250 = vpack.c.b16 %v236, %v235
      %v251 = vpack.c.b16 %v238, %v237
      %v252 = vpack.c.b16 %v240, %v239
      %v253 = vpack.c.b16 %v242, %v241
      %v254 = vpack.c.b16 %v244, %v243
      %v255 = vpack.c.b16 %v246, %v245
      %v256 = vpack.c.b16 %v248, %v247
      %265 = vmatpush.bf16.msra.mxu0 %v256
      %266 = vmatpush.bf16.msra.mxu0 %v255
      %267 = vmatpush.bf16.msra.mxu0 %v254
      %268 = vmatpush.bf16.msra.mxu0 %v253
      %269 = vmatpush.bf16.msra.mxu0 %v252
      %270 = vmatpush.bf16.msra.mxu0 %v251
      %271 = vmatpush.bf16.msra.mxu0 %v250
      %272 = vmatpush.bf16.msra.mxu0 %v249
      %273 = vmatmul.bf16.gmra.mxu0 %v215
      %v274 = vpop.f32.mrf.mxu0
      %v275 = vadd.f32 0.0, %v274
      %v276 = vpop.f32.mrf.mxu0
      %277 = vdwg.mxu0
      %v294 = vunpack.c.l.b16 %v170
      %v295 = vunpack.c.l.b16 %v171
      %v296 = vunpack.c.l.b16 %v172
      %v297 = vunpack.c.l.b16 %v173
      %v298 = vunpack.c.l.b16 %v174
      %v299 = vunpack.c.l.b16 %v175
      %v300 = vunpack.c.l.b16 %v176
      %v301 = vunpack.c.l.b16 %v177
      %v302 = vunpack.c.l.b16 %v178
      %v303 = vunpack.c.l.b16 %v179
      %v304 = vunpack.c.l.b16 %v180
      %v305 = vunpack.c.l.b16 %v181
      %v306 = vunpack.c.l.b16 %v182
      %v307 = vunpack.c.l.b16 %v183
      %v308 = vunpack.c.l.b16 %v184
      %v309 = vunpack.c.l.b16 %v185
      %v310 = vpack.c.b16 %v295, %v294
      %v311 = vpack.c.b16 %v297, %v296
      %v312 = vpack.c.b16 %v299, %v298
      %v313 = vpack.c.b16 %v301, %v300
      %v314 = vpack.c.b16 %v303, %v302
      %v315 = vpack.c.b16 %v305, %v304
      %v316 = vpack.c.b16 %v307, %v306
      %v317 = vpack.c.b16 %v309, %v308
      %326 = vmatpush.bf16.msra.mxu0 %v317
      %327 = vmatpush.bf16.msra.mxu0 %v316
      %328 = vmatpush.bf16.msra.mxu0 %v315
      %329 = vmatpush.bf16.msra.mxu0 %v314
      %330 = vmatpush.bf16.msra.mxu0 %v313
      %331 = vmatpush.bf16.msra.mxu0 %v312
      %332 = vmatpush.bf16.msra.mxu0 %v311
      %333 = vmatpush.bf16.msra.mxu0 %v310
      %334 = vmatmul.bf16.gmra.mxu0 %v169
      %v335 = vpop.f32.mrf.mxu0
      %v336 = vadd.f32 %v275, %v335
      %v337 = vpop.f32.mrf.mxu0
      %338 = vdwg.mxu0
      %v339 = vld [vmem:[%s164] sm:$0xe]
      %s340 = scalar_lea.vmem %s1, 128
      %v341 = vld [vmem:[%s340] sm:$0xf]
      %v342 = vld [vmem:[%s340 + $0x4] sm:$0xf]
      %v343 = vld [vmem:[%s340 + $0x8] sm:$0xf]
      %v344 = vld [vmem:[%s340 + $0xc] sm:$0xf]
      %v345 = vld [vmem:[%s340 + $0x10] sm:$0xf]
      %v346 = vld [vmem:[%s340 + $0x14] sm:$0xf]
      %v347 = vld [vmem:[%s340 + $0x18] sm:$0xf]
      %v348 = vld [vmem:[%s340 + $0x1c] sm:$0xf]
      %v349 = vld [vmem:[%s340 + $0x20] sm:$0xf]
      %v350 = vld [vmem:[%s340 + $0x24] sm:$0xf]
      %v351 = vld [vmem:[%s340 + $0x28] sm:$0xf]
      %v352 = vld [vmem:[%s340 + $0x2c] sm:$0xf]
      %v353 = vld [vmem:[%s340 + $0x30] sm:$0xf]
      %v354 = vld [vmem:[%s340 + $0x34] sm:$0xf]
      %v355 = vld [vmem:[%s340 + $0x38] sm:$0xf]
      %v356 = vld [vmem:[%s340 + $0x3c] sm:$0xf]
      %v358 = vunpack.c.l.b16 %v339
      %v359 = vpack.c.b16 %v207, %v358
      %v360 = vrot.slane %v359, 1
      %v378 = vunpack.c.l.b16 %v341
      %v379 = vunpack.c.l.b16 %v342
      %v380 = vunpack.c.l.b16 %v343
      %v381 = vunpack.c.l.b16 %v344
      %v382 = vunpack.c.l.b16 %v345
      %v383 = vunpack.c.l.b16 %v346
      %v384 = vunpack.c.l.b16 %v347
      %v385 = vunpack.c.l.b16 %v348
      %v386 = vunpack.c.l.b16 %v349
      %v387 = vunpack.c.l.b16 %v350
      %v388 = vunpack.c.l.b16 %v351
      %v389 = vunpack.c.l.b16 %v352
      %v390 = vunpack.c.l.b16 %v353
      %v391 = vunpack.c.l.b16 %v354
      %v392 = vunpack.c.l.b16 %v355
      %v393 = vunpack.c.l.b16 %v356
      %v394 = vpack.c.b16 %v379, %v378
      %v395 = vpack.c.b16 %v381, %v380
      %v396 = vpack.c.b16 %v383, %v382
      %v397 = vpack.c.b16 %v385, %v384
      %v398 = vpack.c.b16 %v387, %v386
      %v399 = vpack.c.b16 %v389, %v388
      %v400 = vpack.c.b16 %v391, %v390
      %v401 = vpack.c.b16 %v393, %v392
      %410 = vmatpush.bf16.msra.mxu0 %v401
      %411 = vmatpush.bf16.msra.mxu0 %v400
      %412 = vmatpush.bf16.msra.mxu0 %v399
      %413 = vmatpush.bf16.msra.mxu0 %v398
      %414 = vmatpush.bf16.msra.mxu0 %v397
      %415 = vmatpush.bf16.msra.mxu0 %v396
      %416 = vmatpush.bf16.msra.mxu0 %v395
      %417 = vmatpush.bf16.msra.mxu0 %v394
      %418 = vmatmul.bf16.gmra.mxu0 %v360
      %v419 = vpop.f32.mrf.mxu0
      %v420 = vadd.f32 0.0, %v419
      %v421 = vpop.f32.mrf.mxu0
      %422 = vdwg.mxu0
      %v423 = vadd.f32 %v336, %v420
      %v424 = vld [vmem:[%s2] sm:$0x1]
      %v426 = vperm.slane %v424, 0
      %v428 = vadd.f32 %v423, %v426
      %v429 = vpack.c.bf16 %v428, %v428
      %430 = vst [vmem:[%s168] sm:$0xf] %v429
      %p431 = scmp.lt.s32.totalorder %s14, 1
      %s432 = scalar_select %p431, %s14, 1
      %s433 = smul.addr %s432, 4
      %s434 = scalar_lea.vmem %s3, %s433
      // Predicated region
      $region33: #{forward.8} parent=31 // pred_check
        %p435 = pneg %p100
      $region34: #{forward.8} parent=31 // pred_check_branch
        %437 = sbr.rel (%p435) target = $region36
      $region35: #{forward.8} parent=31 // pred_region
        _
      $region36: #{forward.8} parent=31 // pred_fallthru
        _
    $region32: #{forward.8} parent=5 // pred_fallthru
      _
    %p438 = scmp.le.s32.totalorder 2, %s9
    // Predicated region
    $region37: #{forward.8} parent=5 // pred_check
      %p439 = pneg %p438
    $region38: #{forward.8} parent=5 // pred_check_branch
      %441 = sbr.rel (%p439) target = $region40
    $region39: #{forward.8} parent=5 // pred_region
      %s442 = ssub.s32 %s9, 2
      // Predicated region
      $region41: #{forward.8} parent=39 // pred_check
        %p443 = pneg %p106
      $region42: #{forward.8} parent=39 // pred_check_branch
        %445 = sbr.rel (%p443) target = $region44
      $region43: #{forward.8} parent=39 // pred_region
        %p446 = scmp.lt.s32.totalorder %s15, 1
        %s447 = scalar_select %p446, %s15, 1
        %s448 = smul.addr %s447, 4
        %s449 = scalar_lea.vmem %s3, %s448
      $region44: #{forward.8} parent=39 // pred_fallthru
        _
    $region40: #{forward.8} parent=5 // pred_fallthru
      _
  $region6: #{forward.8} parent=0 // loop_footer
    %s13 = sadd.s32 1, %s9
  $region7: #{forward.8} parent=0 // loop_footer_branch
    %8 = sbr.rel target = $region3
  $region8: #{forward.8} parent=0 // loop_exit
    _

// kernel: forward.9
$region0: #{forward.9}
  #allocation0 [shape = 'u32[]', space=smem, size = 0x4, offset = 0x4, fixed_abs, tag = 'smem constant byte address 0x4 - core index']
  #allocation1 [shape = 'u32[72,128]{1,0:T(1,128)}', space=vmem, size = 0x9000, scoped, tag = 'internal scratch']
  %s0 = inlined_call_operand.vmem [shape: bf16[2,6,256], index: 0, kind: input, shape index: {}]
  %s1 = inlined_call_operand.hbm [shape: bf16[3,256,256], index: 1, kind: input, shape index: {}]
  %s2 = inlined_call_operand.vmem [shape: f32[1,256], index: 2, kind: input, shape index: {}]
  %s3 = inlined_call_operand.vmem [shape: bf16[2,4,256], index: 3, kind: output, shape index: {}]
  %s4 = sld [smem:[#allocation0]]
  $region49: #{forward.9} parent=0
    _
  %s6 = ssub.s32 1, %s4
  %s7 = scalar_select 0, %s6, %s4
  $region1: #{forward.9} parent=0
    #allocation2 [shape = 'u8[393216]{0}', space=vmem, size = 0x60000, scoped, tag = 'input window, operand 1, single buffered']
    #allocation3 [shape = 's32[2]{0}', space=sflag, size = 0x8, scoped, tag = 'scoped memory for forward.9']
    %8 = vsyncpa [#allocation3], 0
    loop: start=0, step=1, limit=4
    $region2: #{forward.9} parent=1 // loop_pre_header
      _
    $region3: #{forward.9} parent=1 // loop_header
      %s10 = sphi 0, %s14
      %p11 = scmp.ge.s32.totalorder %s10, 4
      %s20 = sphi 0, %s22
      %s23 = sphi 0, %s20
      %s24 = sphi 0, %s23
      %s40 = sphi 0, %s24
      %s44 = sphi 0, %s44
      %s46 = sphi 0, %s44
      %s47 = sphi 0, %s46
      %s61 = sphi 0, %s47
      %s65 = sphi 0, %s65
      %s67 = sphi 0, %s65
      %s68 = sphi 0, %s67
      %s82 = sphi 0, %s68
      %s88 = sphi 0, %s90
      %s91 = sphi 0, %s88
      %s92 = sphi 0, %s91
      %s108 = sphi 0, %s92
    $region4: #{forward.9} parent=1 // loop_header_branch
      %13 = sbr.rel (%p11) target = $region8
    $region5: #{forward.9} parent=1 // loop_body
      %s15 = ssub.s32 %s10, 1
      %s16 = ssub.s32 %s10, 2
      %s17 = sadd.s32 %s10, 1
      %s18 = ssub.s32 %s10, %s17
      %p19 = scmp.eq.s32.totalorder %s18, 0
      %s21 = sadd.s32 %s20, 1
      %s22 = scalar_select %p19, %s20, %s21
      %p25 = pneg %p19
      %p26 = scmp.eq.s32.totalorder %s10, 1
      %p27 = por %p25, %p26
      %p28 = scmp.ne.s32.totalorder %s20, %s23
      %p29 = scmp.eq.s32.totalorder %s10, 0
      %p30 = por %p28, %p29
      %p31 = scmp.ne.s32.totalorder %s20, %s23
      %p32 = scmp.eq.s32.totalorder %s15, 1
      %p33 = por %p31, %p32
      %p34 = scmp.ne.s32.totalorder %s23, %s24
      %p35 = scmp.eq.s32.totalorder %s15, 0
      %p36 = por %p34, %p35
      %p37 = scmp.ne.s32.totalorder %s23, %s24
      %p38 = scmp.eq.s32.totalorder %s16, 1
      %p39 = por %p37, %p38
      %p41 = scmp.ne.s32.totalorder %s24, %s40
      %p42 = scmp.eq.s32.totalorder %s16, 0
      %p43 = por %p41, %p42
      %s45 = sadd.s32 %s44, 1
      %p48 = scmp.eq.s32.totalorder %s10, 1
      %p49 = scmp.ne.s32.totalorder %s44, %s46
      %p50 = scmp.eq.s32.totalorder %s10, 0
      %p51 = por %p49, %p50
      %p52 = scmp.ne.s32.totalorder %s44, %s46
      %p53 = scmp.eq.s32.totalorder %s15, 1
      %p54 = por %p52, %p53
      %p55 = scmp.ne.s32.totalorder %s46, %s47
      %p56 = scmp.eq.s32.totalorder %s15, 0
      %p57 = por %p55, %p56
      %p58 = scmp.ne.s32.totalorder %s46, %s47
      %p59 = scmp.eq.s32.totalorder %s16, 1
      %p60 = por %p58, %p59
      %p62 = scmp.ne.s32.totalorder %s47, %s61
      %p63 = scmp.eq.s32.totalorder %s16, 0
      %p64 = por %p62, %p63
      %s66 = sadd.s32 %s65, 1
      %p69 = scmp.eq.s32.totalorder %s10, 1
      %p70 = scmp.ne.s32.totalorder %s65, %s67
      %p71 = scmp.eq.s32.totalorder %s10, 0
      %p72 = por %p70, %p71
      %p73 = scmp.ne.s32.totalorder %s65, %s67
      %p74 = scmp.eq.s32.totalorder %s15, 1
      %p75 = por %p73, %p74
      %p76 = scmp.ne.s32.totalorder %s67, %s68
      %p77 = scmp.eq.s32.totalorder %s15, 0
      %p78 = por %p76, %p77
      %p79 = scmp.ne.s32.totalorder %s67, %s68
      %p80 = scmp.eq.s32.totalorder %s16, 1
      %p81 = por %p79, %p80
      %p83 = scmp.ne.s32.totalorder %s68, %s82
      %p84 = scmp.eq.s32.totalorder %s16, 0
      %p85 = por %p83, %p84
      %s86 = ssub.s32 %s10, %s17
      %p87 = scmp.eq.s32.totalorder %s86, 0
      %s89 = sadd.s32 %s88, 1
      %s90 = scalar_select %p87, %s88, %s89
      %p93 = pneg %p87
      %p94 = scmp.eq.s32.totalorder %s10, 1
      %p95 = por %p93, %p94
      %p96 = scmp.ne.s32.totalorder %s88, %s91
      %p97 = scmp.eq.s32.totalorder %s10, 0
      %p98 = por %p96, %p97
      %p99 = scmp.ne.s32.totalorder %s88, %s91
      %p100 = scmp.eq.s32.totalorder %s15, 1
      %p101 = por %p99, %p100
      %p102 = scmp.ne.s32.totalorder %s91, %s92
      %p103 = scmp.eq.s32.totalorder %s15, 0
      %p104 = por %p102, %p103
      %p105 = scmp.ne.s32.totalorder %s91, %s92
      %p106 = scmp.eq.s32.totalorder %s16, 1
      %p107 = por %p105, %p106
      %p109 = scmp.ne.s32.totalorder %s92, %s108
      %p110 = scmp.eq.s32.totalorder %s16, 0
      %p111 = por %p109, %p110
      %p112 = scmp.le.s32.totalorder 1, %s10
      %p113 = scmp.lt.s32.totalorder %s10, 3
      %p114 = pnand %p112, %p113
      %p115 = pneg %p114
      // Predicated region
      $region9: #{forward.9} parent=5 // pred_check
        _
      $region10: #{forward.9} parent=5 // pred_check_branch
        %117 = sbr.rel (%p114) target = $region12
      $region11: #{forward.9} parent=5 // pred_region
        %s118 = ssub.s32 %s10, 1
        // Predicated region
        $region13: #{forward.9} parent=11 // pred_check
          %p119 = pneg %p57
        $region14: #{forward.9} parent=11 // pred_check_branch
          %121 = sbr.rel (%p119) target = $region16
        $region15: #{forward.9} parent=11 // pred_region
          %123 = vsyncadd [#allocation3], 0
          %s124 = sshll.u32 %s1, 4
          %s125 = int_to_ptr.hbm [resolvable:$true] %s124
          %s126 = sshll.u32 [#allocation2], 4
          %s127 = int_to_ptr.vmem [resolvable:$true] %s126
          %132 = dma.hbm_to_vmem [thread:$0]  %s125, 12288, %s127, [#allocation3], 128, 128, 8
        $region16: #{forward.9} parent=11 // pred_fallthru
          _
        // Predicated region
        $region17: #{forward.9} parent=11 // pred_check
          %p133 = pneg %p78
        $region18: #{forward.9} parent=11 // pred_check_branch
          %135 = sbr.rel (%p133) target = $region20
        $region19: #{forward.9} parent=11 // pred_region
          _
        $region20: #{forward.9} parent=11 // pred_fallthru
          _
      $region12: #{forward.9} parent=5 // pred_fallthru
        _
      %p136 = scmp.lt.s32.totalorder %s10, 2
      // Predicated region
      $region21: #{forward.9} parent=5 // pred_check
        %p137 = pneg %p136
      $region22: #{forward.9} parent=5 // pred_check_branch
        %139 = sbr.rel (%p137) target = $region24
      $region23: #{forward.9} parent=5 // pred_region
        // Predicated region
        $region25: #{forward.9} parent=23 // pred_check
          %p140 = pneg %p30
        $region26: #{forward.9} parent=23 // pred_check_branch
          %142 = sbr.rel (%p140) target = $region28
        $region27: #{forward.9} parent=23 // pred_region
          %p143 = scmp.lt.s32.totalorder %s10, 1
          %s144 = scalar_select %p143, %s10, 1
          %s145 = smul.addr %s144, 2
          %s146 = smul.addr %s145, 4
          %s147 = scalar_lea.vmem %s0, %s146
        $region28: #{forward.9} parent=23 // pred_fallthru
          _
      $region24: #{forward.9} parent=5 // pred_fallthru
        _
      %p148 = scmp.le.s32.totalorder 1, %s10
      %p149 = scmp.lt.s32.totalorder %s10, 3
      %p150 = pnand %p148, %p149
      %p151 = pneg %p150
      // Predicated region
      $region29: #{forward.9} parent=5 // pred_check
        _
      $region30: #{forward.9} parent=5 // pred_check_branch
        %153 = sbr.rel (%p150) target = $region32
      $region31: #{forward.9} parent=5 // pred_region
        %s154 = ssub.s32 %s10, 1
        // Predicated region
        $region33: #{forward.9} parent=31 // pred_check
          %p155 = pneg %p57
        $region34: #{forward.9} parent=31 // pred_check_branch
          %157 = sbr.rel (%p155) target = $region36
        $region35: #{forward.9} parent=31 // pred_region
          %159 = dma.done [#allocation3], 12288
        $region36: #{forward.9} parent=31 // pred_fallthru
          _
        %p160 = scmp.lt.s32.totalorder %s15, 1
        %s161 = scalar_select %p160, %s15, 1
        %s162 = smul.addr %s161, 2
        %s163 = smul.addr %s162, 4
        %s164 = scalar_lea.vmem %s0, %s163
        %p165 = pneg %p36
        %p166 = pneg %p33
        %p167 = pneg %p57
        %p168 = pneg %p54
        %p169 = pneg %p78
        %p170 = pneg %p75
        %p171 = pneg %p104
        %p172 = pneg %p101
        %p173 = scmp.lt.s32.totalorder %s15, 1
        %s174 = scalar_select %p173, %s15, 1
        %s175 = smul.addr %s174, 2
        %s176 = smul.addr %s175, 2
        %s177 = scalar_lea.vmem %s3, %s176
        %p178 = scmp.lt.s32.totalorder %s15, 1
        %s179 = scalar_select %p178, %s15, 1
        %s180 = smul.addr %s179, 2
        %s181 = smul.addr %s180, 4
        %s182 = scalar_lea.vmem %s0, %s181
        %p183 = scmp.lt.s32.totalorder %s15, 1
        %s184 = scalar_select %p183, %s15, 1
        %s185 = smul.addr %s184, 2
        %s186 = smul.addr %s185, 2
        %s187 = scalar_lea.vmem %s3, %s186
        %v188 = vld [vmem:[%s182] sm:$0x33]
        %v189 = vld [vmem:[#allocation2] sm:$0xff]
        %v190 = vld [vmem:[#allocation2 + $0x8] sm:$0xff]
        %v191 = vld [vmem:[#allocation2 + $0x10] sm:$0xff]
        %v192 = vld [vmem:[#allocation2 + $0x18] sm:$0xff]
        %v193 = vld [vmem:[#allocation2 + $0x20] sm:$0xff]
        %v194 = vld [vmem:[#allocation2 + $0x28] sm:$0xff]
        %v195 = vld [vmem:[#allocation2 + $0x30] sm:$0xff]
        %v196 = vld [vmem:[#allocation2 + $0x38] sm:$0xff]
        %v197 = vld [vmem:[#allocation2 + $0x40] sm:$0xff]
        %v198 = vld [vmem:[#allocation2 + $0x48] sm:$0xff]
        %v199 = vld [vmem:[#allocation2 + $0x50] sm:$0xff]
        %v200 = vld [vmem:[#allocation2 + $0x58] sm:$0xff]
        %v201 = vld [vmem:[#allocation2 + $0x60] sm:$0xff]
        %v202 = vld [vmem:[#allocation2 + $0x68] sm:$0xff]
        %v203 = vld [vmem:[#allocation2 + $0x70] sm:$0xff]
        %v204 = vld [vmem:[#allocation2 + $0x78] sm:$0xff]
        %v205 = vld [vmem:[#allocation2 + $0x80] sm:$0xff]
        %v206 = vld [vmem:[#allocation2 + $0x88] sm:$0xff]
        %v207 = vld [vmem:[#allocation2 + $0x90] sm:$0xff]
        %v208 = vld [vmem:[#allocation2 + $0x98] sm:$0xff]
        %v209 = vld [vmem:[#allocation2 + $0xa0] sm:$0xff]
        %v210 = vld [vmem:[#allocation2 + $0xa8] sm:$0xff]
        %v211 = vld [vmem:[#allocation2 + $0xb0] sm:$0xff]
        %v212 = vld [vmem:[#allocation2 + $0xb8] sm:$0xff]
        %v213 = vld [vmem:[#allocation2 + $0xc0] sm:$0xff]
        %v214 = vld [vmem:[#allocation2 + $0xc8] sm:$0xff]
        %v215 = vld [vmem:[#allocation2 + $0xd0] sm:$0xff]
        %v216 = vld [vmem:[#allocation2 + $0xd8] sm:$0xff]
        %v217 = vld [vmem:[#allocation2 + $0xe0] sm:$0xff]
        %v218 = vld [vmem:[#allocation2 + $0xe8] sm:$0xff]
        %v219 = vld [vmem:[#allocation2 + $0xf0] sm:$0xff]
        %v220 = vld [vmem:[#allocation2 + $0xf8] sm:$0xff]
        %v221 = vld [vmem:[%s182] sm:$0x77]
        %s222 = scalar_lea.vmem [#allocation2], 256
        %v223 = vld [vmem:[%s222] sm:$0xff]
        %v224 = vld [vmem:[%s222 + $0x8] sm:$0xff]
        %v225 = vld [vmem:[%s222 + $0x10] sm:$0xff]
        %v226 = vld [vmem:[%s222 + $0x18] sm:$0xff]
        %v227 = vld [vmem:[%s222 + $0x20] sm:$0xff]
        %v228 = vld [vmem:[%s222 + $0x28] sm:$0xff]
        %v229 = vld [vmem:[%s222 + $0x30] sm:$0xff]
        %v230 = vld [vmem:[%s222 + $0x38] sm:$0xff]
        %v231 = vld [vmem:[%s222 + $0x40] sm:$0xff]
        %v232 = vld [vmem:[%s222 + $0x48] sm:$0xff]
        %v233 = vld [vmem:[%s222 + $0x50] sm:$0xff]
        %v234 = vld [vmem:[%s222 + $0x58] sm:$0xff]
        %v235 = vld [vmem:[%s222 + $0x60] sm:$0xff]
        %v236 = vld [vmem:[%s222 + $0x68] sm:$0xff]
        %v237 = vld [vmem:[%s222 + $0x70] sm:$0xff]
        %v238 = vld [vmem:[%s222 + $0x78] sm:$0xff]
        %v239 = vld [vmem:[%s222 + $0x80] sm:$0xff]
        %v240 = vld [vmem:[%s222 + $0x88] sm:$0xff]
        %v241 = vld [vmem:[%s222 + $0x90] sm:$0xff]
        %v242 = vld [vmem:[%s222 + $0x98] sm:$0xff]
        %v243 = vld [vmem:[%s222 + $0xa0] sm:$0xff]
        %v244 = vld [vmem:[%s222 + $0xa8] sm:$0xff]
        %v245 = vld [vmem:[%s222 + $0xb0] sm:$0xff]
        %v246 = vld [vmem:[%s222 + $0xb8] sm:$0xff]
        %v247 = vld [vmem:[%s222 + $0xc0] sm:$0xff]
        %v248 = vld [vmem:[%s222 + $0xc8] sm:$0xff]
        %v249 = vld [vmem:[%s222 + $0xd0] sm:$0xff]
        %v250 = vld [vmem:[%s222 + $0xd8] sm:$0xff]
        %v251 = vld [vmem:[%s222 + $0xe0] sm:$0xff]
        %v252 = vld [vmem:[%s222 + $0xe8] sm:$0xff]
        %v253 = vld [vmem:[%s222 + $0xf0] sm:$0xff]
        %v254 = vld [vmem:[%s222 + $0xf8] sm:$0xff]
        %v256 = vunpack.c.l.b16 %v221
        %v257 = vunpack.c.h.b16 %v221
        %v258 = vpack.c.b16 %v256, %v256
        %v259 = vpack.c.b16 %v257, %v257
        %v261 = vshrl.u32 %v258, 16
        %v263 = vshll.u32 %v258, 16
        %v265 = vrot.slane %v263, 1
        %v266 = vor.u32 %v261, %v265
        %v268 = vshrl.u32 %v259, 16
        %v270 = vshll.u32 %v259, 16
        %v272 = vrot.slane %v270, 1
        %v273 = vor.u32 %v268, %v272
        %v308 = vunpack.c.l.b16 %v223
        %v309 = vunpack.c.h.b16 %v223
        %v310 = vunpack.c.l.b16 %v224
        %v311 = vunpack.c.h.b16 %v224
        %v312 = vunpack.c.l.b16 %v225
        %v313 = vunpack.c.h.b16 %v225
        %v314 = vunpack.c.l.b16 %v226
        %v315 = vunpack.c.h.b16 %v226
        %v316 = vunpack.c.l.b16 %v227
        %v317 = vunpack.c.h.b16 %v227
        %v318 = vunpack.c.l.b16 %v228
        %v319 = vunpack.c.h.b16 %v228
        %v320 = vunpack.c.l.b16 %v229
        %v321 = vunpack.c.h.b16 %v229
        %v322 = vunpack.c.l.b16 %v230
        %v323 = vunpack.c.h.b16 %v230
        %v324 = vunpack.c.l.b16 %v231
        %v325 = vunpack.c.h.b16 %v231
        %v326 = vunpack.c.l.b16 %v232
        %v327 = vunpack.c.h.b16 %v232
        %v328 = vunpack.c.l.b16 %v233
        %v329 = vunpack.c.h.b16 %v233
        %v330 = vunpack.c.l.b16 %v234
        %v331 = vunpack.c.h.b16 %v234
        %v332 = vunpack.c.l.b16 %v235
        %v333 = vunpack.c.h.b16 %v235
        %v334 = vunpack.c.l.b16 %v236
        %v335 = vunpack.c.h.b16 %v236
        %v336 = vunpack.c.l.b16 %v237
        %v337 = vunpack.c.h.b16 %v237
        %v338 = vunpack.c.l.b16 %v238
        %v339 = vunpack.c.h.b16 %v238
        %v340 = vunpack.c.l.b16 %v239
        %v341 = vunpack.c.h.b16 %v239
        %v342 = vunpack.c.l.b16 %v240
        %v343 = vunpack.c.h.b16 %v240
        %v344 = vunpack.c.l.b16 %v241
        %v345 = vunpack.c.h.b16 %v241
        %v346 = vunpack.c.l.b16 %v242
        %v347 = vunpack.c.h.b16 %v242
        %v348 = vunpack.c.l.b16 %v243
        %v349 = vunpack.c.h.b16 %v243
        %v350 = vunpack.c.l.b16 %v244
        %v351 = vunpack.c.h.b16 %v244
        %v352 = vunpack.c.l.b16 %v245
        %v353 = vunpack.c.h.b16 %v245
        %v354 = vunpack.c.l.b16 %v246
        %v355 = vunpack.c.h.b16 %v246
        %v356 = vunpack.c.l.b16 %v247
        %v357 = vunpack.c.h.b16 %v247
        %v358 = vunpack.c.l.b16 %v248
        %v359 = vunpack.c.h.b16 %v248
        %v360 = vunpack.c.l.b16 %v249
        %v361 = vunpack.c.h.b16 %v249
        %v362 = vunpack.c.l.b16 %v250
        %v363 = vunpack.c.h.b16 %v250
        %v364 = vunpack.c.l.b16 %v251
        %v365 = vunpack.c.h.b16 %v251
        %v366 = vunpack.c.l.b16 %v252
        %v367 = vunpack.c.h.b16 %v252
        %v368 = vunpack.c.l.b16 %v253
        %v369 = vunpack.c.h.b16 %v253
        %v370 = vunpack.c.l.b16 %v254
        %v371 = vunpack.c.h.b16 %v254
        %v372 = vpack.c.b16 %v310, %v308
        %v373 = vpack.c.b16 %v311, %v309
        %v374 = vpack.c.b16 %v314, %v312
        %v375 = vpack.c.b16 %v315, %v313
        %v376 = vpack.c.b16 %v318, %v316
        %v377 = vpack.c.b16 %v319, %v317
        %v378 = vpack.c.b16 %v322, %v320
        %v379 = vpack.c.b16 %v323, %v321
        %v380 = vpack.c.b16 %v326, %v324
        %v381 = vpack.c.b16 %v327, %v325
        %v382 = vpack.c.b16 %v330, %v328
        %v383 = vpack.c.b16 %v331, %v329
        %v384 = vpack.c.b16 %v334, %v332
        %v385 = vpack.c.b16 %v335, %v333
        %v386 = vpack.c.b16 %v338, %v336
        %v387 = vpack.c.b16 %v339, %v337
        %v388 = vpack.c.b16 %v342, %v340
        %v389 = vpack.c.b16 %v343, %v341
        %v390 = vpack.c.b16 %v346, %v344
        %v391 = vpack.c.b16 %v347, %v345
        %v392 = vpack.c.b16 %v350, %v348
        %v393 = vpack.c.b16 %v351, %v349
        %v394 = vpack.c.b16 %v354, %v352
        %v395 = vpack.c.b16 %v355, %v353
        %v396 = vpack.c.b16 %v358, %v356
        %v397 = vpack.c.b16 %v359, %v357
        %v398 = vpack.c.b16 %v362, %v360
        %v399 = vpack.c.b16 %v363, %v361
        %v400 = vpack.c.b16 %v366, %v364
        %v401 = vpack.c.b16 %v367, %v365
        %v402 = vpack.c.b16 %v370, %v368
        %v403 = vpack.c.b16 %v371, %v369
        %436 = vmatpush.bf16.msra.mxu0 %v386
        %437 = vmatpush.bf16.msra.mxu0 %v384
        %438 = vmatpush.bf16.msra.mxu0 %v382
        %439 = vmatpush.bf16.msra.mxu0 %v380
        %440 = vmatpush.bf16.msra.mxu0 %v378
        %441 = vmatpush.bf16.msra.mxu0 %v376
        %442 = vmatpush.bf16.msra.mxu0 %v374
        %443 = vmatpush.bf16.msra.mxu0 %v372
        %444 = vmatmul.bf16.gmra.mxu0 %v266
        %v445 = vpop.f32.mrf.mxu0
        %v446 = vadd.f32 0.0, %v445
        %v447 = vpop.f32.mrf.mxu0
        %448 = vdwg.mxu0
        %449 = vmatpush.bf16.msra.mxu0 %v402
        %450 = vmatpush.bf16.msra.mxu0 %v400
        %451 = vmatpush.bf16.msra.mxu0 %v398
        %452 = vmatpush.bf16.msra.mxu0 %v396
        %453 = vmatpush.bf16.msra.mxu0 %v394
        %454 = vmatpush.bf16.msra.mxu0 %v392
        %455 = vmatpush.bf16.msra.mxu0 %v390
        %456 = vmatpush.bf16.msra.mxu0 %v388
        %457 = vmatmul.bf16.gmra.mxu0 %v273
        %v458 = vpop.f32.mrf.mxu0
        %v459 = vadd.f32 %v446, %v458
        %v460 = vpop.f32.mrf.mxu0
        %461 = vdwg.mxu0
        %462 = vmatpush.bf16.msra.mxu0 %v387
        %463 = vmatpush.bf16.msra.mxu0 %v385
        %464 = vmatpush.bf16.msra.mxu0 %v383
        %465 = vmatpush.bf16.msra.mxu0 %v381
        %466 = vmatpush.bf16.msra.mxu0 %v379
        %467 = vmatpush.bf16.msra.mxu0 %v377
        %468 = vmatpush.bf16.msra.mxu0 %v375
        %469 = vmatpush.bf16.msra.mxu0 %v373
        %470 = vmatmul.bf16.gmra.mxu0 %v266
        %v471 = vpop.f32.mrf.mxu0
        %v472 = vadd.f32 0.0, %v471
        %v473 = vpop.f32.mrf.mxu0
        %474 = vdwg.mxu0
        %475 = vmatpush.bf16.msra.mxu0 %v403
        %476 = vmatpush.bf16.msra.mxu0 %v401
        %477 = vmatpush.bf16.msra.mxu0 %v399
        %478 = vmatpush.bf16.msra.mxu0 %v397
        %479 = vmatpush.bf16.msra.mxu0 %v395
        %480 = vmatpush.bf16.msra.mxu0 %v393
        %481 = vmatpush.bf16.msra.mxu0 %v391
        %482 = vmatpush.bf16.msra.mxu0 %v389
        %483 = vmatmul.bf16.gmra.mxu0 %v273
        %v484 = vpop.f32.mrf.mxu0
        %v485 = vadd.f32 %v472, %v484
        %v486 = vpop.f32.mrf.mxu0
        %487 = vdwg.mxu0
        %v489 = vunpack.c.l.b16 %v188
        %v490 = vunpack.c.h.b16 %v188
        %v491 = vpack.c.b16 %v489, %v489
        %v492 = vpack.c.b16 %v490, %v490
        %v527 = vunpack.c.l.b16 %v189
        %v528 = vunpack.c.h.b16 %v189
        %v529 = vunpack.c.l.b16 %v190
        %v530 = vunpack.c.h.b16 %v190
        %v531 = vunpack.c.l.b16 %v191
        %v532 = vunpack.c.h.b16 %v191
        %v533 = vunpack.c.l.b16 %v192
        %v534 = vunpack.c.h.b16 %v192
        %v535 = vunpack.c.l.b16 %v193
        %v536 = vunpack.c.h.b16 %v193
        %v537 = vunpack.c.l.b16 %v194
        %v538 = vunpack.c.h.b16 %v194
        %v539 = vunpack.c.l.b16 %v195
        %v540 = vunpack.c.h.b16 %v195
        %v541 = vunpack.c.l.b16 %v196
        %v542 = vunpack.c.h.b16 %v196
        %v543 = vunpack.c.l.b16 %v197
        %v544 = vunpack.c.h.b16 %v197
        %v545 = vunpack.c.l.b16 %v198
        %v546 = vunpack.c.h.b16 %v198
        %v547 = vunpack.c.l.b16 %v199
        %v548 = vunpack.c.h.b16 %v199
        %v549 = vunpack.c.l.b16 %v200
        %v550 = vunpack.c.h.b16 %v200
        %v551 = vunpack.c.l.b16 %v201
        %v552 = vunpack.c.h.b16 %v201
        %v553 = vunpack.c.l.b16 %v202
        %v554 = vunpack.c.h.b16 %v202
        %v555 = vunpack.c.l.b16 %v203
        %v556 = vunpack.c.h.b16 %v203
        %v557 = vunpack.c.l.b16 %v204
        %v558 = vunpack.c.h.b16 %v204
        %v559 = vunpack.c.l.b16 %v205
        %v560 = vunpack.c.h.b16 %v205
        %v561 = vunpack.c.l.b16 %v206
        %v562 = vunpack.c.h.b16 %v206
        %v563 = vunpack.c.l.b16 %v207
        %v564 = vunpack.c.h.b16 %v207
        %v565 = vunpack.c.l.b16 %v208
        %v566 = vunpack.c.h.b16 %v208
        %v567 = vunpack.c.l.b16 %v209
        %v568 = vunpack.c.h.b16 %v209
        %v569 = vunpack.c.l.b16 %v210
        %v570 = vunpack.c.h.b16 %v210
        %v571 = vunpack.c.l.b16 %v211
        %v572 = vunpack.c.h.b16 %v211
        %v573 = vunpack.c.l.b16 %v212
        %v574 = vunpack.c.h.b16 %v212
        %v575 = vunpack.c.l.b16 %v213
        %v576 = vunpack.c.h.b16 %v213
        %v577 = vunpack.c.l.b16 %v214
        %v578 = vunpack.c.h.b16 %v214
        %v579 = vunpack.c.l.b16 %v215
        %v580 = vunpack.c.h.b16 %v215
        %v581 = vunpack.c.l.b16 %v216
        %v582 = vunpack.c.h.b16 %v216
        %v583 = vunpack.c.l.b16 %v217
        %v584 = vunpack.c.h.b16 %v217
        %v585 = vunpack.c.l.b16 %v218
        %v586 = vunpack.c.h.b16 %v218
        %v587 = vunpack.c.l.b16 %v219
        %v588 = vunpack.c.h.b16 %v219
        %v589 = vunpack.c.l.b16 %v220
        %v590 = vunpack.c.h.b16 %v220
        %v591 = vpack.c.b16 %v529, %v527
        %v592 = vpack.c.b16 %v530, %v528
        %v593 = vpack.c.b16 %v533, %v531
        %v594 = vpack.c.b16 %v534, %v532
        %v595 = vpack.c.b16 %v537, %v535
        %v596 = vpack.c.b16 %v538, %v536
        %v597 = vpack.c.b16 %v541, %v539
        %v598 = vpack.c.b16 %v542, %v540
        %v599 = vpack.c.b16 %v545, %v543
        %v600 = vpack.c.b16 %v546, %v544
        %v601 = vpack.c.b16 %v549, %v547
        %v602 = vpack.c.b16 %v550, %v548
        %v603 = vpack.c.b16 %v553, %v551
        %v604 = vpack.c.b16 %v554, %v552
        %v605 = vpack.c.b16 %v557, %v555
        %v606 = vpack.c.b16 %v558, %v556
        %v607 = vpack.c.b16 %v561, %v559
        %v608 = vpack.c.b16 %v562, %v560
        %v609 = vpack.c.b16 %v565, %v563
        %v610 = vpack.c.b16 %v566, %v564
        %v611 = vpack.c.b16 %v569, %v567
        %v612 = vpack.c.b16 %v570, %v568
        %v613 = vpack.c.b16 %v573, %v571
        %v614 = vpack.c.b16 %v574, %v572
        %v615 = vpack.c.b16 %v577, %v575
        %v616 = vpack.c.b16 %v578, %v576
        %v617 = vpack.c.b16 %v581, %v579
        %v618 = vpack.c.b16 %v582, %v580
        %v619 = vpack.c.b16 %v585, %v583
        %v620 = vpack.c.b16 %v586, %v584
        %v621 = vpack.c.b16 %v589, %v587
        %v622 = vpack.c.b16 %v590, %v588
        %655 = vmatpush.bf16.msra.mxu0 %v605
        %656 = vmatpush.bf16.msra.mxu0 %v603
        %657 = vmatpush.bf16.msra.mxu0 %v601
        %658 = vmatpush.bf16.msra.mxu0 %v599
        %659 = vmatpush.bf16.msra.mxu0 %v597
        %660 = vmatpush.bf16.msra.mxu0 %v595
        %661 = vmatpush.bf16.msra.mxu0 %v593
        %662 = vmatpush.bf16.msra.mxu0 %v591
        %663 = vmatmul.bf16.gmra.mxu0 %v491
        %v664 = vpop.f32.mrf.mxu0
        %v665 = vadd.f32 %v459, %v664
        %v666 = vpop.f32.mrf.mxu0
        %667 = vdwg.mxu0
        %668 = vmatpush.bf16.msra.mxu0 %v621
        %669 = vmatpush.bf16.msra.mxu0 %v619
        %670 = vmatpush.bf16.msra.mxu0 %v617
        %671 = vmatpush.bf16.msra.mxu0 %v615
        %672 = vmatpush.bf16.msra.mxu0 %v613
        %673 = vmatpush.bf16.msra.mxu0 %v611
        %674 = vmatpush.bf16.msra.mxu0 %v609
        %675 = vmatpush.bf16.msra.mxu0 %v607
        %676 = vmatmul.bf16.gmra.mxu0 %v492
        %v677 = vpop.f32.mrf.mxu0
        %v678 = vadd.f32 %v665, %v677
        %v679 = vpop.f32.mrf.mxu0
        %680 = vdwg.mxu0
        %681 = vmatpush.bf16.msra.mxu0 %v606
        %682 = vmatpush.bf16.msra.mxu0 %v604
        %683 = vmatpush.bf16.msra.mxu0 %v602
        %684 = vmatpush.bf16.msra.mxu0 %v600
        %685 = vmatpush.bf16.msra.mxu0 %v598
        %686 = vmatpush.bf16.msra.mxu0 %v596
        %687 = vmatpush.bf16.msra.mxu0 %v594
        %688 = vmatpush.bf16.msra.mxu0 %v592
        %689 = vmatmul.bf16.gmra.mxu0 %v491
        %v690 = vpop.f32.mrf.mxu0
        %v691 = vadd.f32 %v485, %v690
        %v692 = vpop.f32.mrf.mxu0
        %693 = vdwg.mxu0
        %694 = vmatpush.bf16.msra.mxu0 %v622
        %695 = vmatpush.bf16.msra.mxu0 %v620
        %696 = vmatpush.bf16.msra.mxu0 %v618
        %697 = vmatpush.bf16.msra.mxu0 %v616
        %698 = vmatpush.bf16.msra.mxu0 %v614
        %699 = vmatpush.bf16.msra.mxu0 %v612
        %700 = vmatpush.bf16.msra.mxu0 %v610
        %701 = vmatpush.bf16.msra.mxu0 %v608
        %702 = vmatmul.bf16.gmra.mxu0 %v492
        %v703 = vpop.f32.mrf.mxu0
        %v704 = vadd.f32 %v691, %v703
        %v705 = vpop.f32.mrf.mxu0
        %706 = vdwg.mxu0
        %v707 = vld [vmem:[%s182] sm:$0x66]
        %s708 = scalar_lea.vmem [#allocation2], 512
        %v709 = vld [vmem:[%s708] sm:$0xff]
        %v710 = vld [vmem:[%s708 + $0x8] sm:$0xff]
        %v711 = vld [vmem:[%s708 + $0x10] sm:$0xff]
        %v712 = vld [vmem:[%s708 + $0x18] sm:$0xff]
        %v713 = vld [vmem:[%s708 + $0x20] sm:$0xff]
        %v714 = vld [vmem:[%s708 + $0x28] sm:$0xff]
        %v715 = vld [vmem:[%s708 + $0x30] sm:$0xff]
        %v716 = vld [vmem:[%s708 + $0x38] sm:$0xff]
        %v717 = vld [vmem:[%s708 + $0x40] sm:$0xff]
        %v718 = vld [vmem:[%s708 + $0x48] sm:$0xff]
        %v719 = vld [vmem:[%s708 + $0x50] sm:$0xff]
        %v720 = vld [vmem:[%s708 + $0x58] sm:$0xff]
        %v721 = vld [vmem:[%s708 + $0x60] sm:$0xff]
        %v722 = vld [vmem:[%s708 + $0x68] sm:$0xff]
        %v723 = vld [vmem:[%s708 + $0x70] sm:$0xff]
        %v724 = vld [vmem:[%s708 + $0x78] sm:$0xff]
        %v725 = vld [vmem:[%s708 + $0x80] sm:$0xff]
        %v726 = vld [vmem:[%s708 + $0x88] sm:$0xff]
        %v727 = vld [vmem:[%s708 + $0x90] sm:$0xff]
        %v728 = vld [vmem:[%s708 + $0x98] sm:$0xff]
        %v729 = vld [vmem:[%s708 + $0xa0] sm:$0xff]
        %v730 = vld [vmem:[%s708 + $0xa8] sm:$0xff]
        %v731 = vld [vmem:[%s708 + $0xb0] sm:$0xff]
        %v732 = vld [vmem:[%s708 + $0xb8] sm:$0xff]
        %v733 = vld [vmem:[%s708 + $0xc0] sm:$0xff]
        %v734 = vld [vmem:[%s708 + $0xc8] sm:$0xff]
        %v735 = vld [vmem:[%s708 + $0xd0] sm:$0xff]
        %v736 = vld [vmem:[%s708 + $0xd8] sm:$0xff]
        %v737 = vld [vmem:[%s708 + $0xe0] sm:$0xff]
        %v738 = vld [vmem:[%s708 + $0xe8] sm:$0xff]
        %v739 = vld [vmem:[%s708 + $0xf0] sm:$0xff]
        %v740 = vld [vmem:[%s708 + $0xf8] sm:$0xff]
        %v742 = vunpack.c.l.b16 %v707
        %v743 = vunpack.c.h.b16 %v707
        %v744 = vpack.c.b16 %v742, %v742
        %v745 = vpack.c.b16 %v743, %v743
        %v746 = vrot.slane %v744, 1
        %v747 = vrot.slane %v745, 1
        %v782 = vunpack.c.l.b16 %v709
        %v783 = vunpack.c.h.b16 %v709
        %v784 = vunpack.c.l.b16 %v710
        %v785 = vunpack.c.h.b16 %v710
        %v786 = vunpack.c.l.b16 %v711
        %v787 = vunpack.c.h.b16 %v711
        %v788 = vunpack.c.l.b16 %v712
        %v789 = vunpack.c.h.b16 %v712
        %v790 = vunpack.c.l.b16 %v713
        %v791 = vunpack.c.h.b16 %v713
        %v792 = vunpack.c.l.b16 %v714
        %v793 = vunpack.c.h.b16 %v714
        %v794 = vunpack.c.l.b16 %v715
        %v795 = vunpack.c.h.b16 %v715
        %v796 = vunpack.c.l.b16 %v716
        %v797 = vunpack.c.h.b16 %v716
        %v798 = vunpack.c.l.b16 %v717
        %v799 = vunpack.c.h.b16 %v717
        %v800 = vunpack.c.l.b16 %v718
        %v801 = vunpack.c.h.b16 %v718
        %v802 = vunpack.c.l.b16 %v719
        %v803 = vunpack.c.h.b16 %v719
        %v804 = vunpack.c.l.b16 %v720
        %v805 = vunpack.c.h.b16 %v720
        %v806 = vunpack.c.l.b16 %v721
        %v807 = vunpack.c.h.b16 %v721
        %v808 = vunpack.c.l.b16 %v722
        %v809 = vunpack.c.h.b16 %v722
        %v810 = vunpack.c.l.b16 %v723
        %v811 = vunpack.c.h.b16 %v723
        %v812 = vunpack.c.l.b16 %v724
        %v813 = vunpack.c.h.b16 %v724
        %v814 = vunpack.c.l.b16 %v725
        %v815 = vunpack.c.h.b16 %v725
        %v816 = vunpack.c.l.b16 %v726
        %v817 = vunpack.c.h.b16 %v726
        %v818 = vunpack.c.l.b16 %v727
        %v819 = vunpack.c.h.b16 %v727
        %v820 = vunpack.c.l.b16 %v728
        %v821 = vunpack.c.h.b16 %v728
        %v822 = vunpack.c.l.b16 %v729
        %v823 = vunpack.c.h.b16 %v729
        %v824 = vunpack.c.l.b16 %v730
        %v825 = vunpack.c.h.b16 %v730
        %v826 = vunpack.c.l.b16 %v731
        %v827 = vunpack.c.h.b16 %v731
        %v828 = vunpack.c.l.b16 %v732
        %v829 = vunpack.c.h.b16 %v732
        %v830 = vunpack.c.l.b16 %v733
        %v831 = vunpack.c.h.b16 %v733
        %v832 = vunpack.c.l.b16 %v734
        %v833 = vunpack.c.h.b16 %v734
        %v834 = vunpack.c.l.b16 %v735
        %v835 = vunpack.c.h.b16 %v735
        %v836 = vunpack.c.l.b16 %v736
        %v837 = vunpack.c.h.b16 %v736
        %v838 = vunpack.c.l.b16 %v737
        %v839 = vunpack.c.h.b16 %v737
        %v840 = vunpack.c.l.b16 %v738
        %v841 = vunpack.c.h.b16 %v738
        %v842 = vunpack.c.l.b16 %v739
        %v843 = vunpack.c.h.b16 %v739
        %v844 = vunpack.c.l.b16 %v740
        %v845 = vunpack.c.h.b16 %v740
        %v846 = vpack.c.b16 %v784, %v782
        %v847 = vpack.c.b16 %v785, %v783
        %v848 = vpack.c.b16 %v788, %v786
        %v849 = vpack.c.b16 %v789, %v787
        %v850 = vpack.c.b16 %v792, %v790
        %v851 = vpack.c.b16 %v793, %v791
        %v852 = vpack.c.b16 %v796, %v794
        %v853 = vpack.c.b16 %v797, %v795
        %v854 = vpack.c.b16 %v800, %v798
        %v855 = vpack.c.b16 %v801, %v799
        %v856 = vpack.c.b16 %v804, %v802
        %v857 = vpack.c.b16 %v805, %v803
        %v858 = vpack.c.b16 %v808, %v806
        %v859 = vpack.c.b16 %v809, %v807
        %v860 = vpack.c.b16 %v812, %v810
        %v861 = vpack.c.b16 %v813, %v811
        %v862 = vpack.c.b16 %v816, %v814
        %v863 = vpack.c.b16 %v817, %v815
        %v864 = vpack.c.b16 %v820, %v818
        %v865 = vpack.c.b16 %v821, %v819
        %v866 = vpack.c.b16 %v824, %v822
        %v867 = vpack.c.b16 %v825, %v823
        %v868 = vpack.c.b16 %v828, %v826
        %v869 = vpack.c.b16 %v829, %v827
        %v870 = vpack.c.b16 %v832, %v830
        %v871 = vpack.c.b16 %v833, %v831
        %v872 = vpack.c.b16 %v836, %v834
        %v873 = vpack.c.b16 %v837, %v835
        %v874 = vpack.c.b16 %v840, %v838
        %v875 = vpack.c.b16 %v841, %v839
        %v876 = vpack.c.b16 %v844, %v842
        %v877 = vpack.c.b16 %v845, %v843
        %910 = vmatpush.bf16.msra.mxu0 %v860
        %911 = vmatpush.bf16.msra.mxu0 %v858
        %912 = vmatpush.bf16.msra.mxu0 %v856
        %913 = vmatpush.bf16.msra.mxu0 %v854
        %914 = vmatpush.bf16.msra.mxu0 %v852
        %915 = vmatpush.bf16.msra.mxu0 %v850
        %916 = vmatpush.bf16.msra.mxu0 %v848
        %917 = vmatpush.bf16.msra.mxu0 %v846
        %918 = vmatmul.bf16.gmra.mxu0 %v746
        %v919 = vpop.f32.mrf.mxu0
        %v920 = vadd.f32 0.0, %v919
        %v921 = vpop.f32.mrf.mxu0
        %922 = vdwg.mxu0
        %923 = vmatpush.bf16.msra.mxu0 %v876
        %924 = vmatpush.bf16.msra.mxu0 %v874
        %925 = vmatpush.bf16.msra.mxu0 %v872
        %926 = vmatpush.bf16.msra.mxu0 %v870
        %927 = vmatpush.bf16.msra.mxu0 %v868
        %928 = vmatpush.bf16.msra.mxu0 %v866
        %929 = vmatpush.bf16.msra.mxu0 %v864
        %930 = vmatpush.bf16.msra.mxu0 %v862
        %931 = vmatmul.bf16.gmra.mxu0 %v747
        %v932 = vpop.f32.mrf.mxu0
        %v933 = vadd.f32 %v920, %v932
        %v934 = vpop.f32.mrf.mxu0
        %935 = vdwg.mxu0
        %936 = vmatpush.bf16.msra.mxu0 %v861
        %937 = vmatpush.bf16.msra.mxu0 %v859
        %938 = vmatpush.bf16.msra.mxu0 %v857
        %939 = vmatpush.bf16.msra.mxu0 %v855
        %940 = vmatpush.bf16.msra.mxu0 %v853
        %941 = vmatpush.bf16.msra.mxu0 %v851
        %942 = vmatpush.bf16.msra.mxu0 %v849
        %943 = vmatpush.bf16.msra.mxu0 %v847
        %944 = vmatmul.bf16.gmra.mxu0 %v746
        %v945 = vpop.f32.mrf.mxu0
        %v946 = vadd.f32 0.0, %v945
        %v947 = vpop.f32.mrf.mxu0
        %948 = vdwg.mxu0
        %949 = vmatpush.bf16.msra.mxu0 %v877
        %950 = vmatpush.bf16.msra.mxu0 %v875
        %951 = vmatpush.bf16.msra.mxu0 %v873
        %952 = vmatpush.bf16.msra.mxu0 %v871
        %953 = vmatpush.bf16.msra.mxu0 %v869
        %954 = vmatpush.bf16.msra.mxu0 %v867
        %955 = vmatpush.bf16.msra.mxu0 %v865
        %956 = vmatpush.bf16.msra.mxu0 %v863
        %957 = vmatmul.bf16.gmra.mxu0 %v747
        %v958 = vpop.f32.mrf.mxu0
        %v959 = vadd.f32 %v946, %v958
        %v960 = vpop.f32.mrf.mxu0
        %961 = vdwg.mxu0
        %v962 = vadd.f32 %v678, %v933
        %v963 = vadd.f32 %v704, %v959
        %v964 = vld [vmem:[%s2] sm:$0x3]
        %v966 = vperm.slane %v964, 0
        %v967 = vperm.slane %v964, 1
        %v970 = vadd.f32 %v962, %v966
        %v971 = vadd.f32 %v963, %v967
        %v972 = vpack.c.bf16 %v971, %v970
        %v974 = vrot.slane %v972, 2
        %vm975 = vcmask 1041408
        %v978 = vsel %vm975, %v972, %v974
        %980 = vst [vmem:[%s187] sm:$0xf] %v978
        %p981 = scmp.lt.s32.totalorder %s15, 1
        %s982 = scalar_select %p981, %s15, 1
        %s983 = smul.addr %s982, 2
        %s984 = smul.addr %s983, 2
        %s985 = scalar_lea.vmem %s3, %s984
        // Predicated region
        $region37: #{forward.9} parent=31 // pred_check
          %p986 = pneg %p101
        $region38: #{forward.9} parent=31 // pred_check_branch
          %988 = sbr.rel (%p986) target = $region40
        $region39: #{forward.9} parent=31 // pred_region
          _
        $region40: #{forward.9} parent=31 // pred_fallthru
          _
      $region32: #{forward.9} parent=5 // pred_fallthru
        _
      %p989 = scmp.le.s32.totalorder 2, %s10
      // Predicated region
      $region41: #{forward.9} parent=5 // pred_check
        %p990 = pneg %p989
      $region42: #{forward.9} parent=5 // pred_check_branch
        %992 = sbr.rel (%p990) target = $region44
      $region43: #{forward.9} parent=5 // pred_region
        %s993 = ssub.s32 %s10, 2
        // Predicated region
        $region45: #{forward.9} parent=43 // pred_check
          %p994 = pneg %p107
        $region46: #{forward.9} parent=43 // pred_check_branch
          %996 = sbr.rel (%p994) target = $region48
        $region47: #{forward.9} parent=43 // pred_region
          %p997 = scmp.lt.s32.totalorder %s16, 1
          %s998 = scalar_select %p997, %s16, 1
          %s999 = smul.addr %s998, 2
          %s1000 = smul.addr %s999, 2
          %s1001 = scalar_lea.vmem %s3, %s1000
        $region48: #{forward.9} parent=43 // pred_fallthru
          _
      $region44: #{forward.9} parent=5 // pred_fallthru
        _
    $region6: #{forward.9} parent=1 // loop_footer
      %s14 = sadd.s32 1, %s10
    $region7: #{forward.9} parent=1 // loop_footer_branch
      %9 = sbr.rel target = $region3
    $region8: #{forward.9} parent=1 // loop_exit
      _
    %1002 = vsyncpa [#allocation3], 1
    %s1003 = scalar_lea.sflag [#allocation3], 1
    %1004 = vsyncpa %s1003, 1

// kernel: forward.13
$region0: #{forward.13}
  #allocation0 [shape = 'u32[]', space=smem, size = 0x4, offset = 0x4, fixed_abs, tag = 'smem constant byte address 0x4 - core index']
  #allocation1 [shape = 'u32[72,128]{1,0:T(1,128)}', space=vmem, size = 0x9000, scoped, tag = 'internal scratch']
  %s0 = inlined_call_operand.vmem [shape: bf16[2,18,64], index: 0, kind: input, shape index: {}]
  %s1 = inlined_call_operand.vmem [shape: bf16[3,64,128], index: 1, kind: input, shape index: {}]
  %s2 = inlined_call_operand.vmem [shape: f32[1,128], index: 2, kind: input, shape index: {}]
  %s3 = inlined_call_operand.vmem [shape: f32[2,16,128], index: 3, kind: output, shape index: {}]
  %s4 = sld [smem:[#allocation0]]
  $region45: #{forward.13} parent=0
    _
  %s6 = ssub.s32 1, %s4
  %s7 = scalar_select 0, %s6, %s4
  loop: start=0, step=1, limit=4
  $region2: #{forward.13} parent=0 // loop_pre_header
    _
  $region3: #{forward.13} parent=0 // loop_header
    %s9 = sphi 0, %s13
    %p10 = scmp.ge.s32.totalorder %s9, 4
    %s19 = sphi 0, %s21
    %s22 = sphi 0, %s19
    %s23 = sphi 0, %s22
    %s39 = sphi 0, %s23
    %s43 = sphi 0, %s43
    %s45 = sphi 0, %s43
    %s46 = sphi 0, %s45
    %s60 = sphi 0, %s46
    %s64 = sphi 0, %s64
    %s66 = sphi 0, %s64
    %s67 = sphi 0, %s66
    %s81 = sphi 0, %s67
    %s87 = sphi 0, %s89
    %s90 = sphi 0, %s87
    %s91 = sphi 0, %s90
    %s107 = sphi 0, %s91
  $region4: #{forward.13} parent=0 // loop_header_branch
    %12 = sbr.rel (%p10) target = $region8
  $region5: #{forward.13} parent=0 // loop_body
    %s14 = ssub.s32 %s9, 1
    %s15 = ssub.s32 %s9, 2
    %s16 = sadd.s32 %s9, 1
    %s17 = ssub.s32 %s9, %s16
    %p18 = scmp.eq.s32.totalorder %s17, 0
    %s20 = sadd.s32 %s19, 1
    %s21 = scalar_select %p18, %s19, %s20
    %p24 = pneg %p18
    %p25 = scmp.eq.s32.totalorder %s9, 1
    %p26 = por %p24, %p25
    %p27 = scmp.ne.s32.totalorder %s19, %s22
    %p28 = scmp.eq.s32.totalorder %s9, 0
    %p29 = por %p27, %p28
    %p30 = scmp.ne.s32.totalorder %s19, %s22
    %p31 = scmp.eq.s32.totalorder %s14, 1
    %p32 = por %p30, %p31
    %p33 = scmp.ne.s32.totalorder %s22, %s23
    %p34 = scmp.eq.s32.totalorder %s14, 0
    %p35 = por %p33, %p34
    %p36 = scmp.ne.s32.totalorder %s22, %s23
    %p37 = scmp.eq.s32.totalorder %s15, 1
    %p38 = por %p36, %p37
    %p40 = scmp.ne.s32.totalorder %s23, %s39
    %p41 = scmp.eq.s32.totalorder %s15, 0
    %p42 = por %p40, %p41
    %s44 = sadd.s32 %s43, 1
    %p47 = scmp.eq.s32.totalorder %s9, 1
    %p48 = scmp.ne.s32.totalorder %s43, %s45
    %p49 = scmp.eq.s32.totalorder %s9, 0
    %p50 = por %p48, %p49
    %p51 = scmp.ne.s32.totalorder %s43, %s45
    %p52 = scmp.eq.s32.totalorder %s14, 1
    %p53 = por %p51, %p52
    %p54 = scmp.ne.s32.totalorder %s45, %s46
    %p55 = scmp.eq.s32.totalorder %s14, 0
    %p56 = por %p54, %p55
    %p57 = scmp.ne.s32.totalorder %s45, %s46
    %p58 = scmp.eq.s32.totalorder %s15, 1
    %p59 = por %p57, %p58
    %p61 = scmp.ne.s32.totalorder %s46, %s60
    %p62 = scmp.eq.s32.totalorder %s15, 0
    %p63 = por %p61, %p62
    %s65 = sadd.s32 %s64, 1
    %p68 = scmp.eq.s32.totalorder %s9, 1
    %p69 = scmp.ne.s32.totalorder %s64, %s66
    %p70 = scmp.eq.s32.totalorder %s9, 0
    %p71 = por %p69, %p70
    %p72 = scmp.ne.s32.totalorder %s64, %s66
    %p73 = scmp.eq.s32.totalorder %s14, 1
    %p74 = por %p72, %p73
    %p75 = scmp.ne.s32.totalorder %s66, %s67
    %p76 = scmp.eq.s32.totalorder %s14, 0
    %p77 = por %p75, %p76
    %p78 = scmp.ne.s32.totalorder %s66, %s67
    %p79 = scmp.eq.s32.totalorder %s15, 1
    %p80 = por %p78, %p79
    %p82 = scmp.ne.s32.totalorder %s67, %s81
    %p83 = scmp.eq.s32.totalorder %s15, 0
    %p84 = por %p82, %p83
    %s85 = ssub.s32 %s9, %s16
    %p86 = scmp.eq.s32.totalorder %s85, 0
    %s88 = sadd.s32 %s87, 1
    %s89 = scalar_select %p86, %s87, %s88
    %p92 = pneg %p86
    %p93 = scmp.eq.s32.totalorder %s9, 1
    %p94 = por %p92, %p93
    %p95 = scmp.ne.s32.totalorder %s87, %s90
    %p96 = scmp.eq.s32.totalorder %s9, 0
    %p97 = por %p95, %p96
    %p98 = scmp.ne.s32.totalorder %s87, %s90
    %p99 = scmp.eq.s32.totalorder %s14, 1
    %p100 = por %p98, %p99
    %p101 = scmp.ne.s32.totalorder %s90, %s91
    %p102 = scmp.eq.s32.totalorder %s14, 0
    %p103 = por %p101, %p102
    %p104 = scmp.ne.s32.totalorder %s90, %s91
    %p105 = scmp.eq.s32.totalorder %s15, 1
    %p106 = por %p104, %p105
    %p108 = scmp.ne.s32.totalorder %s91, %s107
    %p109 = scmp.eq.s32.totalorder %s15, 0
    %p110 = por %p108, %p109
    %p111 = scmp.le.s32.totalorder 1, %s9
    %p112 = scmp.lt.s32.totalorder %s9, 3
    %p113 = pnand %p111, %p112
    %p114 = pneg %p113
    // Predicated region
    $region9: #{forward.13} parent=5 // pred_check
      _
    $region10: #{forward.13} parent=5 // pred_check_branch
      %116 = sbr.rel (%p113) target = $region12
    $region11: #{forward.13} parent=5 // pred_region
      %s117 = ssub.s32 %s9, 1
      // Predicated region
      $region13: #{forward.13} parent=11 // pred_check
        %p118 = pneg %p56
      $region14: #{forward.13} parent=11 // pred_check_branch
        %120 = sbr.rel (%p118) target = $region16
      $region15: #{forward.13} parent=11 // pred_region
        _
      $region16: #{forward.13} parent=11 // pred_fallthru
        _
      // Predicated region
      $region17: #{forward.13} parent=11 // pred_check
        %p121 = pneg %p77
      $region18: #{forward.13} parent=11 // pred_check_branch
        %123 = sbr.rel (%p121) target = $region20
      $region19: #{forward.13} parent=11 // pred_region
        _
      $region20: #{forward.13} parent=11 // pred_fallthru
        _
    $region12: #{forward.13} parent=5 // pred_fallthru
      _
    %p124 = scmp.lt.s32.totalorder %s9, 2
    // Predicated region
    $region21: #{forward.13} parent=5 // pred_check
      %p125 = pneg %p124
    $region22: #{forward.13} parent=5 // pred_check_branch
      %127 = sbr.rel (%p125) target = $region24
    $region23: #{forward.13} parent=5 // pred_region
      // Predicated region
      $region25: #{forward.13} parent=23 // pred_check
        %p128 = pneg %p29
      $region26: #{forward.13} parent=23 // pred_check_branch
        %130 = sbr.rel (%p128) target = $region28
      $region27: #{forward.13} parent=23 // pred_region
        %p131 = scmp.lt.s32.totalorder %s9, 1
        %s132 = scalar_select %p131, %s9, 1
        %s133 = smul.addr %s132, 3
        %s134 = smul.addr %s133, 4
        %s135 = scalar_lea.vmem %s0, %s134
      $region28: #{forward.13} parent=23 // pred_fallthru
        _
    $region24: #{forward.13} parent=5 // pred_fallthru
      _
    %p136 = scmp.le.s32.totalorder 1, %s9
    %p137 = scmp.lt.s32.totalorder %s9, 3
    %p138 = pnand %p136, %p137
    %p139 = pneg %p138
    // Predicated region
    $region29: #{forward.13} parent=5 // pred_check
      _
    $region30: #{forward.13} parent=5 // pred_check_branch
      %141 = sbr.rel (%p138) target = $region32
    $region31: #{forward.13} parent=5 // pred_region
      %s142 = ssub.s32 %s9, 1
      %p143 = scmp.lt.s32.totalorder %s14, 1
      %s144 = scalar_select %p143, %s14, 1
      %s145 = smul.addr %s144, 3
      %s146 = smul.addr %s145, 4
      %s147 = scalar_lea.vmem %s0, %s146
      %p148 = pneg %p35
      %p149 = pneg %p32
      %p150 = pneg %p56
      %p151 = pneg %p53
      %p152 = pneg %p77
      %p153 = pneg %p74
      %p154 = pneg %p103
      %p155 = pneg %p100
      %p156 = scmp.lt.s32.totalorder %s14, 1
      %s157 = scalar_select %p156, %s14, 1
      %s158 = smul.addr %s157, 2
      %s159 = smul.addr %s158, 8
      %s160 = scalar_lea.vmem %s3, %s159
      %p161 = scmp.lt.s32.totalorder %s14, 1
      %s162 = scalar_select %p161, %s14, 1
      %s163 = smul.addr %s162, 3
      %s164 = smul.addr %s163, 4
      %s165 = scalar_lea.vmem %s0, %s164
      %p166 = scmp.lt.s32.totalorder %s14, 1
      %s167 = scalar_select %p166, %s14, 1
      %s168 = smul.addr %s167, 2
      %s169 = smul.addr %s168, 8
      %s170 = scalar_lea.vmem %s3, %s169
      %v172 = vld [vmem:[%s165] sm:$0xf]
      %v173 = vld [vmem:[%s165 + $0x4] sm:$0xf]
      %v174 = vld [vmem:[%s1] sm:$0xf]
      %v175 = vld [vmem:[%s1 + $0x4] sm:$0xf]
      %v176 = vld [vmem:[%s1 + $0x8] sm:$0xf]
      %v177 = vld [vmem:[%s1 + $0xc] sm:$0xf]
      %v178 = vld [vmem:[%s1 + $0x10] sm:$0xf]
      %v179 = vld [vmem:[%s1 + $0x14] sm:$0xf]
      %v180 = vld [vmem:[%s1 + $0x18] sm:$0xf]
      %v181 = vld [vmem:[%s1 + $0x1c] sm:$0xf]
      %v182 = vld [vmem:[%s165 + $0x8] sm:$0x1]
      %s183 = scalar_lea.vmem %s1, 32
      %v184 = vld [vmem:[%s183] sm:$0xf]
      %v185 = vld [vmem:[%s183 + $0x4] sm:$0xf]
      %v186 = vld [vmem:[%s183 + $0x8] sm:$0xf]
      %v187 = vld [vmem:[%s183 + $0xc] sm:$0xf]
      %v188 = vld [vmem:[%s183 + $0x10] sm:$0xf]
      %v189 = vld [vmem:[%s183 + $0x14] sm:$0xf]
      %v190 = vld [vmem:[%s183 + $0x18] sm:$0xf]
      %v191 = vld [vmem:[%s183 + $0x1c] sm:$0xf]
      %v195 = vunpack.c.l.b16 %v172
      %v196 = vunpack.c.l.b16 %v173
      %v197 = vunpack.c.l.b16 %v182
      %v198 = vpack.c.b16 %v196, %v195
      %v199 = vpack.c.b16 %v197, %v197
      %vm200 = vsmask.f32 7424
      %v202 = vshrl.u32 %v198, 16
      %v204 = vshll.u32 %v198, 16
      %v206 = vrot.slane %v204, 1
      %v207 = vor.u32 %v202, %v206
      %v209 = vshll.u32 %v199, 16
      %v211 = vrot.slane %v209, 1
      %v212 = vsel %vm200, %v207, %v211
      %v221 = vunpack.c.l.b16 %v184
      %v222 = vunpack.c.l.b16 %v185
      %v223 = vunpack.c.l.b16 %v186
      %v224 = vunpack.c.l.b16 %v187
      %v225 = vunpack.c.l.b16 %v188
      %v226 = vunpack.c.l.b16 %v189
      %v227 = vunpack.c.l.b16 %v190
      %v228 = vunpack.c.l.b16 %v191
      %v229 = vpack.c.b16 %v222, %v221
      %v230 = vpack.c.b16 %v224, %v223
      %v231 = vpack.c.b16 %v226, %v225
      %v232 = vpack.c.b16 %v228, %v227
      %vm237 = vcmask 523264
      %v239 = vsel %vm237, %v212, 0
      %241 = vmatpush.bf16.msra.mxu0 0
      %242 = vmatpush.bf16.msra.mxu0 0
      %243 = vmatpush.bf16.msra.mxu0 0
      %244 = vmatpush.bf16.msra.mxu0 0
      %245 = vmatpush.bf16.msra.mxu0 %v232
      %246 = vmatpush.bf16.msra.mxu0 %v231
      %247 = vmatpush.bf16.msra.mxu0 %v230
      %248 = vmatpush.bf16.msra.mxu0 %v229
      %249 = vmatmul.bf16.gmra.mxu0 %v239
      %v250 = vpop.f32.mrf.mxu0
      %v251 = vadd.f32 0.0, %v250
      %v252 = vpop.f32.mrf.mxu0
      %v253 = vadd.f32 0.0, %v252
      %254 = vdwg.mxu0
      %v263 = vunpack.c.l.b16 %v174
      %v264 = vunpack.c.l.b16 %v175
      %v265 = vunpack.c.l.b16 %v176
      %v266 = vunpack.c.l.b16 %v177
      %v267 = vunpack.c.l.b16 %v178
      %v268 = vunpack.c.l.b16 %v179
      %v269 = vunpack.c.l.b16 %v180
      %v270 = vunpack.c.l.b16 %v181
      %v271 = vpack.c.b16 %v264, %v263
      %v272 = vpack.c.b16 %v266, %v265
      %v273 = vpack.c.b16 %v268, %v267
      %v274 = vpack.c.b16 %v270, %v269
      %v279 = vsel %vm237, %v198, 0
      %281 = vmatpush.bf16.msra.mxu0 0
      %282 = vmatpush.bf16.msra.mxu0 0
      %283 = vmatpush.bf16.msra.mxu0 0
      %284 = vmatpush.bf16.msra.mxu0 0
      %285 = vmatpush.bf16.msra.mxu0 %v274
      %286 = vmatpush.bf16.msra.mxu0 %v273
      %287 = vmatpush.bf16.msra.mxu0 %v272
      %288 = vmatpush.bf16.msra.mxu0 %v271
      %289 = vmatmul.bf16.gmra.mxu0 %v279
      %v290 = vpop.f32.mrf.mxu0
      %v291 = vadd.f32 %v251, %v290
      %v292 = vpop.f32.mrf.mxu0
      %v293 = vadd.f32 %v253, %v292
      %294 = vdwg.mxu0
      %v295 = vld [vmem:[%s165] sm:$0xe]
      %s296 = scalar_lea.vmem %s1, 64
      %v297 = vld [vmem:[%s296] sm:$0xf]
      %v298 = vld [vmem:[%s296 + $0x4] sm:$0xf]
      %v299 = vld [vmem:[%s296 + $0x8] sm:$0xf]
      %v300 = vld [vmem:[%s296 + $0xc] sm:$0xf]
      %v301 = vld [vmem:[%s296 + $0x10] sm:$0xf]
      %v302 = vld [vmem:[%s296 + $0x14] sm:$0xf]
      %v303 = vld [vmem:[%s296 + $0x18] sm:$0xf]
      %v304 = vld [vmem:[%s296 + $0x1c] sm:$0xf]
      %v306 = vunpack.c.l.b16 %v295
      %v307 = vpack.c.b16 %v196, %v306
      %vm308 = vcmask 1046528
      %v309 = vrot.slane %v307, 1
      %v310 = vrot.slane %v199, 1
      %v311 = vsel %vm308, %v309, %v310
      %v320 = vunpack.c.l.b16 %v297
      %v321 = vunpack.c.l.b16 %v298
      %v322 = vunpack.c.l.b16 %v299
      %v323 = vunpack.c.l.b16 %v300
      %v324 = vunpack.c.l.b16 %v301
      %v325 = vunpack.c.l.b16 %v302
      %v326 = vunpack.c.l.b16 %v303
      %v327 = vunpack.c.l.b16 %v304
      %v328 = vpack.c.b16 %v321, %v320
      %v329 = vpack.c.b16 %v323, %v322
      %v330 = vpack.c.b16 %v325, %v324
      %v331 = vpack.c.b16 %v327, %v326
      %v337 = vsel %vm237, %v311, 0
      %339 = vmatpush.bf16.msra.mxu0 0
      %340 = vmatpush.bf16.msra.mxu0 0
      %341 = vmatpush.bf16.msra.mxu0 0
      %342 = vmatpush.bf16.msra.mxu0 0
      %343 = vmatpush.bf16.msra.mxu0 %v331
      %344 = vmatpush.bf16.msra.mxu0 %v330
      %345 = vmatpush.bf16.msra.mxu0 %v329
      %346 = vmatpush.bf16.msra.mxu0 %v328
      %347 = vmatmul.bf16.gmra.mxu0 %v337
      %v348 = vpop.f32.mrf.mxu0
      %v349 = vadd.f32 0.0, %v348
      %v350 = vpop.f32.mrf.mxu0
      %v351 = vadd.f32 0.0, %v350
      %352 = vdwg.mxu0
      %v353 = vadd.f32 %v291, %v349
      %v354 = vadd.f32 %v293, %v351
      %v355 = vld [vmem:[%s2] sm:$0x1]
      %v357 = vperm.slane %v355, 0
      %v359 = vadd.f32 %v353, %v357
      %v360 = vadd.f32 %v354, %v357
      %361 = vst [vmem:[%s170] sm:$0xff] %v359
      %362 = vst [vmem:[%s170 + $0x8] sm:$0xff] %v360
      %p363 = scmp.lt.s32.totalorder %s14, 1
      %s364 = scalar_select %p363, %s14, 1
      %s365 = smul.addr %s364, 2
      %s366 = smul.addr %s365, 8
      %s367 = scalar_lea.vmem %s3, %s366
      // Predicated region
      $region33: #{forward.13} parent=31 // pred_check
        %p368 = pneg %p100
      $region34: #{forward.13} parent=31 // pred_check_branch
        %370 = sbr.rel (%p368) target = $region36
      $region35: #{forward.13} parent=31 // pred_region
        _
      $region36: #{forward.13} parent=31 // pred_fallthru
        _
    $region32: #{forward.13} parent=5 // pred_fallthru
      _
    %p371 = scmp.le.s32.totalorder 2, %s9
    // Predicated region
    $region37: #{forward.13} parent=5 // pred_check
      %p372 = pneg %p371
    $region38: #{forward.13} parent=5 // pred_check_branch
      %374 = sbr.rel (%p372) target = $region40
    $region39: #{forward.13} parent=5 // pred_region
      %s375 = ssub.s32 %s9, 2
      // Predicated region
      $region41: #{forward.13} parent=39 // pred_check
        %p376 = pneg %p106
      $region42: #{forward.13} parent=39 // pred_check_branch
        %378 = sbr.rel (%p376) target = $region44
      $region43: #{forward.13} parent=39 // pred_region
        %p379 = scmp.lt.s32.totalorder %s15, 1
        %s380 = scalar_select %p379, %s15, 1
        %s381 = smul.addr %s380, 2
        %s382 = smul.addr %s381, 8
        %s383 = scalar_lea.vmem %s3, %s382
      $region44: #{forward.13} parent=39 // pred_fallthru
        _
    $region40: #{forward.13} parent=5 // pred_fallthru
      _
  $region6: #{forward.13} parent=0 // loop_footer
    %s13 = sadd.s32 1, %s9
  $region7: #{forward.13} parent=0 // loop_footer_branch
    %8 = sbr.rel target = $region3
  $region8: #{forward.13} parent=0 // loop_exit
    _

// kernel: forward.10
$region0: #{forward.10}
  #allocation0 [shape = 'u32[]', space=smem, size = 0x4, offset = 0x4, fixed_abs, tag = 'smem constant byte address 0x4 - core index']
  #allocation1 [shape = 'u32[72,128]{1,0:T(1,128)}', space=vmem, size = 0x9000, scoped, tag = 'internal scratch']
  #allocation2 [shape = 'f32[8,1024]{1,0:T(8,128)}', space=vmem, size = 0x8000, scoped, tag = 'scratch operand']
  #allocation3 [shape = 'f32[8,256]{1,0:T(8,128)}', space=vmem, size = 0x2000, scoped, tag = 'scratch operand']
  %s0 = inlined_call_operand.vmem [shape: bf16[8,256], index: 0, kind: input, shape index: {}]
  %s1 = inlined_call_operand.hbm [shape: bf16[256,1024], index: 1, kind: input, shape index: {}]
  %s2 = inlined_call_operand.hbm [shape: bf16[256,1024], index: 2, kind: input, shape index: {}]
  %s3 = inlined_call_operand.vmem [shape: f32[1,1024], index: 3, kind: input, shape index: {}]
  %s4 = inlined_call_operand.vmem [shape: bf16[8,256], index: 4, kind: output, shape index: {}]
  %s5 = sld [smem:[#allocation0]]
  $region34: #{forward.10} parent=0
    _
  %s7 = ssub.s32 1, %s5
  %s8 = scalar_select 0, %s7, %s5
  $region1: #{forward.10} parent=0
    #allocation4 [shape = 'u8[524288]{0}', space=vmem, size = 0x80000, scoped, tag = 'input window, operand 1, single buffered']
    #allocation5 [shape = 's32[1]{0}', space=sflag, size = 0x4, scoped, tag = 'scoped memory for forward.10']
    #allocation6 [shape = 'u8[524288]{0}', space=vmem, size = 0x80000, scoped, tag = 'input window, operand 2, single buffered']
    #allocation7 [shape = 's32[1]{0}', space=sflag, size = 0x4, scoped, tag = 'scoped memory for forward.10']
    %9 = vsyncpa [#allocation5], 0
    %10 = vsyncpa [#allocation7], 0
    // Predicated region
    $region2: #{forward.10} parent=1 // pred_check
      _
    $region3: #{forward.10} parent=1 // pred_check_branch
      %12 = sbr.rel (0) target = $region5
    $region4: #{forward.10} parent=1 // pred_region
      _
    $region5: #{forward.10} parent=1 // pred_fallthru
      _
    // Predicated region
    $region6: #{forward.10} parent=1 // pred_check
      _
    $region7: #{forward.10} parent=1 // pred_check_branch
      %14 = sbr.rel (0) target = $region9
    $region8: #{forward.10} parent=1 // pred_region
      %16 = vsyncadd [#allocation5], 0
      %s17 = sshll.u32 %s1, 4
      %s18 = int_to_ptr.hbm [resolvable:$true] %s17
      %s19 = sshll.u32 [#allocation4], 4
      %s20 = int_to_ptr.vmem [resolvable:$true] %s19
      %25 = dma.hbm_to_vmem [thread:$0]  %s18, 16384, %s20, [#allocation5], 512, 512, 32
    $region9: #{forward.10} parent=1 // pred_fallthru
      _
    // Predicated region
    $region10: #{forward.10} parent=1 // pred_check
      _
    $region11: #{forward.10} parent=1 // pred_check_branch
      %27 = sbr.rel (0) target = $region13
    $region12: #{forward.10} parent=1 // pred_region
      %29 = vsyncadd [#allocation7], 0
      %s30 = sshll.u32 %s2, 4
      %s31 = int_to_ptr.hbm [resolvable:$true] %s30
      %s32 = sshll.u32 [#allocation6], 4
      %s33 = int_to_ptr.vmem [resolvable:$true] %s32
      %38 = dma.hbm_to_vmem [thread:$0]  %s31, 16384, %s33, [#allocation7], 512, 512, 32
    $region13: #{forward.10} parent=1 // pred_fallthru
      _
    // Predicated region
    $region14: #{forward.10} parent=1 // pred_check
      _
    $region15: #{forward.10} parent=1 // pred_check_branch
      %40 = sbr.rel (0) target = $region17
    $region16: #{forward.10} parent=1 // pred_region
      _
    $region17: #{forward.10} parent=1 // pred_fallthru
      _
    // Predicated region
    $region18: #{forward.10} parent=1 // pred_check
      _
    $region19: #{forward.10} parent=1 // pred_check_branch
      %42 = sbr.rel (0) target = $region21
    $region20: #{forward.10} parent=1 // pred_region
      %44 = dma.done [#allocation5], 16384
    $region21: #{forward.10} parent=1 // pred_fallthru
      _
    // Predicated region
    $region22: #{forward.10} parent=1 // pred_check
      _
    $region23: #{forward.10} parent=1 // pred_check_branch
      %46 = sbr.rel (0) target = $region25
    $region24: #{forward.10} parent=1 // pred_region
      %48 = dma.done [#allocation7], 16384
    $region25: #{forward.10} parent=1 // pred_fallthru
      _
    %v50 = vld [vmem:[%s0] sm:$0xff]
    %v51 = vld [vmem:[#allocation4] sm:$0xff]
    %v52 = vld [vmem:[#allocation4 + $0x8] sm:$0xff]
    %v53 = vld [vmem:[#allocation4 + $0x10] sm:$0xff]
    %v54 = vld [vmem:[#allocation4 + $0x18] sm:$0xff]
    %v55 = vld [vmem:[#allocation4 + $0x20] sm:$0xff]
    %v56 = vld [vmem:[#allocation4 + $0x28] sm:$0xff]
    %v57 = vld [vmem:[#allocation4 + $0x30] sm:$0xff]
    %v58 = vld [vmem:[#allocation4 + $0x38] sm:$0xff]
    %v59 = vld [vmem:[#allocation4 + $0x40] sm:$0xff]
    %v60 = vld [vmem:[#allocation4 + $0x48] sm:$0xff]
    %v61 = vld [vmem:[#allocation4 + $0x50] sm:$0xff]
    %v62 = vld [vmem:[#allocation4 + $0x58] sm:$0xff]
    %v63 = vld [vmem:[#allocation4 + $0x60] sm:$0xff]
    %v64 = vld [vmem:[#allocation4 + $0x68] sm:$0xff]
    %v65 = vld [vmem:[#allocation4 + $0x70] sm:$0xff]
    %v66 = vld [vmem:[#allocation4 + $0x78] sm:$0xff]
    %v67 = vld [vmem:[#allocation4 + $0x80] sm:$0xff]
    %v68 = vld [vmem:[#allocation4 + $0x88] sm:$0xff]
    %v69 = vld [vmem:[#allocation4 + $0x90] sm:$0xff]
    %v70 = vld [vmem:[#allocation4 + $0x98] sm:$0xff]
    %v71 = vld [vmem:[#allocation4 + $0xa0] sm:$0xff]
    %v72 = vld [vmem:[#allocation4 + $0xa8] sm:$0xff]
    %v73 = vld [vmem:[#allocation4 + $0xb0] sm:$0xff]
    %v74 = vld [vmem:[#allocation4 + $0xb8] sm:$0xff]
    %v75 = vld [vmem:[#allocation4 + $0xc0] sm:$0xff]
    %v76 = vld [vmem:[#allocation4 + $0xc8] sm:$0xff]
    %v77 = vld [vmem:[#allocation4 + $0xd0] sm:$0xff]
    %v78 = vld [vmem:[#allocation4 + $0xd8] sm:$0xff]
    %v79 = vld [vmem:[#allocation4 + $0xe0] sm:$0xff]
    %v80 = vld [vmem:[#allocation4 + $0xe8] sm:$0xff]
    %v81 = vld [vmem:[#allocation4 + $0xf0] sm:$0xff]
    %v82 = vld [vmem:[#allocation4 + $0xf8] sm:$0xff]
    %v83 = vld [vmem:[#allocation4 + $0x100] sm:$0xff]
    %v84 = vld [vmem:[#allocation4 + $0x108] sm:$0xff]
    %v85 = vld [vmem:[#allocation4 + $0x110] sm:$0xff]
    %v86 = vld [vmem:[#allocation4 + $0x118] sm:$0xff]
    %v87 = vld [vmem:[#allocation4 + $0x120] sm:$0xff]
    %v88 = vld [vmem:[#allocation4 + $0x128] sm:$0xff]
    %v89 = vld [vmem:[#allocation4 + $0x130] sm:$0xff]
    %v90 = vld [vmem:[#allocation4 + $0x138] sm:$0xff]
    %v91 = vld [vmem:[#allocation4 + $0x140] sm:$0xff]
    %v92 = vld [vmem:[#allocation4 + $0x148] sm:$0xff]
    %v93 = vld [vmem:[#allocation4 + $0x150] sm:$0xff]
    %v94 = vld [vmem:[#allocation4 + $0x158] sm:$0xff]
    %v95 = vld [vmem:[#allocation4 + $0x160] sm:$0xff]
    %v96 = vld [vmem:[#allocation4 + $0x168] sm:$0xff]
    %v97 = vld [vmem:[#allocation4 + $0x170] sm:$0xff]
    %v98 = vld [vmem:[#allocation4 + $0x178] sm:$0xff]
    %v99 = vld [vmem:[#allocation4 + $0x180] sm:$0xff]
    %v100 = vld [vmem:[#allocation4 + $0x188] sm:$0xff]
    %v101 = vld [vmem:[#allocation4 + $0x190] sm:$0xff]
    %v102 = vld [vmem:[#allocation4 + $0x198] sm:$0xff]
    %v103 = vld [vmem:[#allocation4 + $0x1a0] sm:$0xff]
    %v104 = vld [vmem:[#allocation4 + $0x1a8] sm:$0xff]
    %v105 = vld [vmem:[#allocation4 + $0x1b0] sm:$0xff]
    %v106 = vld [vmem:[#allocation4 + $0x1b8] sm:$0xff]
    %v107 = vld [vmem:[#allocation4 + $0x1c0] sm:$0xff]
    %v108 = vld [vmem:[#allocation4 + $0x1c8] sm:$0xff]
    %v109 = vld [vmem:[#allocation4 + $0x1d0] sm:$0xff]
    %v110 = vld [vmem:[#allocation4 + $0x1d8] sm:$0xff]
    %v111 = vld [vmem:[#allocation4 + $0x1e0] sm:$0xff]
    %v112 = vld [vmem:[#allocation4 + $0x1e8] sm:$0xff]
    %v113 = vld [vmem:[#allocation4 + $0x1f0] sm:$0xff]
    %v114 = vld [vmem:[#allocation4 + $0x1f8] sm:$0xff]
    %v115 = vld [vmem:[#allocation4 + $0x200] sm:$0xff]
    %v116 = vld [vmem:[#allocation4 + $0x208] sm:$0xff]
    %v117 = vld [vmem:[#allocation4 + $0x210] sm:$0xff]
    %v118 = vld [vmem:[#allocation4 + $0x218] sm:$0xff]
    %v119 = vld [vmem:[#allocation4 + $0x220] sm:$0xff]
    %v120 = vld [vmem:[#allocation4 + $0x228] sm:$0xff]
    %v121 = vld [vmem:[#allocation4 + $0x230] sm:$0xff]
    %v122 = vld [vmem:[#allocation4 + $0x238] sm:$0xff]
    %v123 = vld [vmem:[#allocation4 + $0x240] sm:$0xff]
    %v124 = vld [vmem:[#allocation4 + $0x248] sm:$0xff]
    %v125 = vld [vmem:[#allocation4 + $0x250] sm:$0xff]
    %v126 = vld [vmem:[#allocation4 + $0x258] sm:$0xff]
    %v127 = vld [vmem:[#allocation4 + $0x260] sm:$0xff]
    %v128 = vld [vmem:[#allocation4 + $0x268] sm:$0xff]
    %v129 = vld [vmem:[#allocation4 + $0x270] sm:$0xff]
    %v130 = vld [vmem:[#allocation4 + $0x278] sm:$0xff]
    %v131 = vld [vmem:[#allocation4 + $0x280] sm:$0xff]
    %v132 = vld [vmem:[#allocation4 + $0x288] sm:$0xff]
    %v133 = vld [vmem:[#allocation4 + $0x290] sm:$0xff]
    %v134 = vld [vmem:[#allocation4 + $0x298] sm:$0xff]
    %v135 = vld [vmem:[#allocation4 + $0x2a0] sm:$0xff]
    %v136 = vld [vmem:[#allocation4 + $0x2a8] sm:$0xff]
    %v137 = vld [vmem:[#allocation4 + $0x2b0] sm:$0xff]
    %v138 = vld [vmem:[#allocation4 + $0x2b8] sm:$0xff]
    %v139 = vld [vmem:[#allocation4 + $0x2c0] sm:$0xff]
    %v140 = vld [vmem:[#allocation4 + $0x2c8] sm:$0xff]
    %v141 = vld [vmem:[#allocation4 + $0x2d0] sm:$0xff]
    %v142 = vld [vmem:[#allocation4 + $0x2d8] sm:$0xff]
    %v143 = vld [vmem:[#allocation4 + $0x2e0] sm:$0xff]
    %v144 = vld [vmem:[#allocation4 + $0x2e8] sm:$0xff]
    %v145 = vld [vmem:[#allocation4 + $0x2f0] sm:$0xff]
    %v146 = vld [vmem:[#allocation4 + $0x2f8] sm:$0xff]
    %v147 = vld [vmem:[#allocation4 + $0x300] sm:$0xff]
    %v148 = vld [vmem:[#allocation4 + $0x308] sm:$0xff]
    %v149 = vld [vmem:[#allocation4 + $0x310] sm:$0xff]
    %v150 = vld [vmem:[#allocation4 + $0x318] sm:$0xff]
    %v151 = vld [vmem:[#allocation4 + $0x320] sm:$0xff]
    %v152 = vld [vmem:[#allocation4 + $0x328] sm:$0xff]
    %v153 = vld [vmem:[#allocation4 + $0x330] sm:$0xff]
    %v154 = vld [vmem:[#allocation4 + $0x338] sm:$0xff]
    %v155 = vld [vmem:[#allocation4 + $0x340] sm:$0xff]
    %v156 = vld [vmem:[#allocation4 + $0x348] sm:$0xff]
    %v157 = vld [vmem:[#allocation4 + $0x350] sm:$0xff]
    %v158 = vld [vmem:[#allocation4 + $0x358] sm:$0xff]
    %v159 = vld [vmem:[#allocation4 + $0x360] sm:$0xff]
    %v160 = vld [vmem:[#allocation4 + $0x368] sm:$0xff]
    %v161 = vld [vmem:[#allocation4 + $0x370] sm:$0xff]
    %v162 = vld [vmem:[#allocation4 + $0x378] sm:$0xff]
    %v163 = vld [vmem:[#allocation4 + $0x380] sm:$0xff]
    %v164 = vld [vmem:[#allocation4 + $0x388] sm:$0xff]
    %v165 = vld [vmem:[#allocation4 + $0x390] sm:$0xff]
    %v166 = vld [vmem:[#allocation4 + $0x398] sm:$0xff]
    %v167 = vld [vmem:[#allocation4 + $0x3a0] sm:$0xff]
    %v168 = vld [vmem:[#allocation4 + $0x3a8] sm:$0xff]
    %v169 = vld [vmem:[#allocation4 + $0x3b0] sm:$0xff]
    %v170 = vld [vmem:[#allocation4 + $0x3b8] sm:$0xff]
    %v171 = vld [vmem:[#allocation4 + $0x3c0] sm:$0xff]
    %v172 = vld [vmem:[#allocation4 + $0x3c8] sm:$0xff]
    %v173 = vld [vmem:[#allocation4 + $0x3d0] sm:$0xff]
    %v174 = vld [vmem:[#allocation4 + $0x3d8] sm:$0xff]
    %v175 = vld [vmem:[#allocation4 + $0x3e0] sm:$0xff]
    %v176 = vld [vmem:[#allocation4 + $0x3e8] sm:$0xff]
    %v177 = vld [vmem:[#allocation4 + $0x3f0] sm:$0xff]
    %v178 = vld [vmem:[#allocation4 + $0x3f8] sm:$0xff]
    %v179 = vld [vmem:[%s3] sm:$0xff]
    %v181 = vperm.slane %v179, 0
    %v182 = vperm.slane %v179, 1
    %v183 = vperm.slane %v179, 2
    %v184 = vperm.slane %v179, 3
    %v185 = vperm.slane %v179, 4
    %v186 = vperm.slane %v179, 5
    %v187 = vperm.slane %v179, 6
    %v188 = vperm.slane %v179, 7
    %v198 = vunpack.c.l.b16 %v50
    %v199 = vunpack.c.h.b16 %v50
    %v200 = vpack.c.b16 %v198, %v198
    %v201 = vpack.c.b16 %v199, %v199
    %v332 = vunpack.c.l.b16 %v51
    %v333 = vunpack.c.h.b16 %v51
    %v334 = vunpack.c.l.b16 %v52
    %v335 = vunpack.c.h.b16 %v52
    %v336 = vunpack.c.l.b16 %v53
    %v337 = vunpack.c.h.b16 %v53
    %v338 = vunpack.c.l.b16 %v54
    %v339 = vunpack.c.h.b16 %v54
    %v340 = vunpack.c.l.b16 %v55
    %v341 = vunpack.c.h.b16 %v55
    %v342 = vunpack.c.l.b16 %v56
    %v343 = vunpack.c.h.b16 %v56
    %v344 = vunpack.c.l.b16 %v57
    %v345 = vunpack.c.h.b16 %v57
    %v346 = vunpack.c.l.b16 %v58
    %v347 = vunpack.c.h.b16 %v58
    %v348 = vunpack.c.l.b16 %v59
    %v349 = vunpack.c.h.b16 %v59
    %v350 = vunpack.c.l.b16 %v60
    %v351 = vunpack.c.h.b16 %v60
    %v352 = vunpack.c.l.b16 %v61
    %v353 = vunpack.c.h.b16 %v61
    %v354 = vunpack.c.l.b16 %v62
    %v355 = vunpack.c.h.b16 %v62
    %v356 = vunpack.c.l.b16 %v63
    %v357 = vunpack.c.h.b16 %v63
    %v358 = vunpack.c.l.b16 %v64
    %v359 = vunpack.c.h.b16 %v64
    %v360 = vunpack.c.l.b16 %v65
    %v361 = vunpack.c.h.b16 %v65
    %v362 = vunpack.c.l.b16 %v66
    %v363 = vunpack.c.h.b16 %v66
    %v364 = vunpack.c.l.b16 %v67
    %v365 = vunpack.c.h.b16 %v67
    %v366 = vunpack.c.l.b16 %v68
    %v367 = vunpack.c.h.b16 %v68
    %v368 = vunpack.c.l.b16 %v69
    %v369 = vunpack.c.h.b16 %v69
    %v370 = vunpack.c.l.b16 %v70
    %v371 = vunpack.c.h.b16 %v70
    %v372 = vunpack.c.l.b16 %v71
    %v373 = vunpack.c.h.b16 %v71
    %v374 = vunpack.c.l.b16 %v72
    %v375 = vunpack.c.h.b16 %v72
    %v376 = vunpack.c.l.b16 %v73
    %v377 = vunpack.c.h.b16 %v73
    %v378 = vunpack.c.l.b16 %v74
    %v379 = vunpack.c.h.b16 %v74
    %v380 = vunpack.c.l.b16 %v75
    %v381 = vunpack.c.h.b16 %v75
    %v382 = vunpack.c.l.b16 %v76
    %v383 = vunpack.c.h.b16 %v76
    %v384 = vunpack.c.l.b16 %v77
    %v385 = vunpack.c.h.b16 %v77
    %v386 = vunpack.c.l.b16 %v78
    %v387 = vunpack.c.h.b16 %v78
    %v388 = vunpack.c.l.b16 %v79
    %v389 = vunpack.c.h.b16 %v79
    %v390 = vunpack.c.l.b16 %v80
    %v391 = vunpack.c.h.b16 %v80
    %v392 = vunpack.c.l.b16 %v81
    %v393 = vunpack.c.h.b16 %v81
    %v394 = vunpack.c.l.b16 %v82
    %v395 = vunpack.c.h.b16 %v82
    %v396 = vunpack.c.l.b16 %v83
    %v397 = vunpack.c.h.b16 %v83
    %v398 = vunpack.c.l.b16 %v84
    %v399 = vunpack.c.h.b16 %v84
    %v400 = vunpack.c.l.b16 %v85
    %v401 = vunpack.c.h.b16 %v85
    %v402 = vunpack.c.l.b16 %v86
    %v403 = vunpack.c.h.b16 %v86
    %v404 = vunpack.c.l.b16 %v87
    %v405 = vunpack.c.h.b16 %v87
    %v406 = vunpack.c.l.b16 %v88
    %v407 = vunpack.c.h.b16 %v88
    %v408 = vunpack.c.l.b16 %v89
    %v409 = vunpack.c.h.b16 %v89
    %v410 = vunpack.c.l.b16 %v90
    %v411 = vunpack.c.h.b16 %v90
    %v412 = vunpack.c.l.b16 %v91
    %v413 = vunpack.c.h.b16 %v91
    %v414 = vunpack.c.l.b16 %v92
    %v415 = vunpack.c.h.b16 %v92
    %v416 = vunpack.c.l.b16 %v93
    %v417 = vunpack.c.h.b16 %v93
    %v418 = vunpack.c.l.b16 %v94
    %v419 = vunpack.c.h.b16 %v94
    %v420 = vunpack.c.l.b16 %v95
    %v421 = vunpack.c.h.b16 %v95
    %v422 = vunpack.c.l.b16 %v96
    %v423 = vunpack.c.h.b16 %v96
    %v424 = vunpack.c.l.b16 %v97
    %v425 = vunpack.c.h.b16 %v97
    %v426 = vunpack.c.l.b16 %v98
    %v427 = vunpack.c.h.b16 %v98
    %v428 = vunpack.c.l.b16 %v99
    %v429 = vunpack.c.h.b16 %v99
    %v430 = vunpack.c.l.b16 %v100
    %v431 = vunpack.c.h.b16 %v100
    %v432 = vunpack.c.l.b16 %v101
    %v433 = vunpack.c.h.b16 %v101
    %v434 = vunpack.c.l.b16 %v102
    %v435 = vunpack.c.h.b16 %v102
    %v436 = vunpack.c.l.b16 %v103
    %v437 = vunpack.c.h.b16 %v103
    %v438 = vunpack.c.l.b16 %v104
    %v439 = vunpack.c.h.b16 %v104
    %v440 = vunpack.c.l.b16 %v105
    %v441 = vunpack.c.h.b16 %v105
    %v442 = vunpack.c.l.b16 %v106
    %v443 = vunpack.c.h.b16 %v106
    %v444 = vunpack.c.l.b16 %v107
    %v445 = vunpack.c.h.b16 %v107
    %v446 = vunpack.c.l.b16 %v108
    %v447 = vunpack.c.h.b16 %v108
    %v448 = vunpack.c.l.b16 %v109
    %v449 = vunpack.c.h.b16 %v109
    %v450 = vunpack.c.l.b16 %v110
    %v451 = vunpack.c.h.b16 %v110
    %v452 = vunpack.c.l.b16 %v111
    %v453 = vunpack.c.h.b16 %v111
    %v454 = vunpack.c.l.b16 %v112
    %v455 = vunpack.c.h.b16 %v112
    %v456 = vunpack.c.l.b16 %v113
    %v457 = vunpack.c.h.b16 %v113
    %v458 = vunpack.c.l.b16 %v114
    %v459 = vunpack.c.h.b16 %v114
    %v460 = vunpack.c.l.b16 %v115
    %v461 = vunpack.c.h.b16 %v115
    %v462 = vunpack.c.l.b16 %v116
    %v463 = vunpack.c.h.b16 %v116
    %v464 = vunpack.c.l.b16 %v117
    %v465 = vunpack.c.h.b16 %v117
    %v466 = vunpack.c.l.b16 %v118
    %v467 = vunpack.c.h.b16 %v118
    %v468 = vunpack.c.l.b16 %v119
    %v469 = vunpack.c.h.b16 %v119
    %v470 = vunpack.c.l.b16 %v120
    %v471 = vunpack.c.h.b16 %v120
    %v472 = vunpack.c.l.b16 %v121
    %v473 = vunpack.c.h.b16 %v121
    %v474 = vunpack.c.l.b16 %v122
    %v475 = vunpack.c.h.b16 %v122
    %v476 = vunpack.c.l.b16 %v123
    %v477 = vunpack.c.h.b16 %v123
    %v478 = vunpack.c.l.b16 %v124
    %v479 = vunpack.c.h.b16 %v124
    %v480 = vunpack.c.l.b16 %v125
    %v481 = vunpack.c.h.b16 %v125
    %v482 = vunpack.c.l.b16 %v126
    %v483 = vunpack.c.h.b16 %v126
    %v484 = vunpack.c.l.b16 %v127
    %v485 = vunpack.c.h.b16 %v127
    %v486 = vunpack.c.l.b16 %v128
    %v487 = vunpack.c.h.b16 %v128
    %v488 = vunpack.c.l.b16 %v129
    %v489 = vunpack.c.h.b16 %v129
    %v490 = vunpack.c.l.b16 %v130
    %v491 = vunpack.c.h.b16 %v130
    %v492 = vunpack.c.l.b16 %v131
    %v493 = vunpack.c.h.b16 %v131
    %v494 = vunpack.c.l.b16 %v132
    %v495 = vunpack.c.h.b16 %v132
    %v496 = vunpack.c.l.b16 %v133
    %v497 = vunpack.c.h.b16 %v133
    %v498 = vunpack.c.l.b16 %v134
    %v499 = vunpack.c.h.b16 %v134
    %v500 = vunpack.c.l.b16 %v135
    %v501 = vunpack.c.h.b16 %v135
    %v502 = vunpack.c.l.b16 %v136
    %v503 = vunpack.c.h.b16 %v136
    %v504 = vunpack.c.l.b16 %v137
    %v505 = vunpack.c.h.b16 %v137
    %v506 = vunpack.c.l.b16 %v138
    %v507 = vunpack.c.h.b16 %v138
    %v508 = vunpack.c.l.b16 %v139
    %v509 = vunpack.c.h.b16 %v139
    %v510 = vunpack.c.l.b16 %v140
    %v511 = vunpack.c.h.b16 %v140
    %v512 = vunpack.c.l.b16 %v141
    %v513 = vunpack.c.h.b16 %v141
    %v514 = vunpack.c.l.b16 %v142
    %v515 = vunpack.c.h.b16 %v142
    %v516 = vunpack.c.l.b16 %v143
    %v517 = vunpack.c.h.b16 %v143
    %v518 = vunpack.c.l.b16 %v144
    %v519 = vunpack.c.h.b16 %v144
    %v520 = vunpack.c.l.b16 %v145
    %v521 = vunpack.c.h.b16 %v145
    %v522 = vunpack.c.l.b16 %v146
    %v523 = vunpack.c.h.b16 %v146
    %v524 = vunpack.c.l.b16 %v147
    %v525 = vunpack.c.h.b16 %v147
    %v526 = vunpack.c.l.b16 %v148
    %v527 = vunpack.c.h.b16 %v148
    %v528 = vunpack.c.l.b16 %v149
    %v529 = vunpack.c.h.b16 %v149
    %v530 = vunpack.c.l.b16 %v150
    %v531 = vunpack.c.h.b16 %v150
    %v532 = vunpack.c.l.b16 %v151
    %v533 = vunpack.c.h.b16 %v151
    %v534 = vunpack.c.l.b16 %v152
    %v535 = vunpack.c.h.b16 %v152
    %v536 = vunpack.c.l.b16 %v153
    %v537 = vunpack.c.h.b16 %v153
    %v538 = vunpack.c.l.b16 %v154
    %v539 = vunpack.c.h.b16 %v154
    %v540 = vunpack.c.l.b16 %v155
    %v541 = vunpack.c.h.b16 %v155
    %v542 = vunpack.c.l.b16 %v156
    %v543 = vunpack.c.h.b16 %v156
    %v544 = vunpack.c.l.b16 %v157
    %v545 = vunpack.c.h.b16 %v157
    %v546 = vunpack.c.l.b16 %v158
    %v547 = vunpack.c.h.b16 %v158
    %v548 = vunpack.c.l.b16 %v159
    %v549 = vunpack.c.h.b16 %v159
    %v550 = vunpack.c.l.b16 %v160
    %v551 = vunpack.c.h.b16 %v160
    %v552 = vunpack.c.l.b16 %v161
    %v553 = vunpack.c.h.b16 %v161
    %v554 = vunpack.c.l.b16 %v162
    %v555 = vunpack.c.h.b16 %v162
    %v556 = vunpack.c.l.b16 %v163
    %v557 = vunpack.c.h.b16 %v163
    %v558 = vunpack.c.l.b16 %v164
    %v559 = vunpack.c.h.b16 %v164
    %v560 = vunpack.c.l.b16 %v165
    %v561 = vunpack.c.h.b16 %v165
    %v562 = vunpack.c.l.b16 %v166
    %v563 = vunpack.c.h.b16 %v166
    %v564 = vunpack.c.l.b16 %v167
    %v565 = vunpack.c.h.b16 %v167
    %v566 = vunpack.c.l.b16 %v168
    %v567 = vunpack.c.h.b16 %v168
    %v568 = vunpack.c.l.b16 %v169
    %v569 = vunpack.c.h.b16 %v169
    %v570 = vunpack.c.l.b16 %v170
    %v571 = vunpack.c.h.b16 %v170
    %v572 = vunpack.c.l.b16 %v171
    %v573 = vunpack.c.h.b16 %v171
    %v574 = vunpack.c.l.b16 %v172
    %v575 = vunpack.c.h.b16 %v172
    %v576 = vunpack.c.l.b16 %v173
    %v577 = vunpack.c.h.b16 %v173
    %v578 = vunpack.c.l.b16 %v174
    %v579 = vunpack.c.h.b16 %v174
    %v580 = vunpack.c.l.b16 %v175
    %v581 = vunpack.c.h.b16 %v175
    %v582 = vunpack.c.l.b16 %v176
    %v583 = vunpack.c.h.b16 %v176
    %v584 = vunpack.c.l.b16 %v177
    %v585 = vunpack.c.h.b16 %v177
    %v586 = vunpack.c.l.b16 %v178
    %v587 = vunpack.c.h.b16 %v178
    %v588 = vpack.c.b16 %v340, %v332
    %v589 = vpack.c.b16 %v341, %v333
    %v590 = vpack.c.b16 %v342, %v334
    %v591 = vpack.c.b16 %v343, %v335
    %v592 = vpack.c.b16 %v344, %v336
    %v593 = vpack.c.b16 %v345, %v337
    %v594 = vpack.c.b16 %v346, %v338
    %v595 = vpack.c.b16 %v347, %v339
    %v596 = vpack.c.b16 %v356, %v348
    %v597 = vpack.c.b16 %v357, %v349
    %v598 = vpack.c.b16 %v358, %v350
    %v599 = vpack.c.b16 %v359, %v351
    %v600 = vpack.c.b16 %v360, %v352
    %v601 = vpack.c.b16 %v361, %v353
    %v602 = vpack.c.b16 %v362, %v354
    %v603 = vpack.c.b16 %v363, %v355
    %v604 = vpack.c.b16 %v372, %v364
    %v605 = vpack.c.b16 %v373, %v365
    %v606 = vpack.c.b16 %v374, %v366
    %v607 = vpack.c.b16 %v375, %v367
    %v608 = vpack.c.b16 %v376, %v368
    %v609 = vpack.c.b16 %v377, %v369
    %v610 = vpack.c.b16 %v378, %v370
    %v611 = vpack.c.b16 %v379, %v371
    %v612 = vpack.c.b16 %v388, %v380
    %v613 = vpack.c.b16 %v389, %v381
    %v614 = vpack.c.b16 %v390, %v382
    %v615 = vpack.c.b16 %v391, %v383
    %v616 = vpack.c.b16 %v392, %v384
    %v617 = vpack.c.b16 %v393, %v385
    %v618 = vpack.c.b16 %v394, %v386
    %v619 = vpack.c.b16 %v395, %v387
    %v620 = vpack.c.b16 %v404, %v396
    %v621 = vpack.c.b16 %v405, %v397
    %v622 = vpack.c.b16 %v406, %v398
    %v623 = vpack.c.b16 %v407, %v399
    %v624 = vpack.c.b16 %v408, %v400
    %v625 = vpack.c.b16 %v409, %v401
    %v626 = vpack.c.b16 %v410, %v402
    %v627 = vpack.c.b16 %v411, %v403
    %v628 = vpack.c.b16 %v420, %v412
    %v629 = vpack.c.b16 %v421, %v413
    %v630 = vpack.c.b16 %v422, %v414
    %v631 = vpack.c.b16 %v423, %v415
    %v632 = vpack.c.b16 %v424, %v416
    %v633 = vpack.c.b16 %v425, %v417
    %v634 = vpack.c.b16 %v426, %v418
    %v635 = vpack.c.b16 %v427, %v419
    %v636 = vpack.c.b16 %v436, %v428
    %v637 = vpack.c.b16 %v437, %v429
    %v638 = vpack.c.b16 %v438, %v430
    %v639 = vpack.c.b16 %v439, %v431
    %v640 = vpack.c.b16 %v440, %v432
    %v641 = vpack.c.b16 %v441, %v433
    %v642 = vpack.c.b16 %v442, %v434
    %v643 = vpack.c.b16 %v443, %v435
    %v644 = vpack.c.b16 %v452, %v444
    %v645 = vpack.c.b16 %v453, %v445
    %v646 = vpack.c.b16 %v454, %v446
    %v647 = vpack.c.b16 %v455, %v447
    %v648 = vpack.c.b16 %v456, %v448
    %v649 = vpack.c.b16 %v457, %v449
    %v650 = vpack.c.b16 %v458, %v450
    %v651 = vpack.c.b16 %v459, %v451
    %v652 = vpack.c.b16 %v468, %v460
    %v653 = vpack.c.b16 %v469, %v461
    %v654 = vpack.c.b16 %v470, %v462
    %v655 = vpack.c.b16 %v471, %v463
    %v656 = vpack.c.b16 %v472, %v464
    %v657 = vpack.c.b16 %v473, %v465
    %v658 = vpack.c.b16 %v474, %v466
    %v659 = vpack.c.b16 %v475, %v467
    %v660 = vpack.c.b16 %v484, %v476
    %v661 = vpack.c.b16 %v485, %v477
    %v662 = vpack.c.b16 %v486, %v478
    %v663 = vpack.c.b16 %v487, %v479
    %v664 = vpack.c.b16 %v488, %v480
    %v665 = vpack.c.b16 %v489, %v481
    %v666 = vpack.c.b16 %v490, %v482
    %v667 = vpack.c.b16 %v491, %v483
    %v668 = vpack.c.b16 %v500, %v492
    %v669 = vpack.c.b16 %v501, %v493
    %v670 = vpack.c.b16 %v502, %v494
    %v671 = vpack.c.b16 %v503, %v495
    %v672 = vpack.c.b16 %v504, %v496
    %v673 = vpack.c.b16 %v505, %v497
    %v674 = vpack.c.b16 %v506, %v498
    %v675 = vpack.c.b16 %v507, %v499
    %v676 = vpack.c.b16 %v516, %v508
    %v677 = vpack.c.b16 %v517, %v509
    %v678 = vpack.c.b16 %v518, %v510
    %v679 = vpack.c.b16 %v519, %v511
    %v680 = vpack.c.b16 %v520, %v512
    %v681 = vpack.c.b16 %v521, %v513
    %v682 = vpack.c.b16 %v522, %v514
    %v683 = vpack.c.b16 %v523, %v515
    %v684 = vpack.c.b16 %v532, %v524
    %v685 = vpack.c.b16 %v533, %v525
    %v686 = vpack.c.b16 %v534, %v526
    %v687 = vpack.c.b16 %v535, %v527
    %v688 = vpack.c.b16 %v536, %v528
    %v689 = vpack.c.b16 %v537, %v529
    %v690 = vpack.c.b16 %v538, %v530
    %v691 = vpack.c.b16 %v539, %v531
    %v692 = vpack.c.b16 %v548, %v540
    %v693 = vpack.c.b16 %v549, %v541
    %v694 = vpack.c.b16 %v550, %v542
    %v695 = vpack.c.b16 %v551, %v543
    %v696 = vpack.c.b16 %v552, %v544
    %v697 = vpack.c.b16 %v553, %v545
    %v698 = vpack.c.b16 %v554, %v546
    %v699 = vpack.c.b16 %v555, %v547
    %v700 = vpack.c.b16 %v564, %v556
    %v701 = vpack.c.b16 %v565, %v557
    %v702 = vpack.c.b16 %v566, %v558
    %v703 = vpack.c.b16 %v567, %v559
    %v704 = vpack.c.b16 %v568, %v560
    %v705 = vpack.c.b16 %v569, %v561
    %v706 = vpack.c.b16 %v570, %v562
    %v707 = vpack.c.b16 %v571, %v563
    %v708 = vpack.c.b16 %v580, %v572
    %v709 = vpack.c.b16 %v581, %v573
    %v710 = vpack.c.b16 %v582, %v574
    %v711 = vpack.c.b16 %v583, %v575
    %v712 = vpack.c.b16 %v584, %v576
    %v713 = vpack.c.b16 %v585, %v577
    %v714 = vpack.c.b16 %v586, %v578
    %v715 = vpack.c.b16 %v587, %v579
    %844 = vmatpush.bf16.msra.mxu0 %v644
    %845 = vmatpush.bf16.msra.mxu0 %v636
    %846 = vmatpush.bf16.msra.mxu0 %v628
    %847 = vmatpush.bf16.msra.mxu0 %v620
    %848 = vmatpush.bf16.msra.mxu0 %v612
    %849 = vmatpush.bf16.msra.mxu0 %v604
    %850 = vmatpush.bf16.msra.mxu0 %v596
    %851 = vmatpush.bf16.msra.mxu0 %v588
    %852 = vmatmul.bf16.gmra.mxu0 %v200
    %v853 = vpop.f32.mrf.mxu0
    %v854 = vadd.f32 %v181, %v853
    %v855 = vpop.f32.mrf.mxu0
    %856 = vdwg.mxu0
    %857 = vmatpush.bf16.msra.mxu0 %v708
    %858 = vmatpush.bf16.msra.mxu0 %v700
    %859 = vmatpush.bf16.msra.mxu0 %v692
    %860 = vmatpush.bf16.msra.mxu0 %v684
    %861 = vmatpush.bf16.msra.mxu0 %v676
    %862 = vmatpush.bf16.msra.mxu0 %v668
    %863 = vmatpush.bf16.msra.mxu0 %v660
    %864 = vmatpush.bf16.msra.mxu0 %v652
    %865 = vmatmul.bf16.gmra.mxu0 %v201
    %v866 = vpop.f32.mrf.mxu0
    %v867 = vadd.f32 %v854, %v866
    %v868 = vpop.f32.mrf.mxu0
    %869 = vdwg.mxu0
    %870 = vmatpush.bf16.msra.mxu0 %v645
    %871 = vmatpush.bf16.msra.mxu0 %v637
    %872 = vmatpush.bf16.msra.mxu0 %v629
    %873 = vmatpush.bf16.msra.mxu0 %v621
    %874 = vmatpush.bf16.msra.mxu0 %v613
    %875 = vmatpush.bf16.msra.mxu0 %v605
    %876 = vmatpush.bf16.msra.mxu0 %v597
    %877 = vmatpush.bf16.msra.mxu0 %v589
    %878 = vmatmul.bf16.gmra.mxu0 %v200
    %v879 = vpop.f32.mrf.mxu0
    %v880 = vadd.f32 %v182, %v879
    %v881 = vpop.f32.mrf.mxu0
    %882 = vdwg.mxu0
    %883 = vmatpush.bf16.msra.mxu0 %v709
    %884 = vmatpush.bf16.msra.mxu0 %v701
    %885 = vmatpush.bf16.msra.mxu0 %v693
    %886 = vmatpush.bf16.msra.mxu0 %v685
    %887 = vmatpush.bf16.msra.mxu0 %v677
    %888 = vmatpush.bf16.msra.mxu0 %v669
    %889 = vmatpush.bf16.msra.mxu0 %v661
    %890 = vmatpush.bf16.msra.mxu0 %v653
    %891 = vmatmul.bf16.gmra.mxu0 %v201
    %v892 = vpop.f32.mrf.mxu0
    %v893 = vadd.f32 %v880, %v892
    %v894 = vpop.f32.mrf.mxu0
    %895 = vdwg.mxu0
    %896 = vmatpush.bf16.msra.mxu0 %v646
    %897 = vmatpush.bf16.msra.mxu0 %v638
    %898 = vmatpush.bf16.msra.mxu0 %v630
    %899 = vmatpush.bf16.msra.mxu0 %v622
    %900 = vmatpush.bf16.msra.mxu0 %v614
    %901 = vmatpush.bf16.msra.mxu0 %v606
    %902 = vmatpush.bf16.msra.mxu0 %v598
    %903 = vmatpush.bf16.msra.mxu0 %v590
    %904 = vmatmul.bf16.gmra.mxu0 %v200
    %v905 = vpop.f32.mrf.mxu0
    %v906 = vadd.f32 %v183, %v905
    %v907 = vpop.f32.mrf.mxu0
    %908 = vdwg.mxu0
    %909 = vmatpush.bf16.msra.mxu0 %v710
    %910 = vmatpush.bf16.msra.mxu0 %v702
    %911 = vmatpush.bf16.msra.mxu0 %v694
    %912 = vmatpush.bf16.msra.mxu0 %v686
    %913 = vmatpush.bf16.msra.mxu0 %v678
    %914 = vmatpush.bf16.msra.mxu0 %v670
    %915 = vmatpush.bf16.msra.mxu0 %v662
    %916 = vmatpush.bf16.msra.mxu0 %v654
    %917 = vmatmul.bf16.gmra.mxu0 %v201
    %v918 = vpop.f32.mrf.mxu0
    %v919 = vadd.f32 %v906, %v918
    %v920 = vpop.f32.mrf.mxu0
    %921 = vdwg.mxu0
    %922 = vmatpush.bf16.msra.mxu0 %v647
    %923 = vmatpush.bf16.msra.mxu0 %v639
    %924 = vmatpush.bf16.msra.mxu0 %v631
    %925 = vmatpush.bf16.msra.mxu0 %v623
    %926 = vmatpush.bf16.msra.mxu0 %v615
    %927 = vmatpush.bf16.msra.mxu0 %v607
    %928 = vmatpush.bf16.msra.mxu0 %v599
    %929 = vmatpush.bf16.msra.mxu0 %v591
    %930 = vmatmul.bf16.gmra.mxu0 %v200
    %v931 = vpop.f32.mrf.mxu0
    %v932 = vadd.f32 %v184, %v931
    %v933 = vpop.f32.mrf.mxu0
    %934 = vdwg.mxu0
    %935 = vmatpush.bf16.msra.mxu0 %v711
    %936 = vmatpush.bf16.msra.mxu0 %v703
    %937 = vmatpush.bf16.msra.mxu0 %v695
    %938 = vmatpush.bf16.msra.mxu0 %v687
    %939 = vmatpush.bf16.msra.mxu0 %v679
    %940 = vmatpush.bf16.msra.mxu0 %v671
    %941 = vmatpush.bf16.msra.mxu0 %v663
    %942 = vmatpush.bf16.msra.mxu0 %v655
    %943 = vmatmul.bf16.gmra.mxu0 %v201
    %v944 = vpop.f32.mrf.mxu0
    %v945 = vadd.f32 %v932, %v944
    %v946 = vpop.f32.mrf.mxu0
    %947 = vdwg.mxu0
    %948 = vmatpush.bf16.msra.mxu0 %v648
    %949 = vmatpush.bf16.msra.mxu0 %v640
    %950 = vmatpush.bf16.msra.mxu0 %v632
    %951 = vmatpush.bf16.msra.mxu0 %v624
    %952 = vmatpush.bf16.msra.mxu0 %v616
    %953 = vmatpush.bf16.msra.mxu0 %v608
    %954 = vmatpush.bf16.msra.mxu0 %v600
    %955 = vmatpush.bf16.msra.mxu0 %v592
    %956 = vmatmul.bf16.gmra.mxu0 %v200
    %v957 = vpop.f32.mrf.mxu0
    %v958 = vadd.f32 %v185, %v957
    %v959 = vpop.f32.mrf.mxu0
    %960 = vdwg.mxu0
    %961 = vmatpush.bf16.msra.mxu0 %v712
    %962 = vmatpush.bf16.msra.mxu0 %v704
    %963 = vmatpush.bf16.msra.mxu0 %v696
    %964 = vmatpush.bf16.msra.mxu0 %v688
    %965 = vmatpush.bf16.msra.mxu0 %v680
    %966 = vmatpush.bf16.msra.mxu0 %v672
    %967 = vmatpush.bf16.msra.mxu0 %v664
    %968 = vmatpush.bf16.msra.mxu0 %v656
    %969 = vmatmul.bf16.gmra.mxu0 %v201
    %v970 = vpop.f32.mrf.mxu0
    %v971 = vadd.f32 %v958, %v970
    %v972 = vpop.f32.mrf.mxu0
    %973 = vdwg.mxu0
    %974 = vmatpush.bf16.msra.mxu0 %v649
    %975 = vmatpush.bf16.msra.mxu0 %v641
    %976 = vmatpush.bf16.msra.mxu0 %v633
    %977 = vmatpush.bf16.msra.mxu0 %v625
    %978 = vmatpush.bf16.msra.mxu0 %v617
    %979 = vmatpush.bf16.msra.mxu0 %v609
    %980 = vmatpush.bf16.msra.mxu0 %v601
    %981 = vmatpush.bf16.msra.mxu0 %v593
    %982 = vmatmul.bf16.gmra.mxu0 %v200
    %v983 = vpop.f32.mrf.mxu0
    %v984 = vadd.f32 %v186, %v983
    %v985 = vpop.f32.mrf.mxu0
    %986 = vdwg.mxu0
    %987 = vmatpush.bf16.msra.mxu0 %v713
    %988 = vmatpush.bf16.msra.mxu0 %v705
    %989 = vmatpush.bf16.msra.mxu0 %v697
    %990 = vmatpush.bf16.msra.mxu0 %v689
    %991 = vmatpush.bf16.msra.mxu0 %v681
    %992 = vmatpush.bf16.msra.mxu0 %v673
    %993 = vmatpush.bf16.msra.mxu0 %v665
    %994 = vmatpush.bf16.msra.mxu0 %v657
    %995 = vmatmul.bf16.gmra.mxu0 %v201
    %v996 = vpop.f32.mrf.mxu0
    %v997 = vadd.f32 %v984, %v996
    %v998 = vpop.f32.mrf.mxu0
    %999 = vdwg.mxu0
    %1000 = vmatpush.bf16.msra.mxu0 %v650
    %1001 = vmatpush.bf16.msra.mxu0 %v642
    %1002 = vmatpush.bf16.msra.mxu0 %v634
    %1003 = vmatpush.bf16.msra.mxu0 %v626
    %1004 = vmatpush.bf16.msra.mxu0 %v618
    %1005 = vmatpush.bf16.msra.mxu0 %v610
    %1006 = vmatpush.bf16.msra.mxu0 %v602
    %1007 = vmatpush.bf16.msra.mxu0 %v594
    %1008 = vmatmul.bf16.gmra.mxu0 %v200
    %v1009 = vpop.f32.mrf.mxu0
    %v1010 = vadd.f32 %v187, %v1009
    %v1011 = vpop.f32.mrf.mxu0
    %1012 = vdwg.mxu0
    %1013 = vmatpush.bf16.msra.mxu0 %v714
    %1014 = vmatpush.bf16.msra.mxu0 %v706
    %1015 = vmatpush.bf16.msra.mxu0 %v698
    %1016 = vmatpush.bf16.msra.mxu0 %v690
    %1017 = vmatpush.bf16.msra.mxu0 %v682
    %1018 = vmatpush.bf16.msra.mxu0 %v674
    %1019 = vmatpush.bf16.msra.mxu0 %v666
    %1020 = vmatpush.bf16.msra.mxu0 %v658
    %1021 = vmatmul.bf16.gmra.mxu0 %v201
    %v1022 = vpop.f32.mrf.mxu0
    %v1023 = vadd.f32 %v1010, %v1022
    %v1024 = vpop.f32.mrf.mxu0
    %1025 = vdwg.mxu0
    %1026 = vmatpush.bf16.msra.mxu0 %v651
    %1027 = vmatpush.bf16.msra.mxu0 %v643
    %1028 = vmatpush.bf16.msra.mxu0 %v635
    %1029 = vmatpush.bf16.msra.mxu0 %v627
    %1030 = vmatpush.bf16.msra.mxu0 %v619
    %1031 = vmatpush.bf16.msra.mxu0 %v611
    %1032 = vmatpush.bf16.msra.mxu0 %v603
    %1033 = vmatpush.bf16.msra.mxu0 %v595
    %1034 = vmatmul.bf16.gmra.mxu0 %v200
    %v1035 = vpop.f32.mrf.mxu0
    %v1036 = vadd.f32 %v188, %v1035
    %v1037 = vpop.f32.mrf.mxu0
    %1038 = vdwg.mxu0
    %1039 = vmatpush.bf16.msra.mxu0 %v715
    %1040 = vmatpush.bf16.msra.mxu0 %v707
    %1041 = vmatpush.bf16.msra.mxu0 %v699
    %1042 = vmatpush.bf16.msra.mxu0 %v691
    %1043 = vmatpush.bf16.msra.mxu0 %v683
    %1044 = vmatpush.bf16.msra.mxu0 %v675
    %1045 = vmatpush.bf16.msra.mxu0 %v667
    %1046 = vmatpush.bf16.msra.mxu0 %v659
    %1047 = vmatmul.bf16.gmra.mxu0 %v201
    %v1048 = vpop.f32.mrf.mxu0
    %v1049 = vadd.f32 %v1036, %v1048
    %v1050 = vpop.f32.mrf.mxu0
    %1051 = vdwg.mxu0
    %1052 = vst [vmem:[#allocation2] sm:$0xff] %v867
    %1053 = vst [vmem:[#allocation2 + $0x8] sm:$0xff] %v893
    %1054 = vst [vmem:[#allocation2 + $0x10] sm:$0xff] %v919
    %1055 = vst [vmem:[#allocation2 + $0x18] sm:$0xff] %v945
    %1056 = vst [vmem:[#allocation2 + $0x20] sm:$0xff] %v971
    %1057 = vst [vmem:[#allocation2 + $0x28] sm:$0xff] %v997
    %1058 = vst [vmem:[#allocation2 + $0x30] sm:$0xff] %v1023
    %1059 = vst [vmem:[#allocation2 + $0x38] sm:$0xff] %v1049
    %v1060 = vld [vmem:[#allocation6] sm:$0xff]
    %v1061 = vld [vmem:[#allocation6 + $0x8] sm:$0xff]
    %v1062 = vld [vmem:[#allocation6 + $0x10] sm:$0xff]
    %v1063 = vld [vmem:[#allocation6 + $0x18] sm:$0xff]
    %v1064 = vld [vmem:[#allocation6 + $0x20] sm:$0xff]
    %v1065 = vld [vmem:[#allocation6 + $0x28] sm:$0xff]
    %v1066 = vld [vmem:[#allocation6 + $0x30] sm:$0xff]
    %v1067 = vld [vmem:[#allocation6 + $0x38] sm:$0xff]
    %v1068 = vld [vmem:[#allocation6 + $0x40] sm:$0xff]
    %v1069 = vld [vmem:[#allocation6 + $0x48] sm:$0xff]
    %v1070 = vld [vmem:[#allocation6 + $0x50] sm:$0xff]
    %v1071 = vld [vmem:[#allocation6 + $0x58] sm:$0xff]
    %v1072 = vld [vmem:[#allocation6 + $0x60] sm:$0xff]
    %v1073 = vld [vmem:[#allocation6 + $0x68] sm:$0xff]
    %v1074 = vld [vmem:[#allocation6 + $0x70] sm:$0xff]
    %v1075 = vld [vmem:[#allocation6 + $0x78] sm:$0xff]
    %v1076 = vld [vmem:[#allocation6 + $0x80] sm:$0xff]
    %v1077 = vld [vmem:[#allocation6 + $0x88] sm:$0xff]
    %v1078 = vld [vmem:[#allocation6 + $0x90] sm:$0xff]
    %v1079 = vld [vmem:[#allocation6 + $0x98] sm:$0xff]
    %v1080 = vld [vmem:[#allocation6 + $0xa0] sm:$0xff]
    %v1081 = vld [vmem:[#allocation6 + $0xa8] sm:$0xff]
    %v1082 = vld [vmem:[#allocation6 + $0xb0] sm:$0xff]
    %v1083 = vld [vmem:[#allocation6 + $0xb8] sm:$0xff]
    %v1084 = vld [vmem:[#allocation6 + $0xc0] sm:$0xff]
    %v1085 = vld [vmem:[#allocation6 + $0xc8] sm:$0xff]
    %v1086 = vld [vmem:[#allocation6 + $0xd0] sm:$0xff]
    %v1087 = vld [vmem:[#allocation6 + $0xd8] sm:$0xff]
    %v1088 = vld [vmem:[#allocation6 + $0xe0] sm:$0xff]
    %v1089 = vld [vmem:[#allocation6 + $0xe8] sm:$0xff]
    %v1090 = vld [vmem:[#allocation6 + $0xf0] sm:$0xff]
    %v1091 = vld [vmem:[#allocation6 + $0xf8] sm:$0xff]
    %v1092 = vld [vmem:[#allocation6 + $0x100] sm:$0xff]
    %v1093 = vld [vmem:[#allocation6 + $0x108] sm:$0xff]
    %v1094 = vld [vmem:[#allocation6 + $0x110] sm:$0xff]
    %v1095 = vld [vmem:[#allocation6 + $0x118] sm:$0xff]
    %v1096 = vld [vmem:[#allocation6 + $0x120] sm:$0xff]
    %v1097 = vld [vmem:[#allocation6 + $0x128] sm:$0xff]
    %v1098 = vld [vmem:[#allocation6 + $0x130] sm:$0xff]
    %v1099 = vld [vmem:[#allocation6 + $0x138] sm:$0xff]
    %v1100 = vld [vmem:[#allocation6 + $0x140] sm:$0xff]
    %v1101 = vld [vmem:[#allocation6 + $0x148] sm:$0xff]
    %v1102 = vld [vmem:[#allocation6 + $0x150] sm:$0xff]
    %v1103 = vld [vmem:[#allocation6 + $0x158] sm:$0xff]
    %v1104 = vld [vmem:[#allocation6 + $0x160] sm:$0xff]
    %v1105 = vld [vmem:[#allocation6 + $0x168] sm:$0xff]
    %v1106 = vld [vmem:[#allocation6 + $0x170] sm:$0xff]
    %v1107 = vld [vmem:[#allocation6 + $0x178] sm:$0xff]
    %v1108 = vld [vmem:[#allocation6 + $0x180] sm:$0xff]
    %v1109 = vld [vmem:[#allocation6 + $0x188] sm:$0xff]
    %v1110 = vld [vmem:[#allocation6 + $0x190] sm:$0xff]
    %v1111 = vld [vmem:[#allocation6 + $0x198] sm:$0xff]
    %v1112 = vld [vmem:[#allocation6 + $0x1a0] sm:$0xff]
    %v1113 = vld [vmem:[#allocation6 + $0x1a8] sm:$0xff]
    %v1114 = vld [vmem:[#allocation6 + $0x1b0] sm:$0xff]
    %v1115 = vld [vmem:[#allocation6 + $0x1b8] sm:$0xff]
    %v1116 = vld [vmem:[#allocation6 + $0x1c0] sm:$0xff]
    %v1117 = vld [vmem:[#allocation6 + $0x1c8] sm:$0xff]
    %v1118 = vld [vmem:[#allocation6 + $0x1d0] sm:$0xff]
    %v1119 = vld [vmem:[#allocation6 + $0x1d8] sm:$0xff]
    %v1120 = vld [vmem:[#allocation6 + $0x1e0] sm:$0xff]
    %v1121 = vld [vmem:[#allocation6 + $0x1e8] sm:$0xff]
    %v1122 = vld [vmem:[#allocation6 + $0x1f0] sm:$0xff]
    %v1123 = vld [vmem:[#allocation6 + $0x1f8] sm:$0xff]
    %v1124 = vld [vmem:[#allocation6 + $0x200] sm:$0xff]
    %v1125 = vld [vmem:[#allocation6 + $0x208] sm:$0xff]
    %v1126 = vld [vmem:[#allocation6 + $0x210] sm:$0xff]
    %v1127 = vld [vmem:[#allocation6 + $0x218] sm:$0xff]
    %v1128 = vld [vmem:[#allocation6 + $0x220] sm:$0xff]
    %v1129 = vld [vmem:[#allocation6 + $0x228] sm:$0xff]
    %v1130 = vld [vmem:[#allocation6 + $0x230] sm:$0xff]
    %v1131 = vld [vmem:[#allocation6 + $0x238] sm:$0xff]
    %v1132 = vld [vmem:[#allocation6 + $0x240] sm:$0xff]
    %v1133 = vld [vmem:[#allocation6 + $0x248] sm:$0xff]
    %v1134 = vld [vmem:[#allocation6 + $0x250] sm:$0xff]
    %v1135 = vld [vmem:[#allocation6 + $0x258] sm:$0xff]
    %v1136 = vld [vmem:[#allocation6 + $0x260] sm:$0xff]
    %v1137 = vld [vmem:[#allocation6 + $0x268] sm:$0xff]
    %v1138 = vld [vmem:[#allocation6 + $0x270] sm:$0xff]
    %v1139 = vld [vmem:[#allocation6 + $0x278] sm:$0xff]
    %v1140 = vld [vmem:[#allocation6 + $0x280] sm:$0xff]
    %v1141 = vld [vmem:[#allocation6 + $0x288] sm:$0xff]
    %v1142 = vld [vmem:[#allocation6 + $0x290] sm:$0xff]
    %v1143 = vld [vmem:[#allocation6 + $0x298] sm:$0xff]
    %v1144 = vld [vmem:[#allocation6 + $0x2a0] sm:$0xff]
    %v1145 = vld [vmem:[#allocation6 + $0x2a8] sm:$0xff]
    %v1146 = vld [vmem:[#allocation6 + $0x2b0] sm:$0xff]
    %v1147 = vld [vmem:[#allocation6 + $0x2b8] sm:$0xff]
    %v1148 = vld [vmem:[#allocation6 + $0x2c0] sm:$0xff]
    %v1149 = vld [vmem:[#allocation6 + $0x2c8] sm:$0xff]
    %v1150 = vld [vmem:[#allocation6 + $0x2d0] sm:$0xff]
    %v1151 = vld [vmem:[#allocation6 + $0x2d8] sm:$0xff]
    %v1152 = vld [vmem:[#allocation6 + $0x2e0] sm:$0xff]
    %v1153 = vld [vmem:[#allocation6 + $0x2e8] sm:$0xff]
    %v1154 = vld [vmem:[#allocation6 + $0x2f0] sm:$0xff]
    %v1155 = vld [vmem:[#allocation6 + $0x2f8] sm:$0xff]
    %v1156 = vld [vmem:[#allocation6 + $0x300] sm:$0xff]
    %v1157 = vld [vmem:[#allocation6 + $0x308] sm:$0xff]
    %v1158 = vld [vmem:[#allocation6 + $0x310] sm:$0xff]
    %v1159 = vld [vmem:[#allocation6 + $0x318] sm:$0xff]
    %v1160 = vld [vmem:[#allocation6 + $0x320] sm:$0xff]
    %v1161 = vld [vmem:[#allocation6 + $0x328] sm:$0xff]
    %v1162 = vld [vmem:[#allocation6 + $0x330] sm:$0xff]
    %v1163 = vld [vmem:[#allocation6 + $0x338] sm:$0xff]
    %v1164 = vld [vmem:[#allocation6 + $0x340] sm:$0xff]
    %v1165 = vld [vmem:[#allocation6 + $0x348] sm:$0xff]
    %v1166 = vld [vmem:[#allocation6 + $0x350] sm:$0xff]
    %v1167 = vld [vmem:[#allocation6 + $0x358] sm:$0xff]
    %v1168 = vld [vmem:[#allocation6 + $0x360] sm:$0xff]
    %v1169 = vld [vmem:[#allocation6 + $0x368] sm:$0xff]
    %v1170 = vld [vmem:[#allocation6 + $0x370] sm:$0xff]
    %v1171 = vld [vmem:[#allocation6 + $0x378] sm:$0xff]
    %v1172 = vld [vmem:[#allocation6 + $0x380] sm:$0xff]
    %v1173 = vld [vmem:[#allocation6 + $0x388] sm:$0xff]
    %v1174 = vld [vmem:[#allocation6 + $0x390] sm:$0xff]
    %v1175 = vld [vmem:[#allocation6 + $0x398] sm:$0xff]
    %v1176 = vld [vmem:[#allocation6 + $0x3a0] sm:$0xff]
    %v1177 = vld [vmem:[#allocation6 + $0x3a8] sm:$0xff]
    %v1178 = vld [vmem:[#allocation6 + $0x3b0] sm:$0xff]
    %v1179 = vld [vmem:[#allocation6 + $0x3b8] sm:$0xff]
    %v1180 = vld [vmem:[#allocation6 + $0x3c0] sm:$0xff]
    %v1181 = vld [vmem:[#allocation6 + $0x3c8] sm:$0xff]
    %v1182 = vld [vmem:[#allocation6 + $0x3d0] sm:$0xff]
    %v1183 = vld [vmem:[#allocation6 + $0x3d8] sm:$0xff]
    %v1184 = vld [vmem:[#allocation6 + $0x3e0] sm:$0xff]
    %v1185 = vld [vmem:[#allocation6 + $0x3e8] sm:$0xff]
    %v1186 = vld [vmem:[#allocation6 + $0x3f0] sm:$0xff]
    %v1187 = vld [vmem:[#allocation6 + $0x3f8] sm:$0xff]
    %v1188 = vld [vmem:[#allocation2] sm:$0x3]
    %v1189 = vld [vmem:[#allocation2 + $0x8] sm:$0x3]
    %v1190 = vld [vmem:[#allocation2 + $0x10] sm:$0x3]
    %v1191 = vld [vmem:[#allocation2 + $0x18] sm:$0x3]
    %v1192 = vld [vmem:[#allocation2 + $0x20] sm:$0x3]
    %v1193 = vld [vmem:[#allocation2 + $0x28] sm:$0x3]
    %v1194 = vld [vmem:[#allocation2 + $0x30] sm:$0x3]
    %v1195 = vld [vmem:[#allocation2 + $0x38] sm:$0x3]
    %v1324 = vunpack.c.l.b16 %v1060
    %v1325 = vunpack.c.h.b16 %v1060
    %v1326 = vunpack.c.l.b16 %v1061
    %v1327 = vunpack.c.h.b16 %v1061
    %v1328 = vunpack.c.l.b16 %v1062
    %v1329 = vunpack.c.h.b16 %v1062
    %v1330 = vunpack.c.l.b16 %v1063
    %v1331 = vunpack.c.h.b16 %v1063
    %v1332 = vunpack.c.l.b16 %v1064
    %v1333 = vunpack.c.h.b16 %v1064
    %v1334 = vunpack.c.l.b16 %v1065
    %v1335 = vunpack.c.h.b16 %v1065
    %v1336 = vunpack.c.l.b16 %v1066
    %v1337 = vunpack.c.h.b16 %v1066
    %v1338 = vunpack.c.l.b16 %v1067
    %v1339 = vunpack.c.h.b16 %v1067
    %v1340 = vunpack.c.l.b16 %v1068
    %v1341 = vunpack.c.h.b16 %v1068
    %v1342 = vunpack.c.l.b16 %v1069
    %v1343 = vunpack.c.h.b16 %v1069
    %v1344 = vunpack.c.l.b16 %v1070
    %v1345 = vunpack.c.h.b16 %v1070
    %v1346 = vunpack.c.l.b16 %v1071
    %v1347 = vunpack.c.h.b16 %v1071
    %v1348 = vunpack.c.l.b16 %v1072
    %v1349 = vunpack.c.h.b16 %v1072
    %v1350 = vunpack.c.l.b16 %v1073
    %v1351 = vunpack.c.h.b16 %v1073
    %v1352 = vunpack.c.l.b16 %v1074
    %v1353 = vunpack.c.h.b16 %v1074
    %v1354 = vunpack.c.l.b16 %v1075
    %v1355 = vunpack.c.h.b16 %v1075
    %v1356 = vunpack.c.l.b16 %v1076
    %v1357 = vunpack.c.h.b16 %v1076
    %v1358 = vunpack.c.l.b16 %v1077
    %v1359 = vunpack.c.h.b16 %v1077
    %v1360 = vunpack.c.l.b16 %v1078
    %v1361 = vunpack.c.h.b16 %v1078
    %v1362 = vunpack.c.l.b16 %v1079
    %v1363 = vunpack.c.h.b16 %v1079
    %v1364 = vunpack.c.l.b16 %v1080
    %v1365 = vunpack.c.h.b16 %v1080
    %v1366 = vunpack.c.l.b16 %v1081
    %v1367 = vunpack.c.h.b16 %v1081
    %v1368 = vunpack.c.l.b16 %v1082
    %v1369 = vunpack.c.h.b16 %v1082
    %v1370 = vunpack.c.l.b16 %v1083
    %v1371 = vunpack.c.h.b16 %v1083
    %v1372 = vunpack.c.l.b16 %v1084
    %v1373 = vunpack.c.h.b16 %v1084
    %v1374 = vunpack.c.l.b16 %v1085
    %v1375 = vunpack.c.h.b16 %v1085
    %v1376 = vunpack.c.l.b16 %v1086
    %v1377 = vunpack.c.h.b16 %v1086
    %v1378 = vunpack.c.l.b16 %v1087
    %v1379 = vunpack.c.h.b16 %v1087
    %v1380 = vunpack.c.l.b16 %v1088
    %v1381 = vunpack.c.h.b16 %v1088
    %v1382 = vunpack.c.l.b16 %v1089
    %v1383 = vunpack.c.h.b16 %v1089
    %v1384 = vunpack.c.l.b16 %v1090
    %v1385 = vunpack.c.h.b16 %v1090
    %v1386 = vunpack.c.l.b16 %v1091
    %v1387 = vunpack.c.h.b16 %v1091
    %v1388 = vunpack.c.l.b16 %v1092
    %v1389 = vunpack.c.h.b16 %v1092
    %v1390 = vunpack.c.l.b16 %v1093
    %v1391 = vunpack.c.h.b16 %v1093
    %v1392 = vunpack.c.l.b16 %v1094
    %v1393 = vunpack.c.h.b16 %v1094
    %v1394 = vunpack.c.l.b16 %v1095
    %v1395 = vunpack.c.h.b16 %v1095
    %v1396 = vunpack.c.l.b16 %v1096
    %v1397 = vunpack.c.h.b16 %v1096
    %v1398 = vunpack.c.l.b16 %v1097
    %v1399 = vunpack.c.h.b16 %v1097
    %v1400 = vunpack.c.l.b16 %v1098
    %v1401 = vunpack.c.h.b16 %v1098
    %v1402 = vunpack.c.l.b16 %v1099
    %v1403 = vunpack.c.h.b16 %v1099
    %v1404 = vunpack.c.l.b16 %v1100
    %v1405 = vunpack.c.h.b16 %v1100
    %v1406 = vunpack.c.l.b16 %v1101
    %v1407 = vunpack.c.h.b16 %v1101
    %v1408 = vunpack.c.l.b16 %v1102
    %v1409 = vunpack.c.h.b16 %v1102
    %v1410 = vunpack.c.l.b16 %v1103
    %v1411 = vunpack.c.h.b16 %v1103
    %v1412 = vunpack.c.l.b16 %v1104
    %v1413 = vunpack.c.h.b16 %v1104
    %v1414 = vunpack.c.l.b16 %v1105
    %v1415 = vunpack.c.h.b16 %v1105
    %v1416 = vunpack.c.l.b16 %v1106
    %v1417 = vunpack.c.h.b16 %v1106
    %v1418 = vunpack.c.l.b16 %v1107
    %v1419 = vunpack.c.h.b16 %v1107
    %v1420 = vunpack.c.l.b16 %v1108
    %v1421 = vunpack.c.h.b16 %v1108
    %v1422 = vunpack.c.l.b16 %v1109
    %v1423 = vunpack.c.h.b16 %v1109
    %v1424 = vunpack.c.l.b16 %v1110
    %v1425 = vunpack.c.h.b16 %v1110
    %v1426 = vunpack.c.l.b16 %v1111
    %v1427 = vunpack.c.h.b16 %v1111
    %v1428 = vunpack.c.l.b16 %v1112
    %v1429 = vunpack.c.h.b16 %v1112
    %v1430 = vunpack.c.l.b16 %v1113
    %v1431 = vunpack.c.h.b16 %v1113
    %v1432 = vunpack.c.l.b16 %v1114
    %v1433 = vunpack.c.h.b16 %v1114
    %v1434 = vunpack.c.l.b16 %v1115
    %v1435 = vunpack.c.h.b16 %v1115
    %v1436 = vunpack.c.l.b16 %v1116
    %v1437 = vunpack.c.h.b16 %v1116
    %v1438 = vunpack.c.l.b16 %v1117
    %v1439 = vunpack.c.h.b16 %v1117
    %v1440 = vunpack.c.l.b16 %v1118
    %v1441 = vunpack.c.h.b16 %v1118
    %v1442 = vunpack.c.l.b16 %v1119
    %v1443 = vunpack.c.h.b16 %v1119
    %v1444 = vunpack.c.l.b16 %v1120
    %v1445 = vunpack.c.h.b16 %v1120
    %v1446 = vunpack.c.l.b16 %v1121
    %v1447 = vunpack.c.h.b16 %v1121
    %v1448 = vunpack.c.l.b16 %v1122
    %v1449 = vunpack.c.h.b16 %v1122
    %v1450 = vunpack.c.l.b16 %v1123
    %v1451 = vunpack.c.h.b16 %v1123
    %v1452 = vunpack.c.l.b16 %v1124
    %v1453 = vunpack.c.h.b16 %v1124
    %v1454 = vunpack.c.l.b16 %v1125
    %v1455 = vunpack.c.h.b16 %v1125
    %v1456 = vunpack.c.l.b16 %v1126
    %v1457 = vunpack.c.h.b16 %v1126
    %v1458 = vunpack.c.l.b16 %v1127
    %v1459 = vunpack.c.h.b16 %v1127
    %v1460 = vunpack.c.l.b16 %v1128
    %v1461 = vunpack.c.h.b16 %v1128
    %v1462 = vunpack.c.l.b16 %v1129
    %v1463 = vunpack.c.h.b16 %v1129
    %v1464 = vunpack.c.l.b16 %v1130
    %v1465 = vunpack.c.h.b16 %v1130
    %v1466 = vunpack.c.l.b16 %v1131
    %v1467 = vunpack.c.h.b16 %v1131
    %v1468 = vunpack.c.l.b16 %v1132
    %v1469 = vunpack.c.h.b16 %v1132
    %v1470 = vunpack.c.l.b16 %v1133
    %v1471 = vunpack.c.h.b16 %v1133
    %v1472 = vunpack.c.l.b16 %v1134
    %v1473 = vunpack.c.h.b16 %v1134
    %v1474 = vunpack.c.l.b16 %v1135
    %v1475 = vunpack.c.h.b16 %v1135
    %v1476 = vunpack.c.l.b16 %v1136
    %v1477 = vunpack.c.h.b16 %v1136
    %v1478 = vunpack.c.l.b16 %v1137
    %v1479 = vunpack.c.h.b16 %v1137
    %v1480 = vunpack.c.l.b16 %v1138
    %v1481 = vunpack.c.h.b16 %v1138
    %v1482 = vunpack.c.l.b16 %v1139
    %v1483 = vunpack.c.h.b16 %v1139
    %v1484 = vunpack.c.l.b16 %v1140
    %v1485 = vunpack.c.h.b16 %v1140
    %v1486 = vunpack.c.l.b16 %v1141
    %v1487 = vunpack.c.h.b16 %v1141
    %v1488 = vunpack.c.l.b16 %v1142
    %v1489 = vunpack.c.h.b16 %v1142
    %v1490 = vunpack.c.l.b16 %v1143
    %v1491 = vunpack.c.h.b16 %v1143
    %v1492 = vunpack.c.l.b16 %v1144
    %v1493 = vunpack.c.h.b16 %v1144
    %v1494 = vunpack.c.l.b16 %v1145
    %v1495 = vunpack.c.h.b16 %v1145
    %v1496 = vunpack.c.l.b16 %v1146
    %v1497 = vunpack.c.h.b16 %v1146
    %v1498 = vunpack.c.l.b16 %v1147
    %v1499 = vunpack.c.h.b16 %v1147
    %v1500 = vunpack.c.l.b16 %v1148
    %v1501 = vunpack.c.h.b16 %v1148
    %v1502 = vunpack.c.l.b16 %v1149
    %v1503 = vunpack.c.h.b16 %v1149
    %v1504 = vunpack.c.l.b16 %v1150
    %v1505 = vunpack.c.h.b16 %v1150
    %v1506 = vunpack.c.l.b16 %v1151
    %v1507 = vunpack.c.h.b16 %v1151
    %v1508 = vunpack.c.l.b16 %v1152
    %v1509 = vunpack.c.h.b16 %v1152
    %v1510 = vunpack.c.l.b16 %v1153
    %v1511 = vunpack.c.h.b16 %v1153
    %v1512 = vunpack.c.l.b16 %v1154
    %v1513 = vunpack.c.h.b16 %v1154
    %v1514 = vunpack.c.l.b16 %v1155
    %v1515 = vunpack.c.h.b16 %v1155
    %v1516 = vunpack.c.l.b16 %v1156
    %v1517 = vunpack.c.h.b16 %v1156
    %v1518 = vunpack.c.l.b16 %v1157
    %v1519 = vunpack.c.h.b16 %v1157
    %v1520 = vunpack.c.l.b16 %v1158
    %v1521 = vunpack.c.h.b16 %v1158
    %v1522 = vunpack.c.l.b16 %v1159
    %v1523 = vunpack.c.h.b16 %v1159
    %v1524 = vunpack.c.l.b16 %v1160
    %v1525 = vunpack.c.h.b16 %v1160
    %v1526 = vunpack.c.l.b16 %v1161
    %v1527 = vunpack.c.h.b16 %v1161
    %v1528 = vunpack.c.l.b16 %v1162
    %v1529 = vunpack.c.h.b16 %v1162
    %v1530 = vunpack.c.l.b16 %v1163
    %v1531 = vunpack.c.h.b16 %v1163
    %v1532 = vunpack.c.l.b16 %v1164
    %v1533 = vunpack.c.h.b16 %v1164
    %v1534 = vunpack.c.l.b16 %v1165
    %v1535 = vunpack.c.h.b16 %v1165
    %v1536 = vunpack.c.l.b16 %v1166
    %v1537 = vunpack.c.h.b16 %v1166
    %v1538 = vunpack.c.l.b16 %v1167
    %v1539 = vunpack.c.h.b16 %v1167
    %v1540 = vunpack.c.l.b16 %v1168
    %v1541 = vunpack.c.h.b16 %v1168
    %v1542 = vunpack.c.l.b16 %v1169
    %v1543 = vunpack.c.h.b16 %v1169
    %v1544 = vunpack.c.l.b16 %v1170
    %v1545 = vunpack.c.h.b16 %v1170
    %v1546 = vunpack.c.l.b16 %v1171
    %v1547 = vunpack.c.h.b16 %v1171
    %v1548 = vunpack.c.l.b16 %v1172
    %v1549 = vunpack.c.h.b16 %v1172
    %v1550 = vunpack.c.l.b16 %v1173
    %v1551 = vunpack.c.h.b16 %v1173
    %v1552 = vunpack.c.l.b16 %v1174
    %v1553 = vunpack.c.h.b16 %v1174
    %v1554 = vunpack.c.l.b16 %v1175
    %v1555 = vunpack.c.h.b16 %v1175
    %v1556 = vunpack.c.l.b16 %v1176
    %v1557 = vunpack.c.h.b16 %v1176
    %v1558 = vunpack.c.l.b16 %v1177
    %v1559 = vunpack.c.h.b16 %v1177
    %v1560 = vunpack.c.l.b16 %v1178
    %v1561 = vunpack.c.h.b16 %v1178
    %v1562 = vunpack.c.l.b16 %v1179
    %v1563 = vunpack.c.h.b16 %v1179
    %v1564 = vunpack.c.l.b16 %v1180
    %v1565 = vunpack.c.h.b16 %v1180
    %v1566 = vunpack.c.l.b16 %v1181
    %v1567 = vunpack.c.h.b16 %v1181
    %v1568 = vunpack.c.l.b16 %v1182
    %v1569 = vunpack.c.h.b16 %v1182
    %v1570 = vunpack.c.l.b16 %v1183
    %v1571 = vunpack.c.h.b16 %v1183
    %v1572 = vunpack.c.l.b16 %v1184
    %v1573 = vunpack.c.h.b16 %v1184
    %v1574 = vunpack.c.l.b16 %v1185
    %v1575 = vunpack.c.h.b16 %v1185
    %v1576 = vunpack.c.l.b16 %v1186
    %v1577 = vunpack.c.h.b16 %v1186
    %v1578 = vunpack.c.l.b16 %v1187
    %v1579 = vunpack.c.h.b16 %v1187
    %v1580 = vpack.c.b16 %v1332, %v1324
    %v1581 = vpack.c.b16 %v1333, %v1325
    %v1582 = vpack.c.b16 %v1334, %v1326
    %v1583 = vpack.c.b16 %v1335, %v1327
    %v1584 = vpack.c.b16 %v1336, %v1328
    %v1585 = vpack.c.b16 %v1337, %v1329
    %v1586 = vpack.c.b16 %v1338, %v1330
    %v1587 = vpack.c.b16 %v1339, %v1331
    %v1588 = vpack.c.b16 %v1348, %v1340
    %v1589 = vpack.c.b16 %v1349, %v1341
    %v1590 = vpack.c.b16 %v1350, %v1342
    %v1591 = vpack.c.b16 %v1351, %v1343
    %v1592 = vpack.c.b16 %v1352, %v1344
    %v1593 = vpack.c.b16 %v1353, %v1345
    %v1594 = vpack.c.b16 %v1354, %v1346
    %v1595 = vpack.c.b16 %v1355, %v1347
    %v1596 = vpack.c.b16 %v1364, %v1356
    %v1597 = vpack.c.b16 %v1365, %v1357
    %v1598 = vpack.c.b16 %v1366, %v1358
    %v1599 = vpack.c.b16 %v1367, %v1359
    %v1600 = vpack.c.b16 %v1368, %v1360
    %v1601 = vpack.c.b16 %v1369, %v1361
    %v1602 = vpack.c.b16 %v1370, %v1362
    %v1603 = vpack.c.b16 %v1371, %v1363
    %v1604 = vpack.c.b16 %v1380, %v1372
    %v1605 = vpack.c.b16 %v1381, %v1373
    %v1606 = vpack.c.b16 %v1382, %v1374
    %v1607 = vpack.c.b16 %v1383, %v1375
    %v1608 = vpack.c.b16 %v1384, %v1376
    %v1609 = vpack.c.b16 %v1385, %v1377
    %v1610 = vpack.c.b16 %v1386, %v1378
    %v1611 = vpack.c.b16 %v1387, %v1379
    %v1612 = vpack.c.b16 %v1396, %v1388
    %v1613 = vpack.c.b16 %v1397, %v1389
    %v1614 = vpack.c.b16 %v1398, %v1390
    %v1615 = vpack.c.b16 %v1399, %v1391
    %v1616 = vpack.c.b16 %v1400, %v1392
    %v1617 = vpack.c.b16 %v1401, %v1393
    %v1618 = vpack.c.b16 %v1402, %v1394
    %v1619 = vpack.c.b16 %v1403, %v1395
    %v1620 = vpack.c.b16 %v1412, %v1404
    %v1621 = vpack.c.b16 %v1413, %v1405
    %v1622 = vpack.c.b16 %v1414, %v1406
    %v1623 = vpack.c.b16 %v1415, %v1407
    %v1624 = vpack.c.b16 %v1416, %v1408
    %v1625 = vpack.c.b16 %v1417, %v1409
    %v1626 = vpack.c.b16 %v1418, %v1410
    %v1627 = vpack.c.b16 %v1419, %v1411
    %v1628 = vpack.c.b16 %v1428, %v1420
    %v1629 = vpack.c.b16 %v1429, %v1421
    %v1630 = vpack.c.b16 %v1430, %v1422
    %v1631 = vpack.c.b16 %v1431, %v1423
    %v1632 = vpack.c.b16 %v1432, %v1424
    %v1633 = vpack.c.b16 %v1433, %v1425
    %v1634 = vpack.c.b16 %v1434, %v1426
    %v1635 = vpack.c.b16 %v1435, %v1427
    %v1636 = vpack.c.b16 %v1444, %v1436
    %v1637 = vpack.c.b16 %v1445, %v1437
    %v1638 = vpack.c.b16 %v1446, %v1438
    %v1639 = vpack.c.b16 %v1447, %v1439
    %v1640 = vpack.c.b16 %v1448, %v1440
    %v1641 = vpack.c.b16 %v1449, %v1441
    %v1642 = vpack.c.b16 %v1450, %v1442
    %v1643 = vpack.c.b16 %v1451, %v1443
    %v1644 = vpack.c.b16 %v1460, %v1452
    %v1645 = vpack.c.b16 %v1461, %v1453
    %v1646 = vpack.c.b16 %v1462, %v1454
    %v1647 = vpack.c.b16 %v1463, %v1455
    %v1648 = vpack.c.b16 %v1464, %v1456
    %v1649 = vpack.c.b16 %v1465, %v1457
    %v1650 = vpack.c.b16 %v1466, %v1458
    %v1651 = vpack.c.b16 %v1467, %v1459
    %v1652 = vpack.c.b16 %v1476, %v1468
    %v1653 = vpack.c.b16 %v1477, %v1469
    %v1654 = vpack.c.b16 %v1478, %v1470
    %v1655 = vpack.c.b16 %v1479, %v1471
    %v1656 = vpack.c.b16 %v1480, %v1472
    %v1657 = vpack.c.b16 %v1481, %v1473
    %v1658 = vpack.c.b16 %v1482, %v1474
    %v1659 = vpack.c.b16 %v1483, %v1475
    %v1660 = vpack.c.b16 %v1492, %v1484
    %v1661 = vpack.c.b16 %v1493, %v1485
    %v1662 = vpack.c.b16 %v1494, %v1486
    %v1663 = vpack.c.b16 %v1495, %v1487
    %v1664 = vpack.c.b16 %v1496, %v1488
    %v1665 = vpack.c.b16 %v1497, %v1489
    %v1666 = vpack.c.b16 %v1498, %v1490
    %v1667 = vpack.c.b16 %v1499, %v1491
    %v1668 = vpack.c.b16 %v1508, %v1500
    %v1669 = vpack.c.b16 %v1509, %v1501
    %v1670 = vpack.c.b16 %v1510, %v1502
    %v1671 = vpack.c.b16 %v1511, %v1503
    %v1672 = vpack.c.b16 %v1512, %v1504
    %v1673 = vpack.c.b16 %v1513, %v1505
    %v1674 = vpack.c.b16 %v1514, %v1506
    %v1675 = vpack.c.b16 %v1515, %v1507
    %v1676 = vpack.c.b16 %v1524, %v1516
    %v1677 = vpack.c.b16 %v1525, %v1517
    %v1678 = vpack.c.b16 %v1526, %v1518
    %v1679 = vpack.c.b16 %v1527, %v1519
    %v1680 = vpack.c.b16 %v1528, %v1520
    %v1681 = vpack.c.b16 %v1529, %v1521
    %v1682 = vpack.c.b16 %v1530, %v1522
    %v1683 = vpack.c.b16 %v1531, %v1523
    %v1684 = vpack.c.b16 %v1540, %v1532
    %v1685 = vpack.c.b16 %v1541, %v1533
    %v1686 = vpack.c.b16 %v1542, %v1534
    %v1687 = vpack.c.b16 %v1543, %v1535
    %v1688 = vpack.c.b16 %v1544, %v1536
    %v1689 = vpack.c.b16 %v1545, %v1537
    %v1690 = vpack.c.b16 %v1546, %v1538
    %v1691 = vpack.c.b16 %v1547, %v1539
    %v1692 = vpack.c.b16 %v1556, %v1548
    %v1693 = vpack.c.b16 %v1557, %v1549
    %v1694 = vpack.c.b16 %v1558, %v1550
    %v1695 = vpack.c.b16 %v1559, %v1551
    %v1696 = vpack.c.b16 %v1560, %v1552
    %v1697 = vpack.c.b16 %v1561, %v1553
    %v1698 = vpack.c.b16 %v1562, %v1554
    %v1699 = vpack.c.b16 %v1563, %v1555
    %v1700 = vpack.c.b16 %v1572, %v1564
    %v1701 = vpack.c.b16 %v1573, %v1565
    %v1702 = vpack.c.b16 %v1574, %v1566
    %v1703 = vpack.c.b16 %v1575, %v1567
    %v1704 = vpack.c.b16 %v1576, %v1568
    %v1705 = vpack.c.b16 %v1577, %v1569
    %v1706 = vpack.c.b16 %v1578, %v1570
    %v1707 = vpack.c.b16 %v1579, %v1571
    %1836 = vmatpush.bf16.msra.mxu0 %v1636
    %1837 = vmatpush.bf16.msra.mxu0 %v1628
    %1838 = vmatpush.bf16.msra.mxu0 %v1620
    %1839 = vmatpush.bf16.msra.mxu0 %v1612
    %1840 = vmatpush.bf16.msra.mxu0 %v1604
    %1841 = vmatpush.bf16.msra.mxu0 %v1596
    %1842 = vmatpush.bf16.msra.mxu0 %v1588
    %1843 = vmatpush.bf16.msra.mxu0 %v1580
    %1844 = vmatmul.bf16.gmra.mxu0 0
    %v1845 = vpop.f32.mrf.mxu0
    %v1846 = vadd.f32 0.0, %v1845
    %v1847 = vpop.f32.mrf.mxu0
    %1848 = vdwg.mxu0
    %1849 = vmatpush.bf16.msra.mxu0 %v1700
    %1850 = vmatpush.bf16.msra.mxu0 %v1692
    %1851 = vmatpush.bf16.msra.mxu0 %v1684
    %1852 = vmatpush.bf16.msra.mxu0 %v1676
    %1853 = vmatpush.bf16.msra.mxu0 %v1668
    %1854 = vmatpush.bf16.msra.mxu0 %v1660
    %1855 = vmatpush.bf16.msra.mxu0 %v1652
    %1856 = vmatpush.bf16.msra.mxu0 %v1644
    %1857 = vmatmul.bf16.gmra.mxu0 0
    %v1858 = vpop.f32.mrf.mxu0
    %v1859 = vadd.f32 %v1846, %v1858
    %v1860 = vpop.f32.mrf.mxu0
    %1861 = vdwg.mxu0
    %1862 = vmatpush.bf16.msra.mxu0 %v1637
    %1863 = vmatpush.bf16.msra.mxu0 %v1629
    %1864 = vmatpush.bf16.msra.mxu0 %v1621
    %1865 = vmatpush.bf16.msra.mxu0 %v1613
    %1866 = vmatpush.bf16.msra.mxu0 %v1605
    %1867 = vmatpush.bf16.msra.mxu0 %v1597
    %1868 = vmatpush.bf16.msra.mxu0 %v1589
    %1869 = vmatpush.bf16.msra.mxu0 %v1581
    %1870 = vmatmul.bf16.gmra.mxu0 0
    %v1871 = vpop.f32.mrf.mxu0
    %v1872 = vadd.f32 0.0, %v1871
    %v1873 = vpop.f32.mrf.mxu0
    %1874 = vdwg.mxu0
    %1875 = vmatpush.bf16.msra.mxu0 %v1701
    %1876 = vmatpush.bf16.msra.mxu0 %v1693
    %1877 = vmatpush.bf16.msra.mxu0 %v1685
    %1878 = vmatpush.bf16.msra.mxu0 %v1677
    %1879 = vmatpush.bf16.msra.mxu0 %v1669
    %1880 = vmatpush.bf16.msra.mxu0 %v1661
    %1881 = vmatpush.bf16.msra.mxu0 %v1653
    %1882 = vmatpush.bf16.msra.mxu0 %v1645
    %1883 = vmatmul.bf16.gmra.mxu0 0
    %v1884 = vpop.f32.mrf.mxu0
    %v1885 = vadd.f32 %v1872, %v1884
    %v1886 = vpop.f32.mrf.mxu0
    %1887 = vdwg.mxu0
    %1888 = vmatpush.bf16.msra.mxu0 %v1638
    %1889 = vmatpush.bf16.msra.mxu0 %v1630
    %1890 = vmatpush.bf16.msra.mxu0 %v1622
    %1891 = vmatpush.bf16.msra.mxu0 %v1614
    %1892 = vmatpush.bf16.msra.mxu0 %v1606
    %1893 = vmatpush.bf16.msra.mxu0 %v1598
    %1894 = vmatpush.bf16.msra.mxu0 %v1590
    %1895 = vmatpush.bf16.msra.mxu0 %v1582
    %1896 = vmatmul.bf16.gmra.mxu0 0
    %v1897 = vpop.f32.mrf.mxu0
    %v1898 = vadd.f32 0.0, %v1897
    %v1899 = vpop.f32.mrf.mxu0
    %1900 = vdwg.mxu0
    %1901 = vmatpush.bf16.msra.mxu0 %v1702
    %1902 = vmatpush.bf16.msra.mxu0 %v1694
    %1903 = vmatpush.bf16.msra.mxu0 %v1686
    %1904 = vmatpush.bf16.msra.mxu0 %v1678
    %1905 = vmatpush.bf16.msra.mxu0 %v1670
    %1906 = vmatpush.bf16.msra.mxu0 %v1662
    %1907 = vmatpush.bf16.msra.mxu0 %v1654
    %1908 = vmatpush.bf16.msra.mxu0 %v1646
    %1909 = vmatmul.bf16.gmra.mxu0 0
    %v1910 = vpop.f32.mrf.mxu0
    %v1911 = vadd.f32 %v1898, %v1910
    %v1912 = vpop.f32.mrf.mxu0
    %1913 = vdwg.mxu0
    %1914 = vmatpush.bf16.msra.mxu0 %v1639
    %1915 = vmatpush.bf16.msra.mxu0 %v1631
    %1916 = vmatpush.bf16.msra.mxu0 %v1623
    %1917 = vmatpush.bf16.msra.mxu0 %v1615
    %1918 = vmatpush.bf16.msra.mxu0 %v1607
    %1919 = vmatpush.bf16.msra.mxu0 %v1599
    %1920 = vmatpush.bf16.msra.mxu0 %v1591
    %1921 = vmatpush.bf16.msra.mxu0 %v1583
    %1922 = vmatmul.bf16.gmra.mxu0 0
    %v1923 = vpop.f32.mrf.mxu0
    %v1924 = vadd.f32 0.0, %v1923
    %v1925 = vpop.f32.mrf.mxu0
    %1926 = vdwg.mxu0
    %1927 = vmatpush.bf16.msra.mxu0 %v1703
    %1928 = vmatpush.bf16.msra.mxu0 %v1695
    %1929 = vmatpush.bf16.msra.mxu0 %v1687
    %1930 = vmatpush.bf16.msra.mxu0 %v1679
    %1931 = vmatpush.bf16.msra.mxu0 %v1671
    %1932 = vmatpush.bf16.msra.mxu0 %v1663
    %1933 = vmatpush.bf16.msra.mxu0 %v1655
    %1934 = vmatpush.bf16.msra.mxu0 %v1647
    %1935 = vmatmul.bf16.gmra.mxu0 0
    %v1936 = vpop.f32.mrf.mxu0
    %v1937 = vadd.f32 %v1924, %v1936
    %v1938 = vpop.f32.mrf.mxu0
    %1939 = vdwg.mxu0
    %1940 = vmatpush.bf16.msra.mxu0 %v1640
    %1941 = vmatpush.bf16.msra.mxu0 %v1632
    %1942 = vmatpush.bf16.msra.mxu0 %v1624
    %1943 = vmatpush.bf16.msra.mxu0 %v1616
    %1944 = vmatpush.bf16.msra.mxu0 %v1608
    %1945 = vmatpush.bf16.msra.mxu0 %v1600
    %1946 = vmatpush.bf16.msra.mxu0 %v1592
    %1947 = vmatpush.bf16.msra.mxu0 %v1584
    %1948 = vmatmul.bf16.gmra.mxu0 0
    %v1949 = vpop.f32.mrf.mxu0
    %v1950 = vadd.f32 0.0, %v1949
    %v1951 = vpop.f32.mrf.mxu0
    %1952 = vdwg.mxu0
    %1953 = vmatpush.bf16.msra.mxu0 %v1704
    %1954 = vmatpush.bf16.msra.mxu0 %v1696
    %1955 = vmatpush.bf16.msra.mxu0 %v1688
    %1956 = vmatpush.bf16.msra.mxu0 %v1680
    %1957 = vmatpush.bf16.msra.mxu0 %v1672
    %1958 = vmatpush.bf16.msra.mxu0 %v1664
    %1959 = vmatpush.bf16.msra.mxu0 %v1656
    %1960 = vmatpush.bf16.msra.mxu0 %v1648
    %1961 = vmatmul.bf16.gmra.mxu0 0
    %v1962 = vpop.f32.mrf.mxu0
    %v1963 = vadd.f32 %v1950, %v1962
    %v1964 = vpop.f32.mrf.mxu0
    %1965 = vdwg.mxu0
    %1966 = vmatpush.bf16.msra.mxu0 %v1641
    %1967 = vmatpush.bf16.msra.mxu0 %v1633
    %1968 = vmatpush.bf16.msra.mxu0 %v1625
    %1969 = vmatpush.bf16.msra.mxu0 %v1617
    %1970 = vmatpush.bf16.msra.mxu0 %v1609
    %1971 = vmatpush.bf16.msra.mxu0 %v1601
    %1972 = vmatpush.bf16.msra.mxu0 %v1593
    %1973 = vmatpush.bf16.msra.mxu0 %v1585
    %1974 = vmatmul.bf16.gmra.mxu0 0
    %v1975 = vpop.f32.mrf.mxu0
    %v1976 = vadd.f32 0.0, %v1975
    %v1977 = vpop.f32.mrf.mxu0
    %1978 = vdwg.mxu0
    %1979 = vmatpush.bf16.msra.mxu0 %v1705
    %1980 = vmatpush.bf16.msra.mxu0 %v1697
    %1981 = vmatpush.bf16.msra.mxu0 %v1689
    %1982 = vmatpush.bf16.msra.mxu0 %v1681
    %1983 = vmatpush.bf16.msra.mxu0 %v1673
    %1984 = vmatpush.bf16.msra.mxu0 %v1665
    %1985 = vmatpush.bf16.msra.mxu0 %v1657
    %1986 = vmatpush.bf16.msra.mxu0 %v1649
    %1987 = vmatmul.bf16.gmra.mxu0 0
    %v1988 = vpop.f32.mrf.mxu0
    %v1989 = vadd.f32 %v1976, %v1988
    %v1990 = vpop.f32.mrf.mxu0
    %1991 = vdwg.mxu0
    %1992 = vmatpush.bf16.msra.mxu0 %v1642
    %1993 = vmatpush.bf16.msra.mxu0 %v1634
    %1994 = vmatpush.bf16.msra.mxu0 %v1626
    %1995 = vmatpush.bf16.msra.mxu0 %v1618
    %1996 = vmatpush.bf16.msra.mxu0 %v1610
    %1997 = vmatpush.bf16.msra.mxu0 %v1602
    %1998 = vmatpush.bf16.msra.mxu0 %v1594
    %1999 = vmatpush.bf16.msra.mxu0 %v1586
    %2000 = vmatmul.bf16.gmra.mxu0 0
    %v2001 = vpop.f32.mrf.mxu0
    %v2002 = vadd.f32 0.0, %v2001
    %v2003 = vpop.f32.mrf.mxu0
    %2004 = vdwg.mxu0
    %2005 = vmatpush.bf16.msra.mxu0 %v1706
    %2006 = vmatpush.bf16.msra.mxu0 %v1698
    %2007 = vmatpush.bf16.msra.mxu0 %v1690
    %2008 = vmatpush.bf16.msra.mxu0 %v1682
    %2009 = vmatpush.bf16.msra.mxu0 %v1674
    %2010 = vmatpush.bf16.msra.mxu0 %v1666
    %2011 = vmatpush.bf16.msra.mxu0 %v1658
    %2012 = vmatpush.bf16.msra.mxu0 %v1650
    %2013 = vmatmul.bf16.gmra.mxu0 0
    %v2014 = vpop.f32.mrf.mxu0
    %v2015 = vadd.f32 %v2002, %v2014
    %v2016 = vpop.f32.mrf.mxu0
    %2017 = vdwg.mxu0
    %2018 = vmatpush.bf16.msra.mxu0 %v1643
    %2019 = vmatpush.bf16.msra.mxu0 %v1635
    %2020 = vmatpush.bf16.msra.mxu0 %v1627
    %2021 = vmatpush.bf16.msra.mxu0 %v1619
    %2022 = vmatpush.bf16.msra.mxu0 %v1611
    %2023 = vmatpush.bf16.msra.mxu0 %v1603
    %2024 = vmatpush.bf16.msra.mxu0 %v1595
    %2025 = vmatpush.bf16.msra.mxu0 %v1587
    %2026 = vmatmul.bf16.gmra.mxu0 0
    %v2027 = vpop.f32.mrf.mxu0
    %v2028 = vadd.f32 0.0, %v2027
    %v2029 = vpop.f32.mrf.mxu0
    %2030 = vdwg.mxu0
    %2031 = vmatpush.bf16.msra.mxu0 %v1707
    %2032 = vmatpush.bf16.msra.mxu0 %v1699
    %2033 = vmatpush.bf16.msra.mxu0 %v1691
    %2034 = vmatpush.bf16.msra.mxu0 %v1683
    %2035 = vmatpush.bf16.msra.mxu0 %v1675
    %2036 = vmatpush.bf16.msra.mxu0 %v1667
    %2037 = vmatpush.bf16.msra.mxu0 %v1659
    %2038 = vmatpush.bf16.msra.mxu0 %v1651
    %2039 = vmatmul.bf16.gmra.mxu0 0
    %v2040 = vpop.f32.mrf.mxu0
    %v2041 = vadd.f32 %v2028, %v2040
    %v2042 = vpop.f32.mrf.mxu0
    %2043 = vdwg.mxu0
    %v2044 = vadd.f32 %v1188, %v1859
    %v2045 = vadd.f32 %v1189, %v1885
    %v2046 = vadd.f32 %v1190, %v1911
    %v2047 = vadd.f32 %v1191, %v1937
    %v2048 = vadd.f32 %v1192, %v1963
    %v2049 = vadd.f32 %v1193, %v1989
    %v2050 = vadd.f32 %v1194, %v2015
    %v2051 = vadd.f32 %v1195, %v2041
    %v2052 = vxor.u32 %v2044, 2147483648
    %v2053 = vxor.u32 %v2045, 2147483648
    %v2054 = vmul.f32 %v2052, 1.442695
    %v2055 = vpow.pop %v2054
    %v2056 = vmul.f32 %v2053, 1.442695
    %v2057 = vpow.pop %v2056
    %v2058 = vadd.f32 %v2055, 1.0
    %v2059 = vadd.f32 %v2057, 1.0
    %v2060 = vrcp.pop %v2058
    %v2061 = vmul.f32 %v2058, %v2060
    %v2062 = vsub.f32 1.0, %v2061
    %v2063 = vmul.f32 %v2060, %v2062
    %v2064 = vadd.f32 %v2060, %v2063
    %vm2065 = vweird.f32 %v2058
    %vm2066 = vweird.f32 %v2060
    %vm2067 = vmor %vm2065, %vm2066
    %v2068 = vsel %vm2067, %v2060, %v2064
    %v2069 = vand.u32 2147483647, %v2058
    %vm2070 = vcmp.eq.f32.partialorder %v2069, 8.507059e+37
    %v2071 = vand.u32 %v2058, 2147483648
    %v2072 = vor.u32 1.1754944e-38, %v2071
    %v2073 = vsel %vm2070, %v2072, %v2068
    %v2074 = vmul.f32 1.0, %v2073
    %v2075 = vrcp.pop %v2059
    %v2076 = vmul.f32 %v2059, %v2075
    %v2077 = vsub.f32 1.0, %v2076
    %v2078 = vmul.f32 %v2075, %v2077
    %v2079 = vadd.f32 %v2075, %v2078
    %vm2080 = vweird.f32 %v2059
    %vm2081 = vweird.f32 %v2075
    %vm2082 = vmor %vm2080, %vm2081
    %v2083 = vsel %vm2082, %v2075, %v2079
    %v2084 = vand.u32 2147483647, %v2059
    %vm2085 = vcmp.eq.f32.partialorder %v2084, 8.507059e+37
    %v2086 = vand.u32 %v2059, 2147483648
    %v2087 = vor.u32 1.1754944e-38, %v2086
    %v2088 = vsel %vm2085, %v2087, %v2083
    %v2089 = vmul.f32 1.0, %v2088
    %v2090 = vxor.u32 %v2046, 2147483648
    %v2091 = vxor.u32 %v2047, 2147483648
    %v2092 = vmul.f32 %v2090, 1.442695
    %v2093 = vpow.pop %v2092
    %v2094 = vmul.f32 %v2091, 1.442695
    %v2095 = vpow.pop %v2094
    %v2096 = vadd.f32 %v2093, 1.0
    %v2097 = vadd.f32 %v2095, 1.0
    %v2098 = vrcp.pop %v2096
    %v2099 = vmul.f32 %v2096, %v2098
    %v2100 = vsub.f32 1.0, %v2099
    %v2101 = vmul.f32 %v2098, %v2100
    %v2102 = vadd.f32 %v2098, %v2101
    %vm2103 = vweird.f32 %v2096
    %vm2104 = vweird.f32 %v2098
    %vm2105 = vmor %vm2103, %vm2104
    %v2106 = vsel %vm2105, %v2098, %v2102
    %v2107 = vand.u32 2147483647, %v2096
    %vm2108 = vcmp.eq.f32.partialorder %v2107, 8.507059e+37
    %v2109 = vand.u32 %v2096, 2147483648
    %v2110 = vor.u32 1.1754944e-38, %v2109
    %v2111 = vsel %vm2108, %v2110, %v2106
    %v2112 = vmul.f32 1.0, %v2111
    %v2113 = vrcp.pop %v2097
    %v2114 = vmul.f32 %v2097, %v2113
    %v2115 = vsub.f32 1.0, %v2114
    %v2116 = vmul.f32 %v2113, %v2115
    %v2117 = vadd.f32 %v2113, %v2116
    %vm2118 = vweird.f32 %v2097
    %vm2119 = vweird.f32 %v2113
    %vm2120 = vmor %vm2118, %vm2119
    %v2121 = vsel %vm2120, %v2113, %v2117
    %v2122 = vand.u32 2147483647, %v2097
    %vm2123 = vcmp.eq.f32.partialorder %v2122, 8.507059e+37
    %v2124 = vand.u32 %v2097, 2147483648
    %v2125 = vor.u32 1.1754944e-38, %v2124
    %v2126 = vsel %vm2123, %v2125, %v2121
    %v2127 = vmul.f32 1.0, %v2126
    %v2128 = vtanh.pop %v2048
    %v2129 = vtanh.pop %v2049
    %v2130 = vxor.u32 %v2050, 2147483648
    %v2131 = vxor.u32 %v2051, 2147483648
    %v2132 = vmul.f32 %v2130, 1.442695
    %v2133 = vpow.pop %v2132
    %v2134 = vmul.f32 %v2131, 1.442695
    %v2135 = vpow.pop %v2134
    %v2136 = vadd.f32 %v2133, 1.0
    %v2137 = vadd.f32 %v2135, 1.0
    %v2138 = vrcp.pop %v2136
    %v2139 = vmul.f32 %v2136, %v2138
    %v2140 = vsub.f32 1.0, %v2139
    %v2141 = vmul.f32 %v2138, %v2140
    %v2142 = vadd.f32 %v2138, %v2141
    %vm2143 = vweird.f32 %v2136
    %vm2144 = vweird.f32 %v2138
    %vm2145 = vmor %vm2143, %vm2144
    %v2146 = vsel %vm2145, %v2138, %v2142
    %v2147 = vand.u32 2147483647, %v2136
    %vm2148 = vcmp.eq.f32.partialorder %v2147, 8.507059e+37
    %v2149 = vand.u32 %v2136, 2147483648
    %v2150 = vor.u32 1.1754944e-38, %v2149
    %v2151 = vsel %vm2148, %v2150, %v2146
    %v2152 = vmul.f32 1.0, %v2151
    %v2153 = vrcp.pop %v2137
    %v2154 = vmul.f32 %v2137, %v2153
    %v2155 = vsub.f32 1.0, %v2154
    %v2156 = vmul.f32 %v2153, %v2155
    %v2157 = vadd.f32 %v2153, %v2156
    %vm2158 = vweird.f32 %v2137
    %vm2159 = vweird.f32 %v2153
    %vm2160 = vmor %vm2158, %vm2159
    %v2161 = vsel %vm2160, %v2153, %v2157
    %v2162 = vand.u32 2147483647, %v2137
    %vm2163 = vcmp.eq.f32.partialorder %v2162, 8.507059e+37
    %v2164 = vand.u32 %v2137, 2147483648
    %v2165 = vor.u32 1.1754944e-38, %v2164
    %v2166 = vsel %vm2163, %v2165, %v2161
    %v2167 = vmul.f32 1.0, %v2166
    %v2168 = vmul.f32 %v2112, 0.0
    %v2169 = vmul.f32 %v2127, 0.0
    %v2170 = vmul.f32 %v2074, %v2128
    %v2171 = vmul.f32 %v2089, %v2129
    %v2172 = vadd.f32 %v2168, %v2170
    %v2173 = vadd.f32 %v2169, %v2171
    %v2174 = vtanh.pop %v2172
    %v2175 = vtanh.pop %v2173
    %v2176 = vmul.f32 %v2152, %v2174
    %v2177 = vmul.f32 %v2167, %v2175
    %2178 = vst [vmem:[#allocation3] sm:$0x3] %v2176
    %2179 = vst [vmem:[#allocation3 + $0x8] sm:$0x3] %v2177
    %v2180 = vld [vmem:[#allocation2] sm:$0xc]
    %v2181 = vld [vmem:[#allocation2 + $0x8] sm:$0xc]
    %v2182 = vld [vmem:[#allocation2 + $0x10] sm:$0xc]
    %v2183 = vld [vmem:[#allocation2 + $0x18] sm:$0xc]
    %v2184 = vld [vmem:[#allocation2 + $0x20] sm:$0xc]
    %v2185 = vld [vmem:[#allocation2 + $0x28] sm:$0xc]
    %v2186 = vld [vmem:[#allocation2 + $0x30] sm:$0xc]
    %v2187 = vld [vmem:[#allocation2 + $0x38] sm:$0xc]
    %v2188 = vpack.c.bf16 %v2176, %v2176
    %v2189 = vpack.c.bf16 %v2177, %v2177
    %2190 = vmatpush.bf16.msra.mxu0 %v1636
    %2191 = vmatpush.bf16.msra.mxu0 %v1628
    %2192 = vmatpush.bf16.msra.mxu0 %v1620
    %2193 = vmatpush.bf16.msra.mxu0 %v1612
    %2194 = vmatpush.bf16.msra.mxu0 %v1604
    %2195 = vmatpush.bf16.msra.mxu0 %v1596
    %2196 = vmatpush.bf16.msra.mxu0 %v1588
    %2197 = vmatpush.bf16.msra.mxu0 %v1580
    %2198 = vmatmul.bf16.gmra.mxu0 %v2188
    %v2199 = vpop.f32.mrf.mxu0
    %v2200 = vadd.f32 0.0, %v2199
    %v2201 = vpop.f32.mrf.mxu0
    %2202 = vdwg.mxu0
    %2203 = vmatpush.bf16.msra.mxu0 %v1700
    %2204 = vmatpush.bf16.msra.mxu0 %v1692
    %2205 = vmatpush.bf16.msra.mxu0 %v1684
    %2206 = vmatpush.bf16.msra.mxu0 %v1676
    %2207 = vmatpush.bf16.msra.mxu0 %v1668
    %2208 = vmatpush.bf16.msra.mxu0 %v1660
    %2209 = vmatpush.bf16.msra.mxu0 %v1652
    %2210 = vmatpush.bf16.msra.mxu0 %v1644
    %2211 = vmatmul.bf16.gmra.mxu0 %v2189
    %v2212 = vpop.f32.mrf.mxu0
    %v2213 = vadd.f32 %v2200, %v2212
    %v2214 = vpop.f32.mrf.mxu0
    %2215 = vdwg.mxu0
    %2216 = vmatpush.bf16.msra.mxu0 %v1637
    %2217 = vmatpush.bf16.msra.mxu0 %v1629
    %2218 = vmatpush.bf16.msra.mxu0 %v1621
    %2219 = vmatpush.bf16.msra.mxu0 %v1613
    %2220 = vmatpush.bf16.msra.mxu0 %v1605
    %2221 = vmatpush.bf16.msra.mxu0 %v1597
    %2222 = vmatpush.bf16.msra.mxu0 %v1589
    %2223 = vmatpush.bf16.msra.mxu0 %v1581
    %2224 = vmatmul.bf16.gmra.mxu0 %v2188
    %v2225 = vpop.f32.mrf.mxu0
    %v2226 = vadd.f32 0.0, %v2225
    %v2227 = vpop.f32.mrf.mxu0
    %2228 = vdwg.mxu0
    %2229 = vmatpush.bf16.msra.mxu0 %v1701
    %2230 = vmatpush.bf16.msra.mxu0 %v1693
    %2231 = vmatpush.bf16.msra.mxu0 %v1685
    %2232 = vmatpush.bf16.msra.mxu0 %v1677
    %2233 = vmatpush.bf16.msra.mxu0 %v1669
    %2234 = vmatpush.bf16.msra.mxu0 %v1661
    %2235 = vmatpush.bf16.msra.mxu0 %v1653
    %2236 = vmatpush.bf16.msra.mxu0 %v1645
    %2237 = vmatmul.bf16.gmra.mxu0 %v2189
    %v2238 = vpop.f32.mrf.mxu0
    %v2239 = vadd.f32 %v2226, %v2238
    %v2240 = vpop.f32.mrf.mxu0
    %2241 = vdwg.mxu0
    %2242 = vmatpush.bf16.msra.mxu0 %v1638
    %2243 = vmatpush.bf16.msra.mxu0 %v1630
    %2244 = vmatpush.bf16.msra.mxu0 %v1622
    %2245 = vmatpush.bf16.msra.mxu0 %v1614
    %2246 = vmatpush.bf16.msra.mxu0 %v1606
    %2247 = vmatpush.bf16.msra.mxu0 %v1598
    %2248 = vmatpush.bf16.msra.mxu0 %v1590
    %2249 = vmatpush.bf16.msra.mxu0 %v1582
    %2250 = vmatmul.bf16.gmra.mxu0 %v2188
    %v2251 = vpop.f32.mrf.mxu0
    %v2252 = vadd.f32 0.0, %v2251
    %v2253 = vpop.f32.mrf.mxu0
    %2254 = vdwg.mxu0
    %2255 = vmatpush.bf16.msra.mxu0 %v1702
    %2256 = vmatpush.bf16.msra.mxu0 %v1694
    %2257 = vmatpush.bf16.msra.mxu0 %v1686
    %2258 = vmatpush.bf16.msra.mxu0 %v1678
    %2259 = vmatpush.bf16.msra.mxu0 %v1670
    %2260 = vmatpush.bf16.msra.mxu0 %v1662
    %2261 = vmatpush.bf16.msra.mxu0 %v1654
    %2262 = vmatpush.bf16.msra.mxu0 %v1646
    %2263 = vmatmul.bf16.gmra.mxu0 %v2189
    %v2264 = vpop.f32.mrf.mxu0
    %v2265 = vadd.f32 %v2252, %v2264
    %v2266 = vpop.f32.mrf.mxu0
    %2267 = vdwg.mxu0
    %2268 = vmatpush.bf16.msra.mxu0 %v1639
    %2269 = vmatpush.bf16.msra.mxu0 %v1631
    %2270 = vmatpush.bf16.msra.mxu0 %v1623
    %2271 = vmatpush.bf16.msra.mxu0 %v1615
    %2272 = vmatpush.bf16.msra.mxu0 %v1607
    %2273 = vmatpush.bf16.msra.mxu0 %v1599
    %2274 = vmatpush.bf16.msra.mxu0 %v1591
    %2275 = vmatpush.bf16.msra.mxu0 %v1583
    %2276 = vmatmul.bf16.gmra.mxu0 %v2188
    %v2277 = vpop.f32.mrf.mxu0
    %v2278 = vadd.f32 0.0, %v2277
    %v2279 = vpop.f32.mrf.mxu0
    %2280 = vdwg.mxu0
    %2281 = vmatpush.bf16.msra.mxu0 %v1703
    %2282 = vmatpush.bf16.msra.mxu0 %v1695
    %2283 = vmatpush.bf16.msra.mxu0 %v1687
    %2284 = vmatpush.bf16.msra.mxu0 %v1679
    %2285 = vmatpush.bf16.msra.mxu0 %v1671
    %2286 = vmatpush.bf16.msra.mxu0 %v1663
    %2287 = vmatpush.bf16.msra.mxu0 %v1655
    %2288 = vmatpush.bf16.msra.mxu0 %v1647
    %2289 = vmatmul.bf16.gmra.mxu0 %v2189
    %v2290 = vpop.f32.mrf.mxu0
    %v2291 = vadd.f32 %v2278, %v2290
    %v2292 = vpop.f32.mrf.mxu0
    %2293 = vdwg.mxu0
    %2294 = vmatpush.bf16.msra.mxu0 %v1640
    %2295 = vmatpush.bf16.msra.mxu0 %v1632
    %2296 = vmatpush.bf16.msra.mxu0 %v1624
    %2297 = vmatpush.bf16.msra.mxu0 %v1616
    %2298 = vmatpush.bf16.msra.mxu0 %v1608
    %2299 = vmatpush.bf16.msra.mxu0 %v1600
    %2300 = vmatpush.bf16.msra.mxu0 %v1592
    %2301 = vmatpush.bf16.msra.mxu0 %v1584
    %2302 = vmatmul.bf16.gmra.mxu0 %v2188
    %v2303 = vpop.f32.mrf.mxu0
    %v2304 = vadd.f32 0.0, %v2303
    %v2305 = vpop.f32.mrf.mxu0
    %2306 = vdwg.mxu0
    %2307 = vmatpush.bf16.msra.mxu0 %v1704
    %2308 = vmatpush.bf16.msra.mxu0 %v1696
    %2309 = vmatpush.bf16.msra.mxu0 %v1688
    %2310 = vmatpush.bf16.msra.mxu0 %v1680
    %2311 = vmatpush.bf16.msra.mxu0 %v1672
    %2312 = vmatpush.bf16.msra.mxu0 %v1664
    %2313 = vmatpush.bf16.msra.mxu0 %v1656
    %2314 = vmatpush.bf16.msra.mxu0 %v1648
    %2315 = vmatmul.bf16.gmra.mxu0 %v2189
    %v2316 = vpop.f32.mrf.mxu0
    %v2317 = vadd.f32 %v2304, %v2316
    %v2318 = vpop.f32.mrf.mxu0
    %2319 = vdwg.mxu0
    %2320 = vmatpush.bf16.msra.mxu0 %v1641
    %2321 = vmatpush.bf16.msra.mxu0 %v1633
    %2322 = vmatpush.bf16.msra.mxu0 %v1625
    %2323 = vmatpush.bf16.msra.mxu0 %v1617
    %2324 = vmatpush.bf16.msra.mxu0 %v1609
    %2325 = vmatpush.bf16.msra.mxu0 %v1601
    %2326 = vmatpush.bf16.msra.mxu0 %v1593
    %2327 = vmatpush.bf16.msra.mxu0 %v1585
    %2328 = vmatmul.bf16.gmra.mxu0 %v2188
    %v2329 = vpop.f32.mrf.mxu0
    %v2330 = vadd.f32 0.0, %v2329
    %v2331 = vpop.f32.mrf.mxu0
    %2332 = vdwg.mxu0
    %2333 = vmatpush.bf16.msra.mxu0 %v1705
    %2334 = vmatpush.bf16.msra.mxu0 %v1697
    %2335 = vmatpush.bf16.msra.mxu0 %v1689
    %2336 = vmatpush.bf16.msra.mxu0 %v1681
    %2337 = vmatpush.bf16.msra.mxu0 %v1673
    %2338 = vmatpush.bf16.msra.mxu0 %v1665
    %2339 = vmatpush.bf16.msra.mxu0 %v1657
    %2340 = vmatpush.bf16.msra.mxu0 %v1649
    %2341 = vmatmul.bf16.gmra.mxu0 %v2189
    %v2342 = vpop.f32.mrf.mxu0
    %v2343 = vadd.f32 %v2330, %v2342
    %v2344 = vpop.f32.mrf.mxu0
    %2345 = vdwg.mxu0
    %2346 = vmatpush.bf16.msra.mxu0 %v1642
    %2347 = vmatpush.bf16.msra.mxu0 %v1634
    %2348 = vmatpush.bf16.msra.mxu0 %v1626
    %2349 = vmatpush.bf16.msra.mxu0 %v1618
    %2350 = vmatpush.bf16.msra.mxu0 %v1610
    %2351 = vmatpush.bf16.msra.mxu0 %v1602
    %2352 = vmatpush.bf16.msra.mxu0 %v1594
    %2353 = vmatpush.bf16.msra.mxu0 %v1586
    %2354 = vmatmul.bf16.gmra.mxu0 %v2188
    %v2355 = vpop.f32.mrf.mxu0
    %v2356 = vadd.f32 0.0, %v2355
    %v2357 = vpop.f32.mrf.mxu0
    %2358 = vdwg.mxu0
    %2359 = vmatpush.bf16.msra.mxu0 %v1706
    %2360 = vmatpush.bf16.msra.mxu0 %v1698
    %2361 = vmatpush.bf16.msra.mxu0 %v1690
    %2362 = vmatpush.bf16.msra.mxu0 %v1682
    %2363 = vmatpush.bf16.msra.mxu0 %v1674
    %2364 = vmatpush.bf16.msra.mxu0 %v1666
    %2365 = vmatpush.bf16.msra.mxu0 %v1658
    %2366 = vmatpush.bf16.msra.mxu0 %v1650
    %2367 = vmatmul.bf16.gmra.mxu0 %v2189
    %v2368 = vpop.f32.mrf.mxu0
    %v2369 = vadd.f32 %v2356, %v2368
    %v2370 = vpop.f32.mrf.mxu0
    %2371 = vdwg.mxu0
    %2372 = vmatpush.bf16.msra.mxu0 %v1643
    %2373 = vmatpush.bf16.msra.mxu0 %v1635
    %2374 = vmatpush.bf16.msra.mxu0 %v1627
    %2375 = vmatpush.bf16.msra.mxu0 %v1619
    %2376 = vmatpush.bf16.msra.mxu0 %v1611
    %2377 = vmatpush.bf16.msra.mxu0 %v1603
    %2378 = vmatpush.bf16.msra.mxu0 %v1595
    %2379 = vmatpush.bf16.msra.mxu0 %v1587
    %2380 = vmatmul.bf16.gmra.mxu0 %v2188
    %v2381 = vpop.f32.mrf.mxu0
    %v2382 = vadd.f32 0.0, %v2381
    %v2383 = vpop.f32.mrf.mxu0
    %2384 = vdwg.mxu0
    %2385 = vmatpush.bf16.msra.mxu0 %v1707
    %2386 = vmatpush.bf16.msra.mxu0 %v1699
    %2387 = vmatpush.bf16.msra.mxu0 %v1691
    %2388 = vmatpush.bf16.msra.mxu0 %v1683
    %2389 = vmatpush.bf16.msra.mxu0 %v1675
    %2390 = vmatpush.bf16.msra.mxu0 %v1667
    %2391 = vmatpush.bf16.msra.mxu0 %v1659
    %2392 = vmatpush.bf16.msra.mxu0 %v1651
    %2393 = vmatmul.bf16.gmra.mxu0 %v2189
    %v2394 = vpop.f32.mrf.mxu0
    %v2395 = vadd.f32 %v2382, %v2394
    %v2396 = vpop.f32.mrf.mxu0
    %2397 = vdwg.mxu0
    %v2406 = vrot.slane %v2213, 6
    %v2407 = vrot.slane %v2239, 6
    %v2408 = vrot.slane %v2265, 6
    %v2409 = vrot.slane %v2291, 6
    %v2410 = vrot.slane %v2317, 6
    %v2411 = vrot.slane %v2343, 6
    %v2412 = vrot.slane %v2369, 6
    %v2413 = vrot.slane %v2395, 6
    %v2422 = vadd.f32 %v2180, %v2406
    %v2423 = vadd.f32 %v2181, %v2407
    %v2424 = vadd.f32 %v2182, %v2408
    %v2425 = vadd.f32 %v2183, %v2409
    %v2426 = vadd.f32 %v2184, %v2410
    %v2427 = vadd.f32 %v2185, %v2411
    %v2428 = vadd.f32 %v2186, %v2412
    %v2429 = vadd.f32 %v2187, %v2413
    %v2430 = vxor.u32 %v2422, 2147483648
    %v2431 = vxor.u32 %v2423, 2147483648
    %v2432 = vmul.f32 %v2430, 1.442695
    %v2433 = vpow.pop %v2432
    %v2434 = vmul.f32 %v2431, 1.442695
    %v2435 = vpow.pop %v2434
    %v2436 = vadd.f32 %v2433, 1.0
    %v2437 = vadd.f32 %v2435, 1.0
    %v2438 = vrcp.pop %v2436
    %v2439 = vmul.f32 %v2436, %v2438
    %v2440 = vsub.f32 1.0, %v2439
    %v2441 = vmul.f32 %v2438, %v2440
    %v2442 = vadd.f32 %v2438, %v2441
    %vm2443 = vweird.f32 %v2436
    %vm2444 = vweird.f32 %v2438
    %vm2445 = vmor %vm2443, %vm2444
    %v2446 = vsel %vm2445, %v2438, %v2442
    %v2447 = vand.u32 2147483647, %v2436
    %vm2448 = vcmp.eq.f32.partialorder %v2447, 8.507059e+37
    %v2449 = vand.u32 %v2436, 2147483648
    %v2450 = vor.u32 1.1754944e-38, %v2449
    %v2451 = vsel %vm2448, %v2450, %v2446
    %v2452 = vmul.f32 1.0, %v2451
    %v2453 = vrcp.pop %v2437
    %v2454 = vmul.f32 %v2437, %v2453
    %v2455 = vsub.f32 1.0, %v2454
    %v2456 = vmul.f32 %v2453, %v2455
    %v2457 = vadd.f32 %v2453, %v2456
    %vm2458 = vweird.f32 %v2437
    %vm2459 = vweird.f32 %v2453
    %vm2460 = vmor %vm2458, %vm2459
    %v2461 = vsel %vm2460, %v2453, %v2457
    %v2462 = vand.u32 2147483647, %v2437
    %vm2463 = vcmp.eq.f32.partialorder %v2462, 8.507059e+37
    %v2464 = vand.u32 %v2437, 2147483648
    %v2465 = vor.u32 1.1754944e-38, %v2464
    %v2466 = vsel %vm2463, %v2465, %v2461
    %v2467 = vmul.f32 1.0, %v2466
    %v2468 = vxor.u32 %v2424, 2147483648
    %v2469 = vxor.u32 %v2425, 2147483648
    %v2470 = vmul.f32 %v2468, 1.442695
    %v2471 = vpow.pop %v2470
    %v2472 = vmul.f32 %v2469, 1.442695
    %v2473 = vpow.pop %v2472
    %v2474 = vadd.f32 %v2471, 1.0
    %v2475 = vadd.f32 %v2473, 1.0
    %v2476 = vrcp.pop %v2474
    %v2477 = vmul.f32 %v2474, %v2476
    %v2478 = vsub.f32 1.0, %v2477
    %v2479 = vmul.f32 %v2476, %v2478
    %v2480 = vadd.f32 %v2476, %v2479
    %vm2481 = vweird.f32 %v2474
    %vm2482 = vweird.f32 %v2476
    %vm2483 = vmor %vm2481, %vm2482
    %v2484 = vsel %vm2483, %v2476, %v2480
    %v2485 = vand.u32 2147483647, %v2474
    %vm2486 = vcmp.eq.f32.partialorder %v2485, 8.507059e+37
    %v2487 = vand.u32 %v2474, 2147483648
    %v2488 = vor.u32 1.1754944e-38, %v2487
    %v2489 = vsel %vm2486, %v2488, %v2484
    %v2490 = vmul.f32 1.0, %v2489
    %v2491 = vrcp.pop %v2475
    %v2492 = vmul.f32 %v2475, %v2491
    %v2493 = vsub.f32 1.0, %v2492
    %v2494 = vmul.f32 %v2491, %v2493
    %v2495 = vadd.f32 %v2491, %v2494
    %vm2496 = vweird.f32 %v2475
    %vm2497 = vweird.f32 %v2491
    %vm2498 = vmor %vm2496, %vm2497
    %v2499 = vsel %vm2498, %v2491, %v2495
    %v2500 = vand.u32 2147483647, %v2475
    %vm2501 = vcmp.eq.f32.partialorder %v2500, 8.507059e+37
    %v2502 = vand.u32 %v2475, 2147483648
    %v2503 = vor.u32 1.1754944e-38, %v2502
    %v2504 = vsel %vm2501, %v2503, %v2499
    %v2505 = vmul.f32 1.0, %v2504
    %v2506 = vtanh.pop %v2426
    %v2507 = vtanh.pop %v2427
    %v2508 = vxor.u32 %v2428, 2147483648
    %v2509 = vxor.u32 %v2429, 2147483648
    %v2510 = vmul.f32 %v2508, 1.442695
    %v2511 = vpow.pop %v2510
    %v2512 = vmul.f32 %v2509, 1.442695
    %v2513 = vpow.pop %v2512
    %v2514 = vadd.f32 %v2511, 1.0
    %v2515 = vadd.f32 %v2513, 1.0
    %v2516 = vrcp.pop %v2514
    %v2517 = vmul.f32 %v2514, %v2516
    %v2518 = vsub.f32 1.0, %v2517
    %v2519 = vmul.f32 %v2516, %v2518
    %v2520 = vadd.f32 %v2516, %v2519
    %vm2521 = vweird.f32 %v2514
    %vm2522 = vweird.f32 %v2516
    %vm2523 = vmor %vm2521, %vm2522
    %v2524 = vsel %vm2523, %v2516, %v2520
    %v2525 = vand.u32 2147483647, %v2514
    %vm2526 = vcmp.eq.f32.partialorder %v2525, 8.507059e+37
    %v2527 = vand.u32 %v2514, 2147483648
    %v2528 = vor.u32 1.1754944e-38, %v2527
    %v2529 = vsel %vm2526, %v2528, %v2524
    %v2530 = vmul.f32 1.0, %v2529
    %v2531 = vrcp.pop %v2515
    %v2532 = vmul.f32 %v2515, %v2531
    %v2533 = vsub.f32 1.0, %v2532
    %v2534 = vmul.f32 %v2531, %v2533
    %v2535 = vadd.f32 %v2531, %v2534
    %vm2536 = vweird.f32 %v2515
    %vm2537 = vweird.f32 %v2531
    %vm2538 = vmor %vm2536, %vm2537
    %v2539 = vsel %vm2538, %v2531, %v2535
    %v2540 = vand.u32 2147483647, %v2515
    %vm2541 = vcmp.eq.f32.partialorder %v2540, 8.507059e+37
    %v2542 = vand.u32 %v2515, 2147483648
    %v2543 = vor.u32 1.1754944e-38, %v2542
    %v2544 = vsel %vm2541, %v2543, %v2539
    %v2545 = vmul.f32 1.0, %v2544
    %v2548 = vrot.slane %v2172, 6
    %v2549 = vrot.slane %v2173, 6
    %v2552 = vmul.f32 %v2490, %v2548
    %v2553 = vmul.f32 %v2505, %v2549
    %v2554 = vmul.f32 %v2452, %v2506
    %v2555 = vmul.f32 %v2467, %v2507
    %v2556 = vadd.f32 %v2552, %v2554
    %v2557 = vadd.f32 %v2553, %v2555
    %v2558 = vtanh.pop %v2556
    %v2559 = vtanh.pop %v2557
    %v2560 = vmul.f32 %v2530, %v2558
    %v2561 = vmul.f32 %v2545, %v2559
    %2562 = vst [vmem:[#allocation3] sm:$0xc] %v2560
    %2563 = vst [vmem:[#allocation3 + $0x8] sm:$0xc] %v2561
    %v2564 = vld [vmem:[#allocation2] sm:$0x30]
    %v2565 = vld [vmem:[#allocation2 + $0x8] sm:$0x30]
    %v2566 = vld [vmem:[#allocation2 + $0x10] sm:$0x30]
    %v2567 = vld [vmem:[#allocation2 + $0x18] sm:$0x30]
    %v2568 = vld [vmem:[#allocation2 + $0x20] sm:$0x30]
    %v2569 = vld [vmem:[#allocation2 + $0x28] sm:$0x30]
    %v2570 = vld [vmem:[#allocation2 + $0x30] sm:$0x30]
    %v2571 = vld [vmem:[#allocation2 + $0x38] sm:$0x30]
    %v2572 = vpack.c.bf16 %v2560, %v2560
    %v2573 = vpack.c.bf16 %v2561, %v2561
    %v2576 = vrot.slane %v2572, 1
    %v2577 = vrot.slane %v2573, 1
    %2580 = vmatpush.bf16.msra.mxu0 %v1636
    %2581 = vmatpush.bf16.msra.mxu0 %v1628
    %2582 = vmatpush.bf16.msra.mxu0 %v1620
    %2583 = vmatpush.bf16.msra.mxu0 %v1612
    %2584 = vmatpush.bf16.msra.mxu0 %v1604
    %2585 = vmatpush.bf16.msra.mxu0 %v1596
    %2586 = vmatpush.bf16.msra.mxu0 %v1588
    %2587 = vmatpush.bf16.msra.mxu0 %v1580
    %2588 = vmatmul.bf16.gmra.mxu0 %v2576
    %v2589 = vpop.f32.mrf.mxu0
    %v2590 = vadd.f32 0.0, %v2589
    %v2591 = vpop.f32.mrf.mxu0
    %2592 = vdwg.mxu0
    %2593 = vmatpush.bf16.msra.mxu0 %v1700
    %2594 = vmatpush.bf16.msra.mxu0 %v1692
    %2595 = vmatpush.bf16.msra.mxu0 %v1684
    %2596 = vmatpush.bf16.msra.mxu0 %v1676
    %2597 = vmatpush.bf16.msra.mxu0 %v1668
    %2598 = vmatpush.bf16.msra.mxu0 %v1660
    %2599 = vmatpush.bf16.msra.mxu0 %v1652
    %2600 = vmatpush.bf16.msra.mxu0 %v1644
    %2601 = vmatmul.bf16.gmra.mxu0 %v2577
    %v2602 = vpop.f32.mrf.mxu0
    %v2603 = vadd.f32 %v2590, %v2602
    %v2604 = vpop.f32.mrf.mxu0
    %2605 = vdwg.mxu0
    %2606 = vmatpush.bf16.msra.mxu0 %v1637
    %2607 = vmatpush.bf16.msra.mxu0 %v1629
    %2608 = vmatpush.bf16.msra.mxu0 %v1621
    %2609 = vmatpush.bf16.msra.mxu0 %v1613
    %2610 = vmatpush.bf16.msra.mxu0 %v1605
    %2611 = vmatpush.bf16.msra.mxu0 %v1597
    %2612 = vmatpush.bf16.msra.mxu0 %v1589
    %2613 = vmatpush.bf16.msra.mxu0 %v1581
    %2614 = vmatmul.bf16.gmra.mxu0 %v2576
    %v2615 = vpop.f32.mrf.mxu0
    %v2616 = vadd.f32 0.0, %v2615
    %v2617 = vpop.f32.mrf.mxu0
    %2618 = vdwg.mxu0
    %2619 = vmatpush.bf16.msra.mxu0 %v1701
    %2620 = vmatpush.bf16.msra.mxu0 %v1693
    %2621 = vmatpush.bf16.msra.mxu0 %v1685
    %2622 = vmatpush.bf16.msra.mxu0 %v1677
    %2623 = vmatpush.bf16.msra.mxu0 %v1669
    %2624 = vmatpush.bf16.msra.mxu0 %v1661
    %2625 = vmatpush.bf16.msra.mxu0 %v1653
    %2626 = vmatpush.bf16.msra.mxu0 %v1645
    %2627 = vmatmul.bf16.gmra.mxu0 %v2577
    %v2628 = vpop.f32.mrf.mxu0
    %v2629 = vadd.f32 %v2616, %v2628
    %v2630 = vpop.f32.mrf.mxu0
    %2631 = vdwg.mxu0
    %2632 = vmatpush.bf16.msra.mxu0 %v1638
    %2633 = vmatpush.bf16.msra.mxu0 %v1630
    %2634 = vmatpush.bf16.msra.mxu0 %v1622
    %2635 = vmatpush.bf16.msra.mxu0 %v1614
    %2636 = vmatpush.bf16.msra.mxu0 %v1606
    %2637 = vmatpush.bf16.msra.mxu0 %v1598
    %2638 = vmatpush.bf16.msra.mxu0 %v1590
    %2639 = vmatpush.bf16.msra.mxu0 %v1582
    %2640 = vmatmul.bf16.gmra.mxu0 %v2576
    %v2641 = vpop.f32.mrf.mxu0
    %v2642 = vadd.f32 0.0, %v2641
    %v2643 = vpop.f32.mrf.mxu0
    %2644 = vdwg.mxu0
    %2645 = vmatpush.bf16.msra.mxu0 %v1702
    %2646 = vmatpush.bf16.msra.mxu0 %v1694
    %2647 = vmatpush.bf16.msra.mxu0 %v1686
    %2648 = vmatpush.bf16.msra.mxu0 %v1678
    %2649 = vmatpush.bf16.msra.mxu0 %v1670
    %2650 = vmatpush.bf16.msra.mxu0 %v1662
    %2651 = vmatpush.bf16.msra.mxu0 %v1654
    %2652 = vmatpush.bf16.msra.mxu0 %v1646
    %2653 = vmatmul.bf16.gmra.mxu0 %v2577
    %v2654 = vpop.f32.mrf.mxu0
    %v2655 = vadd.f32 %v2642, %v2654
    %v2656 = vpop.f32.mrf.mxu0
    %2657 = vdwg.mxu0
    %2658 = vmatpush.bf16.msra.mxu0 %v1639
    %2659 = vmatpush.bf16.msra.mxu0 %v1631
    %2660 = vmatpush.bf16.msra.mxu0 %v1623
    %2661 = vmatpush.bf16.msra.mxu0 %v1615
    %2662 = vmatpush.bf16.msra.mxu0 %v1607
    %2663 = vmatpush.bf16.msra.mxu0 %v1599
    %2664 = vmatpush.bf16.msra.mxu0 %v1591
    %2665 = vmatpush.bf16.msra.mxu0 %v1583
    %2666 = vmatmul.bf16.gmra.mxu0 %v2576
    %v2667 = vpop.f32.mrf.mxu0
    %v2668 = vadd.f32 0.0, %v2667
    %v2669 = vpop.f32.mrf.mxu0
    %2670 = vdwg.mxu0
    %2671 = vmatpush.bf16.msra.mxu0 %v1703
    %2672 = vmatpush.bf16.msra.mxu0 %v1695
    %2673 = vmatpush.bf16.msra.mxu0 %v1687
    %2674 = vmatpush.bf16.msra.mxu0 %v1679
    %2675 = vmatpush.bf16.msra.mxu0 %v1671
    %2676 = vmatpush.bf16.msra.mxu0 %v1663
    %2677 = vmatpush.bf16.msra.mxu0 %v1655
    %2678 = vmatpush.bf16.msra.mxu0 %v1647
    %2679 = vmatmul.bf16.gmra.mxu0 %v2577
    %v2680 = vpop.f32.mrf.mxu0
    %v2681 = vadd.f32 %v2668, %v2680
    %v2682 = vpop.f32.mrf.mxu0
    %2683 = vdwg.mxu0
    %2684 = vmatpush.bf16.msra.mxu0 %v1640
    %2685 = vmatpush.bf16.msra.mxu0 %v1632
    %2686 = vmatpush.bf16.msra.mxu0 %v1624
    %2687 = vmatpush.bf16.msra.mxu0 %v1616
    %2688 = vmatpush.bf16.msra.mxu0 %v1608
    %2689 = vmatpush.bf16.msra.mxu0 %v1600
    %2690 = vmatpush.bf16.msra.mxu0 %v1592
    %2691 = vmatpush.bf16.msra.mxu0 %v1584
    %2692 = vmatmul.bf16.gmra.mxu0 %v2576
    %v2693 = vpop.f32.mrf.mxu0
    %v2694 = vadd.f32 0.0, %v2693
    %v2695 = vpop.f32.mrf.mxu0
    %2696 = vdwg.mxu0
    %2697 = vmatpush.bf16.msra.mxu0 %v1704
    %2698 = vmatpush.bf16.msra.mxu0 %v1696
    %2699 = vmatpush.bf16.msra.mxu0 %v1688
    %2700 = vmatpush.bf16.msra.mxu0 %v1680
    %2701 = vmatpush.bf16.msra.mxu0 %v1672
    %2702 = vmatpush.bf16.msra.mxu0 %v1664
    %2703 = vmatpush.bf16.msra.mxu0 %v1656
    %2704 = vmatpush.bf16.msra.mxu0 %v1648
    %2705 = vmatmul.bf16.gmra.mxu0 %v2577
    %v2706 = vpop.f32.mrf.mxu0
    %v2707 = vadd.f32 %v2694, %v2706
    %v2708 = vpop.f32.mrf.mxu0
    %2709 = vdwg.mxu0
    %2710 = vmatpush.bf16.msra.mxu0 %v1641
    %2711 = vmatpush.bf16.msra.mxu0 %v1633
    %2712 = vmatpush.bf16.msra.mxu0 %v1625
    %2713 = vmatpush.bf16.msra.mxu0 %v1617
    %2714 = vmatpush.bf16.msra.mxu0 %v1609
    %2715 = vmatpush.bf16.msra.mxu0 %v1601
    %2716 = vmatpush.bf16.msra.mxu0 %v1593
    %2717 = vmatpush.bf16.msra.mxu0 %v1585
    %2718 = vmatmul.bf16.gmra.mxu0 %v2576
    %v2719 = vpop.f32.mrf.mxu0
    %v2720 = vadd.f32 0.0, %v2719
    %v2721 = vpop.f32.mrf.mxu0
    %2722 = vdwg.mxu0
    %2723 = vmatpush.bf16.msra.mxu0 %v1705
    %2724 = vmatpush.bf16.msra.mxu0 %v1697
    %2725 = vmatpush.bf16.msra.mxu0 %v1689
    %2726 = vmatpush.bf16.msra.mxu0 %v1681
    %2727 = vmatpush.bf16.msra.mxu0 %v1673
    %2728 = vmatpush.bf16.msra.mxu0 %v1665
    %2729 = vmatpush.bf16.msra.mxu0 %v1657
    %2730 = vmatpush.bf16.msra.mxu0 %v1649
    %2731 = vmatmul.bf16.gmra.mxu0 %v2577
    %v2732 = vpop.f32.mrf.mxu0
    %v2733 = vadd.f32 %v2720, %v2732
    %v2734 = vpop.f32.mrf.mxu0
    %2735 = vdwg.mxu0
    %2736 = vmatpush.bf16.msra.mxu0 %v1642
    %2737 = vmatpush.bf16.msra.mxu0 %v1634
    %2738 = vmatpush.bf16.msra.mxu0 %v1626
    %2739 = vmatpush.bf16.msra.mxu0 %v1618
    %2740 = vmatpush.bf16.msra.mxu0 %v1610
    %2741 = vmatpush.bf16.msra.mxu0 %v1602
    %2742 = vmatpush.bf16.msra.mxu0 %v1594
    %2743 = vmatpush.bf16.msra.mxu0 %v1586
    %2744 = vmatmul.bf16.gmra.mxu0 %v2576
    %v2745 = vpop.f32.mrf.mxu0
    %v2746 = vadd.f32 0.0, %v2745
    %v2747 = vpop.f32.mrf.mxu0
    %2748 = vdwg.mxu0
    %2749 = vmatpush.bf16.msra.mxu0 %v1706
    %2750 = vmatpush.bf16.msra.mxu0 %v1698
    %2751 = vmatpush.bf16.msra.mxu0 %v1690
    %2752 = vmatpush.bf16.msra.mxu0 %v1682
    %2753 = vmatpush.bf16.msra.mxu0 %v1674
    %2754 = vmatpush.bf16.msra.mxu0 %v1666
    %2755 = vmatpush.bf16.msra.mxu0 %v1658
    %2756 = vmatpush.bf16.msra.mxu0 %v1650
    %2757 = vmatmul.bf16.gmra.mxu0 %v2577
    %v2758 = vpop.f32.mrf.mxu0
    %v2759 = vadd.f32 %v2746, %v2758
    %v2760 = vpop.f32.mrf.mxu0
    %2761 = vdwg.mxu0
    %2762 = vmatpush.bf16.msra.mxu0 %v1643
    %2763 = vmatpush.bf16.msra.mxu0 %v1635
    %2764 = vmatpush.bf16.msra.mxu0 %v1627
    %2765 = vmatpush.bf16.msra.mxu0 %v1619
    %2766 = vmatpush.bf16.msra.mxu0 %v1611
    %2767 = vmatpush.bf16.msra.mxu0 %v1603
    %2768 = vmatpush.bf16.msra.mxu0 %v1595
    %2769 = vmatpush.bf16.msra.mxu0 %v1587
    %2770 = vmatmul.bf16.gmra.mxu0 %v2576
    %v2771 = vpop.f32.mrf.mxu0
    %v2772 = vadd.f32 0.0, %v2771
    %v2773 = vpop.f32.mrf.mxu0
    %2774 = vdwg.mxu0
    %2775 = vmatpush.bf16.msra.mxu0 %v1707
    %2776 = vmatpush.bf16.msra.mxu0 %v1699
    %2777 = vmatpush.bf16.msra.mxu0 %v1691
    %2778 = vmatpush.bf16.msra.mxu0 %v1683
    %2779 = vmatpush.bf16.msra.mxu0 %v1675
    %2780 = vmatpush.bf16.msra.mxu0 %v1667
    %2781 = vmatpush.bf16.msra.mxu0 %v1659
    %2782 = vmatpush.bf16.msra.mxu0 %v1651
    %2783 = vmatmul.bf16.gmra.mxu0 %v2577
    %v2784 = vpop.f32.mrf.mxu0
    %v2785 = vadd.f32 %v2772, %v2784
    %v2786 = vpop.f32.mrf.mxu0
    %2787 = vdwg.mxu0
    %v2796 = vrot.slane %v2603, 4
    %v2797 = vrot.slane %v2629, 4
    %v2798 = vrot.slane %v2655, 4
    %v2799 = vrot.slane %v2681, 4
    %v2800 = vrot.slane %v2707, 4
    %v2801 = vrot.slane %v2733, 4
    %v2802 = vrot.slane %v2759, 4
    %v2803 = vrot.slane %v2785, 4
    %v2812 = vadd.f32 %v2564, %v2796
    %v2813 = vadd.f32 %v2565, %v2797
    %v2814 = vadd.f32 %v2566, %v2798
    %v2815 = vadd.f32 %v2567, %v2799
    %v2816 = vadd.f32 %v2568, %v2800
    %v2817 = vadd.f32 %v2569, %v2801
    %v2818 = vadd.f32 %v2570, %v2802
    %v2819 = vadd.f32 %v2571, %v2803
    %v2820 = vxor.u32 %v2812, 2147483648
    %v2821 = vxor.u32 %v2813, 2147483648
    %v2822 = vmul.f32 %v2820, 1.442695
    %v2823 = vpow.pop %v2822
    %v2824 = vmul.f32 %v2821, 1.442695
    %v2825 = vpow.pop %v2824
    %v2826 = vadd.f32 %v2823, 1.0
    %v2827 = vadd.f32 %v2825, 1.0
    %v2828 = vrcp.pop %v2826
    %v2829 = vmul.f32 %v2826, %v2828
    %v2830 = vsub.f32 1.0, %v2829
    %v2831 = vmul.f32 %v2828, %v2830
    %v2832 = vadd.f32 %v2828, %v2831
    %vm2833 = vweird.f32 %v2826
    %vm2834 = vweird.f32 %v2828
    %vm2835 = vmor %vm2833, %vm2834
    %v2836 = vsel %vm2835, %v2828, %v2832
    %v2837 = vand.u32 2147483647, %v2826
    %vm2838 = vcmp.eq.f32.partialorder %v2837, 8.507059e+37
    %v2839 = vand.u32 %v2826, 2147483648
    %v2840 = vor.u32 1.1754944e-38, %v2839
    %v2841 = vsel %vm2838, %v2840, %v2836
    %v2842 = vmul.f32 1.0, %v2841
    %v2843 = vrcp.pop %v2827
    %v2844 = vmul.f32 %v2827, %v2843
    %v2845 = vsub.f32 1.0, %v2844
    %v2846 = vmul.f32 %v2843, %v2845
    %v2847 = vadd.f32 %v2843, %v2846
    %vm2848 = vweird.f32 %v2827
    %vm2849 = vweird.f32 %v2843
    %vm2850 = vmor %vm2848, %vm2849
    %v2851 = vsel %vm2850, %v2843, %v2847
    %v2852 = vand.u32 2147483647, %v2827
    %vm2853 = vcmp.eq.f32.partialorder %v2852, 8.507059e+37
    %v2854 = vand.u32 %v2827, 2147483648
    %v2855 = vor.u32 1.1754944e-38, %v2854
    %v2856 = vsel %vm2853, %v2855, %v2851
    %v2857 = vmul.f32 1.0, %v2856
    %v2858 = vxor.u32 %v2814, 2147483648
    %v2859 = vxor.u32 %v2815, 2147483648
    %v2860 = vmul.f32 %v2858, 1.442695
    %v2861 = vpow.pop %v2860
    %v2862 = vmul.f32 %v2859, 1.442695
    %v2863 = vpow.pop %v2862
    %v2864 = vadd.f32 %v2861, 1.0
    %v2865 = vadd.f32 %v2863, 1.0
    %v2866 = vrcp.pop %v2864
    %v2867 = vmul.f32 %v2864, %v2866
    %v2868 = vsub.f32 1.0, %v2867
    %v2869 = vmul.f32 %v2866, %v2868
    %v2870 = vadd.f32 %v2866, %v2869
    %vm2871 = vweird.f32 %v2864
    %vm2872 = vweird.f32 %v2866
    %vm2873 = vmor %vm2871, %vm2872
    %v2874 = vsel %vm2873, %v2866, %v2870
    %v2875 = vand.u32 2147483647, %v2864
    %vm2876 = vcmp.eq.f32.partialorder %v2875, 8.507059e+37
    %v2877 = vand.u32 %v2864, 2147483648
    %v2878 = vor.u32 1.1754944e-38, %v2877
    %v2879 = vsel %vm2876, %v2878, %v2874
    %v2880 = vmul.f32 1.0, %v2879
    %v2881 = vrcp.pop %v2865
    %v2882 = vmul.f32 %v2865, %v2881
    %v2883 = vsub.f32 1.0, %v2882
    %v2884 = vmul.f32 %v2881, %v2883
    %v2885 = vadd.f32 %v2881, %v2884
    %vm2886 = vweird.f32 %v2865
    %vm2887 = vweird.f32 %v2881
    %vm2888 = vmor %vm2886, %vm2887
    %v2889 = vsel %vm2888, %v2881, %v2885
    %v2890 = vand.u32 2147483647, %v2865
    %vm2891 = vcmp.eq.f32.partialorder %v2890, 8.507059e+37
    %v2892 = vand.u32 %v2865, 2147483648
    %v2893 = vor.u32 1.1754944e-38, %v2892
    %v2894 = vsel %vm2891, %v2893, %v2889
    %v2895 = vmul.f32 1.0, %v2894
    %v2896 = vtanh.pop %v2816
    %v2897 = vtanh.pop %v2817
    %v2898 = vxor.u32 %v2818, 2147483648
    %v2899 = vxor.u32 %v2819, 2147483648
    %v2900 = vmul.f32 %v2898, 1.442695
    %v2901 = vpow.pop %v2900
    %v2902 = vmul.f32 %v2899, 1.442695
    %v2903 = vpow.pop %v2902
    %v2904 = vadd.f32 %v2901, 1.0
    %v2905 = vadd.f32 %v2903, 1.0
    %v2906 = vrcp.pop %v2904
    %v2907 = vmul.f32 %v2904, %v2906
    %v2908 = vsub.f32 1.0, %v2907
    %v2909 = vmul.f32 %v2906, %v2908
    %v2910 = vadd.f32 %v2906, %v2909
    %vm2911 = vweird.f32 %v2904
    %vm2912 = vweird.f32 %v2906
    %vm2913 = vmor %vm2911, %vm2912
    %v2914 = vsel %vm2913, %v2906, %v2910
    %v2915 = vand.u32 2147483647, %v2904
    %vm2916 = vcmp.eq.f32.partialorder %v2915, 8.507059e+37
    %v2917 = vand.u32 %v2904, 2147483648
    %v2918 = vor.u32 1.1754944e-38, %v2917
    %v2919 = vsel %vm2916, %v2918, %v2914
    %v2920 = vmul.f32 1.0, %v2919
    %v2921 = vrcp.pop %v2905
    %v2922 = vmul.f32 %v2905, %v2921
    %v2923 = vsub.f32 1.0, %v2922
    %v2924 = vmul.f32 %v2921, %v2923
    %v2925 = vadd.f32 %v2921, %v2924
    %vm2926 = vweird.f32 %v2905
    %vm2927 = vweird.f32 %v2921
    %vm2928 = vmor %vm2926, %vm2927
    %v2929 = vsel %vm2928, %v2921, %v2925
    %v2930 = vand.u32 2147483647, %v2905
    %vm2931 = vcmp.eq.f32.partialorder %v2930, 8.507059e+37
    %v2932 = vand.u32 %v2905, 2147483648
    %v2933 = vor.u32 1.1754944e-38, %v2932
    %v2934 = vsel %vm2931, %v2933, %v2929
    %v2935 = vmul.f32 1.0, %v2934
    %v2938 = vrot.slane %v2556, 6
    %v2939 = vrot.slane %v2557, 6
    %v2942 = vmul.f32 %v2880, %v2938
    %v2943 = vmul.f32 %v2895, %v2939
    %v2944 = vmul.f32 %v2842, %v2896
    %v2945 = vmul.f32 %v2857, %v2897
    %v2946 = vadd.f32 %v2942, %v2944
    %v2947 = vadd.f32 %v2943, %v2945
    %v2948 = vtanh.pop %v2946
    %v2949 = vtanh.pop %v2947
    %v2950 = vmul.f32 %v2920, %v2948
    %v2951 = vmul.f32 %v2935, %v2949
    %2952 = vst [vmem:[#allocation3] sm:$0x30] %v2950
    %2953 = vst [vmem:[#allocation3 + $0x8] sm:$0x30] %v2951
    %v2954 = vld [vmem:[#allocation2] sm:$0xc0]
    %v2955 = vld [vmem:[#allocation2 + $0x8] sm:$0xc0]
    %v2956 = vld [vmem:[#allocation2 + $0x10] sm:$0xc0]
    %v2957 = vld [vmem:[#allocation2 + $0x18] sm:$0xc0]
    %v2958 = vld [vmem:[#allocation2 + $0x20] sm:$0xc0]
    %v2959 = vld [vmem:[#allocation2 + $0x28] sm:$0xc0]
    %v2960 = vld [vmem:[#allocation2 + $0x30] sm:$0xc0]
    %v2961 = vld [vmem:[#allocation2 + $0x38] sm:$0xc0]
    %v2962 = vpack.c.bf16 %v2950, %v2950
    %v2963 = vpack.c.bf16 %v2951, %v2951
    %v2966 = vrot.slane %v2962, 2
    %v2967 = vrot.slane %v2963, 2
    %2970 = vmatpush.bf16.msra.mxu0 %v1636
    %2971 = vmatpush.bf16.msra.mxu0 %v1628
    %2972 = vmatpush.bf16.msra.mxu0 %v1620
    %2973 = vmatpush.bf16.msra.mxu0 %v1612
    %2974 = vmatpush.bf16.msra.mxu0 %v1604
    %2975 = vmatpush.bf16.msra.mxu0 %v1596
    %2976 = vmatpush.bf16.msra.mxu0 %v1588
    %2977 = vmatpush.bf16.msra.mxu0 %v1580
    %2978 = vmatmul.bf16.gmra.mxu0 %v2966
    %v2979 = vpop.f32.mrf.mxu0
    %v2980 = vadd.f32 0.0, %v2979
    %v2981 = vpop.f32.mrf.mxu0
    %2982 = vdwg.mxu0
    %2983 = vmatpush.bf16.msra.mxu0 %v1700
    %2984 = vmatpush.bf16.msra.mxu0 %v1692
    %2985 = vmatpush.bf16.msra.mxu0 %v1684
    %2986 = vmatpush.bf16.msra.mxu0 %v1676
    %2987 = vmatpush.bf16.msra.mxu0 %v1668
    %2988 = vmatpush.bf16.msra.mxu0 %v1660
    %2989 = vmatpush.bf16.msra.mxu0 %v1652
    %2990 = vmatpush.bf16.msra.mxu0 %v1644
    %2991 = vmatmul.bf16.gmra.mxu0 %v2967
    %v2992 = vpop.f32.mrf.mxu0
    %v2993 = vadd.f32 %v2980, %v2992
    %v2994 = vpop.f32.mrf.mxu0
    %2995 = vdwg.mxu0
    %2996 = vmatpush.bf16.msra.mxu0 %v1637
    %2997 = vmatpush.bf16.msra.mxu0 %v1629
    %2998 = vmatpush.bf16.msra.mxu0 %v1621
    %2999 = vmatpush.bf16.msra.mxu0 %v1613
    %3000 = vmatpush.bf16.msra.mxu0 %v1605
    %3001 = vmatpush.bf16.msra.mxu0 %v1597
    %3002 = vmatpush.bf16.msra.mxu0 %v1589
    %3003 = vmatpush.bf16.msra.mxu0 %v1581
    %3004 = vmatmul.bf16.gmra.mxu0 %v2966
    %v3005 = vpop.f32.mrf.mxu0
    %v3006 = vadd.f32 0.0, %v3005
    %v3007 = vpop.f32.mrf.mxu0
    %3008 = vdwg.mxu0
    %3009 = vmatpush.bf16.msra.mxu0 %v1701
    %3010 = vmatpush.bf16.msra.mxu0 %v1693
    %3011 = vmatpush.bf16.msra.mxu0 %v1685
    %3012 = vmatpush.bf16.msra.mxu0 %v1677
    %3013 = vmatpush.bf16.msra.mxu0 %v1669
    %3014 = vmatpush.bf16.msra.mxu0 %v1661
    %3015 = vmatpush.bf16.msra.mxu0 %v1653
    %3016 = vmatpush.bf16.msra.mxu0 %v1645
    %3017 = vmatmul.bf16.gmra.mxu0 %v2967
    %v3018 = vpop.f32.mrf.mxu0
    %v3019 = vadd.f32 %v3006, %v3018
    %v3020 = vpop.f32.mrf.mxu0
    %3021 = vdwg.mxu0
    %3022 = vmatpush.bf16.msra.mxu0 %v1638
    %3023 = vmatpush.bf16.msra.mxu0 %v1630
    %3024 = vmatpush.bf16.msra.mxu0 %v1622
    %3025 = vmatpush.bf16.msra.mxu0 %v1614
    %3026 = vmatpush.bf16.msra.mxu0 %v1606
    %3027 = vmatpush.bf16.msra.mxu0 %v1598
    %3028 = vmatpush.bf16.msra.mxu0 %v1590
    %3029 = vmatpush.bf16.msra.mxu0 %v1582
    %3030 = vmatmul.bf16.gmra.mxu0 %v2966
    %v3031 = vpop.f32.mrf.mxu0
    %v3032 = vadd.f32 0.0, %v3031
    %v3033 = vpop.f32.mrf.mxu0
    %3034 = vdwg.mxu0
    %3035 = vmatpush.bf16.msra.mxu0 %v1702
    %3036 = vmatpush.bf16.msra.mxu0 %v1694
    %3037 = vmatpush.bf16.msra.mxu0 %v1686
    %3038 = vmatpush.bf16.msra.mxu0 %v1678
    %3039 = vmatpush.bf16.msra.mxu0 %v1670
    %3040 = vmatpush.bf16.msra.mxu0 %v1662
    %3041 = vmatpush.bf16.msra.mxu0 %v1654
    %3042 = vmatpush.bf16.msra.mxu0 %v1646
    %3043 = vmatmul.bf16.gmra.mxu0 %v2967
    %v3044 = vpop.f32.mrf.mxu0
    %v3045 = vadd.f32 %v3032, %v3044
    %v3046 = vpop.f32.mrf.mxu0
    %3047 = vdwg.mxu0
    %3048 = vmatpush.bf16.msra.mxu0 %v1639
    %3049 = vmatpush.bf16.msra.mxu0 %v1631
    %3050 = vmatpush.bf16.msra.mxu0 %v1623
    %3051 = vmatpush.bf16.msra.mxu0 %v1615
    %3052 = vmatpush.bf16.msra.mxu0 %v1607
    %3053 = vmatpush.bf16.msra.mxu0 %v1599
    %3054 = vmatpush.bf16.msra.mxu0 %v1591
    %3055 = vmatpush.bf16.msra.mxu0 %v1583
    %3056 = vmatmul.bf16.gmra.mxu0 %v2966
    %v3057 = vpop.f32.mrf.mxu0
    %v3058 = vadd.f32 0.0, %v3057
    %v3059 = vpop.f32.mrf.mxu0
    %3060 = vdwg.mxu0
    %3061 = vmatpush.bf16.msra.mxu0 %v1703
    %3062 = vmatpush.bf16.msra.mxu0 %v1695
    %3063 = vmatpush.bf16.msra.mxu0 %v1687
    %3064 = vmatpush.bf16.msra.mxu0 %v1679
    %3065 = vmatpush.bf16.msra.mxu0 %v1671
    %3066 = vmatpush.bf16.msra.mxu0 %v1663
    %3067 = vmatpush.bf16.msra.mxu0 %v1655
    %3068 = vmatpush.bf16.msra.mxu0 %v1647
    %3069 = vmatmul.bf16.gmra.mxu0 %v2967
    %v3070 = vpop.f32.mrf.mxu0
    %v3071 = vadd.f32 %v3058, %v3070
    %v3072 = vpop.f32.mrf.mxu0
    %3073 = vdwg.mxu0
    %3074 = vmatpush.bf16.msra.mxu0 %v1640
    %3075 = vmatpush.bf16.msra.mxu0 %v1632
    %3076 = vmatpush.bf16.msra.mxu0 %v1624
    %3077 = vmatpush.bf16.msra.mxu0 %v1616
    %3078 = vmatpush.bf16.msra.mxu0 %v1608
    %3079 = vmatpush.bf16.msra.mxu0 %v1600
    %3080 = vmatpush.bf16.msra.mxu0 %v1592
    %3081 = vmatpush.bf16.msra.mxu0 %v1584
    %3082 = vmatmul.bf16.gmra.mxu0 %v2966
    %v3083 = vpop.f32.mrf.mxu0
    %v3084 = vadd.f32 0.0, %v3083
    %v3085 = vpop.f32.mrf.mxu0
    %3086 = vdwg.mxu0
    %3087 = vmatpush.bf16.msra.mxu0 %v1704
    %3088 = vmatpush.bf16.msra.mxu0 %v1696
    %3089 = vmatpush.bf16.msra.mxu0 %v1688
    %3090 = vmatpush.bf16.msra.mxu0 %v1680
    %3091 = vmatpush.bf16.msra.mxu0 %v1672
    %3092 = vmatpush.bf16.msra.mxu0 %v1664
    %3093 = vmatpush.bf16.msra.mxu0 %v1656
    %3094 = vmatpush.bf16.msra.mxu0 %v1648
    %3095 = vmatmul.bf16.gmra.mxu0 %v2967
    %v3096 = vpop.f32.mrf.mxu0
    %v3097 = vadd.f32 %v3084, %v3096
    %v3098 = vpop.f32.mrf.mxu0
    %3099 = vdwg.mxu0
    %3100 = vmatpush.bf16.msra.mxu0 %v1641
    %3101 = vmatpush.bf16.msra.mxu0 %v1633
    %3102 = vmatpush.bf16.msra.mxu0 %v1625
    %3103 = vmatpush.bf16.msra.mxu0 %v1617
    %3104 = vmatpush.bf16.msra.mxu0 %v1609
    %3105 = vmatpush.bf16.msra.mxu0 %v1601
    %3106 = vmatpush.bf16.msra.mxu0 %v1593
    %3107 = vmatpush.bf16.msra.mxu0 %v1585
    %3108 = vmatmul.bf16.gmra.mxu0 %v2966
    %v3109 = vpop.f32.mrf.mxu0
    %v3110 = vadd.f32 0.0, %v3109
    %v3111 = vpop.f32.mrf.mxu0
    %3112 = vdwg.mxu0
    %3113 = vmatpush.bf16.msra.mxu0 %v1705
    %3114 = vmatpush.bf16.msra.mxu0 %v1697
    %3115 = vmatpush.bf16.msra.mxu0 %v1689
    %3116 = vmatpush.bf16.msra.mxu0 %v1681
    %3117 = vmatpush.bf16.msra.mxu0 %v1673
    %3118 = vmatpush.bf16.msra.mxu0 %v1665
    %3119 = vmatpush.bf16.msra.mxu0 %v1657
    %3120 = vmatpush.bf16.msra.mxu0 %v1649
    %3121 = vmatmul.bf16.gmra.mxu0 %v2967
    %v3122 = vpop.f32.mrf.mxu0
    %v3123 = vadd.f32 %v3110, %v3122
    %v3124 = vpop.f32.mrf.mxu0
    %3125 = vdwg.mxu0
    %3126 = vmatpush.bf16.msra.mxu0 %v1642
    %3127 = vmatpush.bf16.msra.mxu0 %v1634
    %3128 = vmatpush.bf16.msra.mxu0 %v1626
    %3129 = vmatpush.bf16.msra.mxu0 %v1618
    %3130 = vmatpush.bf16.msra.mxu0 %v1610
    %3131 = vmatpush.bf16.msra.mxu0 %v1602
    %3132 = vmatpush.bf16.msra.mxu0 %v1594
    %3133 = vmatpush.bf16.msra.mxu0 %v1586
    %3134 = vmatmul.bf16.gmra.mxu0 %v2966
    %v3135 = vpop.f32.mrf.mxu0
    %v3136 = vadd.f32 0.0, %v3135
    %v3137 = vpop.f32.mrf.mxu0
    %3138 = vdwg.mxu0
    %3139 = vmatpush.bf16.msra.mxu0 %v1706
    %3140 = vmatpush.bf16.msra.mxu0 %v1698
    %3141 = vmatpush.bf16.msra.mxu0 %v1690
    %3142 = vmatpush.bf16.msra.mxu0 %v1682
    %3143 = vmatpush.bf16.msra.mxu0 %v1674
    %3144 = vmatpush.bf16.msra.mxu0 %v1666
    %3145 = vmatpush.bf16.msra.mxu0 %v1658
    %3146 = vmatpush.bf16.msra.mxu0 %v1650
    %3147 = vmatmul.bf16.gmra.mxu0 %v2967
    %v3148 = vpop.f32.mrf.mxu0
    %v3149 = vadd.f32 %v3136, %v3148
    %v3150 = vpop.f32.mrf.mxu0
    %3151 = vdwg.mxu0
    %3152 = vmatpush.bf16.msra.mxu0 %v1643
    %3153 = vmatpush.bf16.msra.mxu0 %v1635
    %3154 = vmatpush.bf16.msra.mxu0 %v1627
    %3155 = vmatpush.bf16.msra.mxu0 %v1619
    %3156 = vmatpush.bf16.msra.mxu0 %v1611
    %3157 = vmatpush.bf16.msra.mxu0 %v1603
    %3158 = vmatpush.bf16.msra.mxu0 %v1595
    %3159 = vmatpush.bf16.msra.mxu0 %v1587
    %3160 = vmatmul.bf16.gmra.mxu0 %v2966
    %v3161 = vpop.f32.mrf.mxu0
    %v3162 = vadd.f32 0.0, %v3161
    %v3163 = vpop.f32.mrf.mxu0
    %3164 = vdwg.mxu0
    %3165 = vmatpush.bf16.msra.mxu0 %v1707
    %3166 = vmatpush.bf16.msra.mxu0 %v1699
    %3167 = vmatpush.bf16.msra.mxu0 %v1691
    %3168 = vmatpush.bf16.msra.mxu0 %v1683
    %3169 = vmatpush.bf16.msra.mxu0 %v1675
    %3170 = vmatpush.bf16.msra.mxu0 %v1667
    %3171 = vmatpush.bf16.msra.mxu0 %v1659
    %3172 = vmatpush.bf16.msra.mxu0 %v1651
    %3173 = vmatmul.bf16.gmra.mxu0 %v2967
    %v3174 = vpop.f32.mrf.mxu0
    %v3175 = vadd.f32 %v3162, %v3174
    %v3176 = vpop.f32.mrf.mxu0
    %3177 = vdwg.mxu0
    %v3186 = vrot.slane %v2993, 2
    %v3187 = vrot.slane %v3019, 2
    %v3188 = vrot.slane %v3045, 2
    %v3189 = vrot.slane %v3071, 2
    %v3190 = vrot.slane %v3097, 2
    %v3191 = vrot.slane %v3123, 2
    %v3192 = vrot.slane %v3149, 2
    %v3193 = vrot.slane %v3175, 2
    %v3202 = vadd.f32 %v2954, %v3186
    %v3203 = vadd.f32 %v2955, %v3187
    %v3204 = vadd.f32 %v2956, %v3188
    %v3205 = vadd.f32 %v2957, %v3189
    %v3206 = vadd.f32 %v2958, %v3190
    %v3207 = vadd.f32 %v2959, %v3191
    %v3208 = vadd.f32 %v2960, %v3192
    %v3209 = vadd.f32 %v2961, %v3193
    %v3210 = vxor.u32 %v3202, 2147483648
    %v3211 = vxor.u32 %v3203, 2147483648
    %v3212 = vmul.f32 %v3210, 1.442695
    %v3213 = vpow.pop %v3212
    %v3214 = vmul.f32 %v3211, 1.442695
    %v3215 = vpow.pop %v3214
    %v3216 = vadd.f32 %v3213, 1.0
    %v3217 = vadd.f32 %v3215, 1.0
    %v3218 = vrcp.pop %v3216
    %v3219 = vmul.f32 %v3216, %v3218
    %v3220 = vsub.f32 1.0, %v3219
    %v3221 = vmul.f32 %v3218, %v3220
    %v3222 = vadd.f32 %v3218, %v3221
    %vm3223 = vweird.f32 %v3216
    %vm3224 = vweird.f32 %v3218
    %vm3225 = vmor %vm3223, %vm3224
    %v3226 = vsel %vm3225, %v3218, %v3222
    %v3227 = vand.u32 2147483647, %v3216
    %vm3228 = vcmp.eq.f32.partialorder %v3227, 8.507059e+37
    %v3229 = vand.u32 %v3216, 2147483648
    %v3230 = vor.u32 1.1754944e-38, %v3229
    %v3231 = vsel %vm3228, %v3230, %v3226
    %v3232 = vmul.f32 1.0, %v3231
    %v3233 = vrcp.pop %v3217
    %v3234 = vmul.f32 %v3217, %v3233
    %v3235 = vsub.f32 1.0, %v3234
    %v3236 = vmul.f32 %v3233, %v3235
    %v3237 = vadd.f32 %v3233, %v3236
    %vm3238 = vweird.f32 %v3217
    %vm3239 = vweird.f32 %v3233
    %vm3240 = vmor %vm3238, %vm3239
    %v3241 = vsel %vm3240, %v3233, %v3237
    %v3242 = vand.u32 2147483647, %v3217
    %vm3243 = vcmp.eq.f32.partialorder %v3242, 8.507059e+37
    %v3244 = vand.u32 %v3217, 2147483648
    %v3245 = vor.u32 1.1754944e-38, %v3244
    %v3246 = vsel %vm3243, %v3245, %v3241
    %v3247 = vmul.f32 1.0, %v3246
    %v3248 = vxor.u32 %v3204, 2147483648
    %v3249 = vxor.u32 %v3205, 2147483648
    %v3250 = vmul.f32 %v3248, 1.442695
    %v3251 = vpow.pop %v3250
    %v3252 = vmul.f32 %v3249, 1.442695
    %v3253 = vpow.pop %v3252
    %v3254 = vadd.f32 %v3251, 1.0
    %v3255 = vadd.f32 %v3253, 1.0
    %v3256 = vrcp.pop %v3254
    %v3257 = vmul.f32 %v3254, %v3256
    %v3258 = vsub.f32 1.0, %v3257
    %v3259 = vmul.f32 %v3256, %v3258
    %v3260 = vadd.f32 %v3256, %v3259
    %vm3261 = vweird.f32 %v3254
    %vm3262 = vweird.f32 %v3256
    %vm3263 = vmor %vm3261, %vm3262
    %v3264 = vsel %vm3263, %v3256, %v3260
    %v3265 = vand.u32 2147483647, %v3254
    %vm3266 = vcmp.eq.f32.partialorder %v3265, 8.507059e+37
    %v3267 = vand.u32 %v3254, 2147483648
    %v3268 = vor.u32 1.1754944e-38, %v3267
    %v3269 = vsel %vm3266, %v3268, %v3264
    %v3270 = vmul.f32 1.0, %v3269
    %v3271 = vrcp.pop %v3255
    %v3272 = vmul.f32 %v3255, %v3271
    %v3273 = vsub.f32 1.0, %v3272
    %v3274 = vmul.f32 %v3271, %v3273
    %v3275 = vadd.f32 %v3271, %v3274
    %vm3276 = vweird.f32 %v3255
    %vm3277 = vweird.f32 %v3271
    %vm3278 = vmor %vm3276, %vm3277
    %v3279 = vsel %vm3278, %v3271, %v3275
    %v3280 = vand.u32 2147483647, %v3255
    %vm3281 = vcmp.eq.f32.partialorder %v3280, 8.507059e+37
    %v3282 = vand.u32 %v3255, 2147483648
    %v3283 = vor.u32 1.1754944e-38, %v3282
    %v3284 = vsel %vm3281, %v3283, %v3279
    %v3285 = vmul.f32 1.0, %v3284
    %v3286 = vtanh.pop %v3206
    %v3287 = vtanh.pop %v3207
    %v3288 = vxor.u32 %v3208, 2147483648
    %v3289 = vxor.u32 %v3209, 2147483648
    %v3290 = vmul.f32 %v3288, 1.442695
    %v3291 = vpow.pop %v3290
    %v3292 = vmul.f32 %v3289, 1.442695
    %v3293 = vpow.pop %v3292
    %v3294 = vadd.f32 %v3291, 1.0
    %v3295 = vadd.f32 %v3293, 1.0
    %v3296 = vrcp.pop %v3294
    %v3297 = vmul.f32 %v3294, %v3296
    %v3298 = vsub.f32 1.0, %v3297
    %v3299 = vmul.f32 %v3296, %v3298
    %v3300 = vadd.f32 %v3296, %v3299
    %vm3301 = vweird.f32 %v3294
    %vm3302 = vweird.f32 %v3296
    %vm3303 = vmor %vm3301, %vm3302
    %v3304 = vsel %vm3303, %v3296, %v3300
    %v3305 = vand.u32 2147483647, %v3294
    %vm3306 = vcmp.eq.f32.partialorder %v3305, 8.507059e+37
    %v3307 = vand.u32 %v3294, 2147483648
    %v3308 = vor.u32 1.1754944e-38, %v3307
    %v3309 = vsel %vm3306, %v3308, %v3304
    %v3310 = vmul.f32 1.0, %v3309
    %v3311 = vrcp.pop %v3295
    %v3312 = vmul.f32 %v3295, %v3311
    %v3313 = vsub.f32 1.0, %v3312
    %v3314 = vmul.f32 %v3311, %v3313
    %v3315 = vadd.f32 %v3311, %v3314
    %vm3316 = vweird.f32 %v3295
    %vm3317 = vweird.f32 %v3311
    %vm3318 = vmor %vm3316, %vm3317
    %v3319 = vsel %vm3318, %v3311, %v3315
    %v3320 = vand.u32 2147483647, %v3295
    %vm3321 = vcmp.eq.f32.partialorder %v3320, 8.507059e+37
    %v3322 = vand.u32 %v3295, 2147483648
    %v3323 = vor.u32 1.1754944e-38, %v3322
    %v3324 = vsel %vm3321, %v3323, %v3319
    %v3325 = vmul.f32 1.0, %v3324
    %v3328 = vrot.slane %v2946, 6
    %v3329 = vrot.slane %v2947, 6
    %v3332 = vmul.f32 %v3270, %v3328
    %v3333 = vmul.f32 %v3285, %v3329
    %v3334 = vmul.f32 %v3232, %v3286
    %v3335 = vmul.f32 %v3247, %v3287
    %v3336 = vadd.f32 %v3332, %v3334
    %v3337 = vadd.f32 %v3333, %v3335
    %v3338 = vtanh.pop %v3336
    %v3339 = vtanh.pop %v3337
    %v3340 = vmul.f32 %v3310, %v3338
    %v3341 = vmul.f32 %v3325, %v3339
    %3342 = vst [vmem:[#allocation3] sm:$0xc0] %v3340
    %3343 = vst [vmem:[#allocation3 + $0x8] sm:$0xc0] %v3341
    %v3344 = vld [vmem:[#allocation3] sm:$0xff]
    %v3345 = vld [vmem:[#allocation3 + $0x8] sm:$0xff]
    %v3346 = vpack.c.bf16 %v3345, %v3344
    %3347 = vst [vmem:[%s4] sm:$0xff] %v3346
    // Predicated region
    $region26: #{forward.10} parent=1 // pred_check
      _
    $region27: #{forward.10} parent=1 // pred_check_branch
      %3349 = sbr.rel (0) target = $region29
    $region28: #{forward.10} parent=1 // pred_region
      _
    $region29: #{forward.10} parent=1 // pred_fallthru
      _
    // Predicated region
    $region30: #{forward.10} parent=1 // pred_check
      _
    $region31: #{forward.10} parent=1 // pred_check_branch
      %3351 = sbr.rel (0) target = $region33
    $region32: #{forward.10} parent=1 // pred_region
      _
    $region33: #{forward.10} parent=1 // pred_fallthru
      _
    %3352 = vsyncpa [#allocation5], 1
    %3353 = vsyncpa [#allocation7], 1

</llo_original>
